<compile_context>
chip_gen: v5e
topology: v5e:2x2
jax: 0.10.0
libtpu: 0.0.40
codegen_flags: <defaults>
</compile_context>

<pallas_src>
import functools

import jax
import jax.numpy as jnp
from jax.experimental import pallas as pl
from jax.experimental.pallas import tpu as pltpu


def _gru_cell(gi, h_prev, Wh, bh, H):
    """PyTorch nn.GRUCell math; gate order [r, z, n]; gi = x@W_ih + b_ih."""
    gh = jnp.dot(h_prev, Wh, preferred_element_type=jnp.float32) + bh
    r = jax.nn.sigmoid(gi[:, 0 * H:1 * H] + gh[:, 0 * H:1 * H])
    z = jax.nn.sigmoid(gi[:, 1 * H:2 * H] + gh[:, 1 * H:2 * H])
    n = jnp.tanh(gi[:, 2 * H:3 * H] + r * gh[:, 2 * H:3 * H])
    return (1.0 - z) * n + z * h_prev


def decoder_chunk_kernel(H, Tc,
                         gi0x_ref, h0_ref, o0_ref, ctx_ref, maskb_ref,
                         Wi0h_ref, Wh0_ref, bh0_ref,
                         Wi1_ref, bi1_ref, Wh1_ref, bh1_ref,
                         Walign_ref, Wctx_ref, Wqry_ref,
                         attout_ref, hout_ref, oout_ref,
                         h_sc, o_sc):
    c = pl.program_id(0)

    # initialize recurrent state on the first chunk
    @pl.when(c == 0)
    def _():
        h_sc[...] = h0_ref[...]
        o_sc[...] = o0_ref[...]

    # hoist loop-invariant loads out of the unrolled time loop
    Wi0h, Wh0, bh0 = Wi0h_ref[...], Wh0_ref[...], bh0_ref[...]
    Wi1, bi1 = Wi1_ref[...], bi1_ref[...]
    Wh1, bh1 = Wh1_ref[...], bh1_ref[...]
    Walign, Wctx, Wqry = Walign_ref[...], Wctx_ref[...], Wqry_ref[...]
    ctx = ctx_ref[...]
    maskb = maskb_ref[...]

    h0 = h_sc[0]
    h1 = h_sc[1]
    out_prev = o_sc[...]

    # fully-unrolled chunk of Tc timesteps (amortizes per-grid-step overhead)
    for tc in range(Tc):
        # ---- StackedGRU layer 0 ----
        # time-invariant part (cat(w,f)@W_ih0[:We+Fe]+b_ih0) precomputed as gi0x;
        # only the recurrent input-feeding matmul stays inside the loop.
        gi0 = gi0x_ref[tc] + jnp.dot(out_prev, Wi0h,
                                     preferred_element_type=jnp.float32)
        h0 = _gru_cell(gi0, h0, Wh0, bh0, H)

        # ---- StackedGRU layer 1 (dropout p=0 between layers -> identity) ----
        gi1 = jnp.dot(h0, Wi1, preferred_element_type=jnp.float32) + bi1
        h1 = _gru_cell(gi1, h1, Wh1, bh1, H)

        # ---- GlobalAttention, 'general' alignment ----
        query = h1
        q_proj = jnp.dot(query, Walign, preferred_element_type=jnp.float32)
        # query@W_qry depends only on h1 -> can issue before the softmax finishes
        q_out = jnp.dot(query, Wqry, preferred_element_type=jnp.float32)
        # VPU multiply + lane-reduce (no degenerate batched matvec on the MXU)
        scores = jnp.sum(ctx * q_proj[:, None, :], axis=-1) + maskb      # (B, S)
        m = jnp.max(scores, axis=-1, keepdims=True)
        e = jnp.exp(scores - m)
        attn = e * pl.reciprocal(jnp.sum(e, axis=-1, keepdims=True), approx=True)
        weighted = jnp.sum(attn[:, :, None] * ctx, axis=1)               # (B, H)
        att_out = jnp.tanh(
            jnp.dot(weighted, Wctx, preferred_element_type=jnp.float32) + q_out)

        out_prev = att_out                       # dropout p=0 -> identity
        attout_ref[tc] = att_out

    # write state back to scratch for the next chunk
    h_sc[0] = h0
    h_sc[1] = h1
    o_sc[...] = out_prev

    # final hidden / output written only once, on the last chunk
    @pl.when(c == pl.num_programs(0) - 1)
    def _():
        hout_ref[...] = h_sc[...]
        oout_ref[...] = o_sc[...]


def generator_kernel(att_ref, Wg_ref, bg_ref, score_ref):
    # fused word|field projection tile: one MXU pass, lane-dense store
    score_ref[...] = (jnp.dot(att_ref[...], Wg_ref[...],
                              preferred_element_type=jnp.float32) + bg_ref[...])


def rnn_attention_decoder(word_ids, field_ids, params, hidden, context,
                          ctx_mask_bias, prev_output):
    # embedding lookups are glue (data-dependent gather) done in plain JAX
    w_emb = params['word_emb'][word_ids]      # (T, B, We)
    f_emb = params['field_emb'][field_ids]    # (T, B, Fe)

    T, B, We = w_emb.shape
    Fe = f_emb.shape[-1]
    L, _, H = hidden.shape
    S = context.shape[1]
    Vw = params['W_word'].shape[1]
    Vf = params['W_field'].shape[1]
    Vg = Vw + Vf

    # ---- hoisted, time-invariant projection (single large batched matmul) ----
    wf = jnp.concatenate([w_emb, f_emb], axis=-1)                          # (T,B,We+Fe)
    gi0x = jnp.einsum('tbk,kg->tbg', wf, params['W_ih0'][:We + Fe]) + params['b_ih0']
    Wi0h = params['W_ih0'][We + Fe:]                                       # (H, 3H)
    Wg = jnp.concatenate([params['W_word'], params['W_field']], axis=1)    # (H, Vg)
    bg = jnp.concatenate([params['b_word'], params['b_field']], axis=1)    # (1, Vg)

    # ---- recurrent kernel: serial over T-chunks, state resident in VMEM scratch ----
    Tc = 1
    for cand in (16, 8, 4, 3, 2):
        if T % cand == 0:
            Tc = cand
            break

    def full(shape):
        n = len(shape)
        return pl.BlockSpec(shape, lambda c, _n=n: (0,) * _n)

    def chunk(shape):
        n = len(shape)
        return pl.BlockSpec(shape, lambda c, _n=n: (c,) + (0,) * (_n - 1))

    in_arrays = [gi0x, hidden, prev_output, context, ctx_mask_bias,
                 Wi0h, params['W_hh0'], params['b_hh0'],
                 params['W_ih1'], params['b_ih1'], params['W_hh1'], params['b_hh1'],
                 params['W_align'], params['W_ctx'], params['W_qry']]
    in_specs = ([chunk((Tc, B, 3 * H)), full((L, B, H)), full((B, H)),
                 full((B, S, H)), full((B, S))]
                + [full(a.shape) for a in in_arrays[5:]])

    att_out, hidden_out, output_out = pl.pallas_call(
        functools.partial(decoder_chunk_kernel, H, Tc),
        out_shape=(jax.ShapeDtypeStruct((T, B, H), jnp.float32),
                   jax.ShapeDtypeStruct((L, B, H), jnp.float32),
                   jax.ShapeDtypeStruct((B, H), jnp.float32)),
        grid_spec=pltpu.PrefetchScalarGridSpec(
            num_scalar_prefetch=0,
            grid=(T // Tc,),
            in_specs=in_specs,
            out_specs=[chunk((Tc, B, H)), full((L, B, H)), full((B, H))],
            scratch_shapes=[pltpu.VMEM((L, B, H), jnp.float32),   # stacked GRU hidden
                            pltpu.VMEM((B, H), jnp.float32)]),    # input-feeding output
        compiler_params=pltpu.CompilerParams(
            dimension_semantics=("arbitrary",)),   # recurrence -> sequential grid
    )(*in_arrays)

    # ---- generator: one weight-stationary tiled matmul over flattened (T*B, H) ----
    TB = T * B
    att_flat = att_out.reshape(TB, H)          # preserves (t, b) row ordering
    if TB % 256 == 0:
        TM = 256
    elif TB % 128 == 0:
        TM = 128
    else:
        TM = TB                                 # full extent (still (8,128)-legal)
    TN = Vg
    for cand in (512, 256, 128):
        if Vg % cand == 0:
            TN = cand
            break

    fused_flat = pl.pallas_call(
        generator_kernel,
        out_shape=jax.ShapeDtypeStruct((TB, Vg), jnp.float32),
        grid_spec=pltpu.PrefetchScalarGridSpec(
            num_scalar_prefetch=0,
            # vocab-tile axis OUTER -> each weight tile DMA'd once, stays resident
            grid=(Vg // TN, TB // TM),
            in_specs=[pl.BlockSpec((TM, H), lambda n, m: (m, 0)),
                      pl.BlockSpec((H, TN), lambda n, m: (0, n)),
                      pl.BlockSpec((1, TN), lambda n, m: (0, n))],
            out_specs=pl.BlockSpec((TM, TN), lambda n, m: (m, n))),
        compiler_params=pltpu.CompilerParams(
            dimension_semantics=("parallel", "parallel")),
    )(att_flat, Wg, bg)

    fused_scores = fused_flat.reshape(T, B, Vg)
    word_scores = fused_scores[..., :Vw]
    field_scores = fused_scores[..., Vw:]
    return word_scores, field_scores, hidden_out, output_out


def reference(word_ids, field_ids, params, hidden, context, mask_bias, prev_output):
    """Pure-JAX reference mirroring the PyTorch forward (eval mode)."""
    w_emb = params['word_emb'][word_ids]
    f_emb = params['field_emb'][field_ids]
    T = word_ids.shape[0]
    H = hidden.shape[-1]
    h = [hidden[0], hidden[1]]
    out = prev_output
    ws, fs = [], []

    def gru(gi, hp, Wh, bh):
        gh = hp @ Wh + bh
        r = jax.nn.sigmoid(gi[:, :H] + gh[:, :H])
        z = jax.nn.sigmoid(gi[:, H:2 * H] + gh[:, H:2 * H])
        n = jnp.tanh(gi[:, 2 * H:] + r * gh[:, 2 * H:])
        return (1.0 - z) * n + z * hp

    for t in range(T):
        x = jnp.concatenate([w_emb[t], f_emb[t], out], axis=1)
        h[0] = gru(x @ params['W_ih0'] + params['b_ih0'], h[0],
                   params['W_hh0'], params['b_hh0'])
        h[1] = gru(h[0] @ params['W_ih1'] + params['b_ih1'], h[1],
                   params['W_hh1'], params['b_hh1'])
        q = h[1]
        scores = jnp.einsum('bsh,bh->bs', context, q @ params['W_align']) + mask_bias
        attn = jax.nn.softmax(scores, axis=-1)
        weighted = jnp.einsum('bs,bsh->bh', attn, context)
        out = jnp.tanh(weighted @ params['W_ctx'] + q @ params['W_qry'])
        ws.append(out @ params['W_word'] + params['b_word'])
        fs.append(out @ params['W_field'] + params['b_field'])
    return jnp.stack(ws), jnp.stack(fs), jnp.stack(h), out


def init_params(key, We, Fe, H, WV, FV):
    ks = jax.random.split(key, 17)
    kH = 1.0 / (H ** 0.5)

    def u(k, shape, scale):
        return jax.random.uniform(k, shape, jnp.float32, -scale, scale)

    In0 = We + Fe + H  # input_feeding=True
    return dict(
        word_emb=u(ks[0], (WV, We), 0.1),
        field_emb=u(ks[1], (FV, Fe), 0.1),
        W_ih0=u(ks[2], (In0, 3 * H), kH), W_hh0=u(ks[3], (H, 3 * H), kH),
        b_ih0=u(ks[4], (1, 3 * H), kH), b_hh0=u(ks[5], (1, 3 * H), kH),
        W_ih1=u(ks[6], (H, 3 * H), kH), W_hh1=u(ks[7], (H, 3 * H), kH),
        b_ih1=u(ks[8], (1, 3 * H), kH), b_hh1=u(ks[9], (1, 3 * H), kH),
        W_align=u(ks[10], (H, H), kH), W_ctx=u(ks[11], (H, H), kH),
        W_qry=u(ks[12], (H, H), kH),
        W_word=u(ks[13], (H, WV), kH), b_word=u(ks[14], (1, WV), kH),
        W_field=u(ks[15], (H, FV), kH), b_field=u(ks[16], (1, FV), kH),
    )


if __name__ == "__main__":
    # (8,128)-aligned small shapes: B multiple of 8, H / vocab multiples of 128.
    T, B, S = 6, 8, 16         # decode steps (2 chunks of Tc=3), batch, source length
    We, Fe, H = 16, 16, 128    # word emb, field emb, hidden
    WV, FV, L = 256, 128, 2    # word vocab, field vocab, GRU layers (fixed at 2)

    key = jax.random.PRNGKey(0)
    kp, kw, kf, kc, kh = jax.random.split(key, 5)
    params = init_params(kp, We, Fe, H, WV, FV)

    word_ids = jax.random.randint(kw, (T, B), 0, WV)
    field_ids = jax.random.randint(kf, (T, B), 0, FV)
    context = jax.random.normal(kc, (B, S, H), jnp.float32)
    hidden = jax.random.normal(kh, (L, B, H), jnp.float32)
    prev_output = jnp.zeros((B, H), jnp.float32)            # initial_output(batch_size)

    # context_mask: True at padded source positions -> additive -1e9 bias before softmax
    lengths = jnp.array([S, S - 1, S - 3, S, S - 5, S - 2, S, S - 4], dtype=jnp.int32)
    pos = jnp.arange(S)[None, :]
    mask_bias = jnp.where(pos >= lengths[:, None], -1e9, 0.0).astype(jnp.float32)  # (B, S)

    # `lengths` argument of the torch forward is unused there as well; mask carries the info.
    outs = jax.jit(rnn_attention_decoder)(word_ids, field_ids, params, hidden,
                                          context, mask_bias, prev_output)
    outs = jax.block_until_ready(outs)

    refs = reference(word_ids, field_ids, params, hidden, context, mask_bias, prev_output)
    names = ["word_scores", "field_scores", "hidden", "output"]
    # tolerance accounts for the approx-EUP reciprocal in the softmax (still <1%)
    for name, a, b in zip(names, outs, refs):
        assert a.shape == b.shape, (name, a.shape, b.shape)
        assert jnp.allclose(a, b, atol=2e-3, rtol=2e-3), f"mismatch in {name}"

    print("KERNEL_OK")
</pallas_src>

<mosaic_0001>
module attributes {stable_mosaic.version = 11 : i64} {
  func.func @generator_kernel(%arg0: i32, %arg1: i32, %arg2: memref<48x128xf32, #tpu.memory_space<vmem>>, %arg3: memref<128x128xf32, #tpu.memory_space<vmem>>, %arg4: memref<1x128xf32, #tpu.memory_space<vmem>>, %arg5: memref<48x128xf32, #tpu.memory_space<vmem>>) attributes {dimension_semantics = [#tpu.dimension_semantics<parallel>, #tpu.dimension_semantics<parallel>], iteration_bounds = array<i64: 3, 1>, scalar_prefetch = 0 : i64, scratch_operands = 0 : i64, tpu.core_type = #tpu.core_type<tc>, window_params = [{transform_indices = @transform_0, window_bounds = array<i64: 48, 128>}, {transform_indices = @transform_1, window_bounds = array<i64: 128, 128>}, {transform_indices = @transform_2, window_bounds = array<i64: 1, 128>}, {transform_indices = @transform_3, window_bounds = array<i64: 48, 128>}]} {
    %c0 = arith.constant 0 : index
    %c0_0 = arith.constant 0 : index
    %0 = vector.load %arg2[%c0, %c0_0] : memref<48x128xf32, #tpu.memory_space<vmem>>, vector<48x128xf32>
    %c0_1 = arith.constant 0 : index
    %c0_2 = arith.constant 0 : index
    %1 = vector.load %arg3[%c0_1, %c0_2] : memref<128x128xf32, #tpu.memory_space<vmem>>, vector<128x128xf32>
    %cst = arith.constant dense<0.000000e+00> : vector<48x128xf32>
    %2 = tpu.matmul %0, %1, %cst {dimension_numbers = #tpu.dot_dimension_numbers<[1], [0], [0], [1], [0, 0, 1, 1], [], []>} : vector<48x128xf32>, vector<128x128xf32>, vector<48x128xf32> -> vector<48x128xf32>
    %c0_3 = arith.constant 0 : index
    %c0_4 = arith.constant 0 : index
    %3 = vector.load %arg4[%c0_3, %c0_4] : memref<1x128xf32, #tpu.memory_space<vmem>>, vector<1x128xf32>
    %4 = vector.broadcast %3 : vector<1x128xf32> to vector<48x128xf32>
    %5 = arith.addf %2, %4 : vector<48x128xf32>
    %c0_5 = arith.constant 0 : index
    %c0_6 = arith.constant 0 : index
    %6 = vector.load %arg5[%c0_5, %c0_6] : memref<48x128xf32, #tpu.memory_space<vmem>>, vector<48x128xf32>
    tpu.vector_store %arg5[%c0_5, %c0_6], %5 {strides = array<i32>} : memref<48x128xf32, #tpu.memory_space<vmem>>, vector<48x128xf32>,
    return
  }
  func.func @transform_0(%arg0: i32, %arg1: i32) -> (i32, i32) {
    %c0_i32 = arith.constant 0 : i32
    %c0_i32_0 = arith.constant 0 : i32
    return %arg1, %c0_i32 : i32, i32
  }
  func.func @transform_1(%arg0: i32, %arg1: i32) -> (i32, i32) {
    %c0_i32 = arith.constant 0 : i32
    %c0_i32_0 = arith.constant 0 : i32
    return %c0_i32, %arg0 : i32, i32
  }
  func.func @transform_2(%arg0: i32, %arg1: i32) -> (i32, i32) {
    %c0_i32 = arith.constant 0 : i32
    %c0_i32_0 = arith.constant 0 : i32
    return %c0_i32, %arg0 : i32, i32
  }
  func.func @transform_3(%arg0: i32, %arg1: i32) -> (i32, i32) {
    %c0_i32 = arith.constant 0 : i32
    return %arg1, %arg0 : i32, i32
  }
}

module attributes {stable_mosaic.version = 11 : i64} {
  func.func @decoder_chunk_kernel(%arg0: i32, %arg1: memref<3x8x384xf32, #tpu.memory_space<vmem>>, %arg2: memref<2x8x128xf32, #tpu.memory_space<vmem>>, %arg3: memref<8x128xf32, #tpu.memory_space<vmem>>, %arg4: memref<8x16x128xf32, #tpu.memory_space<vmem>>, %arg5: memref<8x16xf32, #tpu.memory_space<vmem>>, %arg6: memref<128x384xf32, #tpu.memory_space<vmem>>, %arg7: memref<128x384xf32, #tpu.memory_space<vmem>>, %arg8: memref<1x384xf32, #tpu.memory_space<vmem>>, %arg9: memref<128x384xf32, #tpu.memory_space<vmem>>, %arg10: memref<1x384xf32, #tpu.memory_space<vmem>>, %arg11: memref<128x384xf32, #tpu.memory_space<vmem>>, %arg12: memref<1x384xf32, #tpu.memory_space<vmem>>, %arg13: memref<128x128xf32, #tpu.memory_space<vmem>>, %arg14: memref<128x128xf32, #tpu.memory_space<vmem>>, %arg15: memref<128x128xf32, #tpu.memory_space<vmem>>, %arg16: memref<3x8x128xf32, #tpu.memory_space<vmem>>, %arg17: memref<2x8x128xf32, #tpu.memory_space<vmem>>, %arg18: memref<8x128xf32, #tpu.memory_space<vmem>>, %arg19: memref<2x8x128xf32, #tpu.memory_space<vmem>>, %arg20: memref<8x128xf32, #tpu.memory_space<vmem>>) attributes {dimension_semantics = [#tpu.dimension_semantics<arbitrary>], iteration_bounds = array<i64: 2>, scalar_prefetch = 0 : i64, scratch_operands = 2 : i64, tpu.core_type = #tpu.core_type<tc>, window_params = [{transform_indices = @transform_0, window_bounds = array<i64: 3, 8, 384>}, {pipeline_mode = #tpu.pipeline_mode<synchronous>, transform_indices = @transform_1, window_bounds = array<i64: 2, 8, 128>}, {pipeline_mode = #tpu.pipeline_mode<synchronous>, transform_indices = @transform_2, window_bounds = array<i64: 8, 128>}, {pipeline_mode = #tpu.pipeline_mode<synchronous>, transform_indices = @transform_3, window_bounds = array<i64: 8, 16, 128>}, {pipeline_mode = #tpu.pipeline_mode<synchronous>, transform_indices = @transform_4, window_bounds = array<i64: 8, 16>}, {pipeline_mode = #tpu.pipeline_mode<synchronous>, transform_indices = @transform_5, window_bounds = array<i64: 128, 384>}, {pipeline_mode = #tpu.pipeline_mode<synchronous>, transform_indices = @transform_6, window_bounds = array<i64: 128, 384>}, {pipeline_mode = #tpu.pipeline_mode<synchronous>, transform_indices = @transform_7, window_bounds = array<i64: 1, 384>}, {pipeline_mode = #tpu.pipeline_mode<synchronous>, transform_indices = @transform_8, window_bounds = array<i64: 128, 384>}, {pipeline_mode = #tpu.pipeline_mode<synchronous>, transform_indices = @transform_9, window_bounds = array<i64: 1, 384>}, {pipeline_mode = #tpu.pipeline_mode<synchronous>, transform_indices = @transform_10, window_bounds = array<i64: 128, 384>}, {pipeline_mode = #tpu.pipeline_mode<synchronous>, transform_indices = @transform_11, window_bounds = array<i64: 1, 384>}, {pipeline_mode = #tpu.pipeline_mode<synchronous>, transform_indices = @transform_12, window_bounds = array<i64: 128, 128>}, {pipeline_mode = #tpu.pipeline_mode<synchronous>, transform_indices = @transform_13, window_bounds = array<i64: 128, 128>}, {pipeline_mode = #tpu.pipeline_mode<synchronous>, transform_indices = @transform_14, window_bounds = array<i64: 128, 128>}, {transform_indices = @transform_15, window_bounds = array<i64: 3, 8, 128>}, {pipeline_mode = #tpu.pipeline_mode<synchronous>, transform_indices = @transform_16, window_bounds = array<i64: 2, 8, 128>}, {pipeline_mode = #tpu.pipeline_mode<synchronous>, transform_indices = @transform_17, window_bounds = array<i64: 8, 128>}]} {
    %c0_i32 = arith.constant 0 : i32
    %0 = arith.cmpi eq, %arg0, %c0_i32 : i32
    %1 = arith.extui %0 : i1 to i32
    %c0_i32_0 = arith.constant 0 : i32
    %2 = arith.cmpi ne, %1, %c0_i32_0 : i32
    scf.if %2 {
      %c0_108 = arith.constant 0 : index
      %c0_109 = arith.constant 0 : index
      %c0_110 = arith.constant 0 : index
      %306 = vector.load %arg2[%c0_108, %c0_109, %c0_110] : memref<2x8x128xf32, #tpu.memory_space<vmem>>, vector<2x8x128xf32>
      %c0_111 = arith.constant 0 : index
      %c0_112 = arith.constant 0 : index
      %c0_113 = arith.constant 0 : index
      %307 = vector.load %arg19[%c0_111, %c0_112, %c0_113] : memref<2x8x128xf32, #tpu.memory_space<vmem>>, vector<2x8x128xf32>
      tpu.vector_store %arg19[%c0_111, %c0_112, %c0_113], %306 {strides = array<i32>} : memref<2x8x128xf32, #tpu.memory_space<vmem>>, vector<2x8x128xf32>,
      %c0_114 = arith.constant 0 : index
      %c0_115 = arith.constant 0 : index
      %308 = vector.load %arg3[%c0_114, %c0_115] : memref<8x128xf32, #tpu.memory_space<vmem>>, vector<8x128xf32>
      %c0_116 = arith.constant 0 : index
      %c0_117 = arith.constant 0 : index
      %309 = vector.load %arg20[%c0_116, %c0_117] : memref<8x128xf32, #tpu.memory_space<vmem>>, vector<8x128xf32>
      tpu.vector_store %arg20[%c0_116, %c0_117], %308 {strides = array<i32>} : memref<8x128xf32, #tpu.memory_space<vmem>>, vector<8x128xf32>,
    } else {
    }
    %c0 = arith.constant 0 : index
    %c0_1 = arith.constant 0 : index
    %3 = vector.load %arg6[%c0, %c0_1] : memref<128x384xf32, #tpu.memory_space<vmem>>, vector<128x384xf32>
    %c0_2 = arith.constant 0 : index
    %c0_3 = arith.constant 0 : index
    %4 = vector.load %arg7[%c0_2, %c0_3] : memref<128x384xf32, #tpu.memory_space<vmem>>, vector<128x384xf32>
    %c0_4 = arith.constant 0 : index
    %c0_5 = arith.constant 0 : index
    %5 = vector.load %arg8[%c0_4, %c0_5] : memref<1x384xf32, #tpu.memory_space<vmem>>, vector<1x384xf32>
    %c0_6 = arith.constant 0 : index
    %c0_7 = arith.constant 0 : index
    %6 = vector.load %arg9[%c0_6, %c0_7] : memref<128x384xf32, #tpu.memory_space<vmem>>, vector<128x384xf32>
    %c0_8 = arith.constant 0 : index
    %c0_9 = arith.constant 0 : index
    %7 = vector.load %arg10[%c0_8, %c0_9] : memref<1x384xf32, #tpu.memory_space<vmem>>, vector<1x384xf32>
    %c0_10 = arith.constant 0 : index
    %c0_11 = arith.constant 0 : index
    %8 = vector.load %arg11[%c0_10, %c0_11] : memref<128x384xf32, #tpu.memory_space<vmem>>, vector<128x384xf32>
    %c0_12 = arith.constant 0 : index
    %c0_13 = arith.constant 0 : index
    %9 = vector.load %arg12[%c0_12, %c0_13] : memref<1x384xf32, #tpu.memory_space<vmem>>, vector<1x384xf32>
    %c0_14 = arith.constant 0 : index
    %c0_15 = arith.constant 0 : index
    %10 = vector.load %arg13[%c0_14, %c0_15] : memref<128x128xf32, #tpu.memory_space<vmem>>, vector<128x128xf32>
    %c0_16 = arith.constant 0 : index
    %c0_17 = arith.constant 0 : index
    %11 = vector.load %arg14[%c0_16, %c0_17] : memref<128x128xf32, #tpu.memory_space<vmem>>, vector<128x128xf32>
    %c0_18 = arith.constant 0 : index
    %c0_19 = arith.constant 0 : index
    %12 = vector.load %arg15[%c0_18, %c0_19] : memref<128x128xf32, #tpu.memory_space<vmem>>, vector<128x128xf32>
    %c0_20 = arith.constant 0 : index
    %c0_21 = arith.constant 0 : index
    %c0_22 = arith.constant 0 : index
    %13 = vector.load %arg4[%c0_20, %c0_21, %c0_22] : memref<8x16x128xf32, #tpu.memory_space<vmem>>, vector<8x16x128xf32>
    %c0_23 = arith.constant 0 : index
    %c0_24 = arith.constant 0 : index
    %14 = vector.load %arg5[%c0_23, %c0_24] : memref<8x16xf32, #tpu.memory_space<vmem>>, vector<8x16xf32>
    %c0_25 = arith.constant 0 : index
    %c0_26 = arith.constant 0 : index
    %c0_27 = arith.constant 0 : index
    %15 = vector.load %arg19[%c0_25, %c0_26, %c0_27] : memref<2x8x128xf32, #tpu.memory_space<vmem>>, vector<1x8x128xf32>
    %16 = vector.shape_cast %15 : vector<1x8x128xf32> to vector<8x128xf32>
    %c1 = arith.constant 1 : index
    %c0_28 = arith.constant 0 : index
    %c0_29 = arith.constant 0 : index
    %17 = vector.load %arg19[%c1, %c0_28, %c0_29] : memref<2x8x128xf32, #tpu.memory_space<vmem>>, vector<1x8x128xf32>
    %18 = vector.shape_cast %17 : vector<1x8x128xf32> to vector<8x128xf32>
    %c0_30 = arith.constant 0 : index
    %c0_31 = arith.constant 0 : index
    %19 = vector.load %arg20[%c0_30, %c0_31] : memref<8x128xf32, #tpu.memory_space<vmem>>, vector<8x128xf32>
    %c0_32 = arith.constant 0 : index
    %c0_33 = arith.constant 0 : index
    %c0_34 = arith.constant 0 : index
    %20 = vector.load %arg1[%c0_32, %c0_33, %c0_34] : memref<3x8x384xf32, #tpu.memory_space<vmem>>, vector<1x8x384xf32>
    %21 = vector.shape_cast %20 : vector<1x8x384xf32> to vector<8x384xf32>
    %cst = arith.constant dense<0.000000e+00> : vector<8x384xf32>
    %22 = tpu.matmul %19, %3, %cst {dimension_numbers = #tpu.dot_dimension_numbers<[1], [0], [0], [1], [0, 0, 1, 1], [], []>} : vector<8x128xf32>, vector<128x384xf32>, vector<8x384xf32> -> vector<8x384xf32>
    %23 = arith.addf %21, %22 : vector<8x384xf32>
    %cst_35 = arith.constant dense<0.000000e+00> : vector<8x384xf32>
    %24 = tpu.matmul %16, %4, %cst_35 {dimension_numbers = #tpu.dot_dimension_numbers<[1], [0], [0], [1], [0, 0, 1, 1], [], []>} : vector<8x128xf32>, vector<128x384xf32>, vector<8x384xf32> -> vector<8x384xf32>
    %25 = vector.broadcast %5 : vector<1x384xf32> to vector<8x384xf32>
    %26 = arith.addf %24, %25 : vector<8x384xf32>
    %27 = vector.extract_strided_slice %23 {offsets = [0, 0], sizes = [8, 128], strides = [1, 1]} : vector<8x384xf32> to vector<8x128xf32>
    %28 = vector.extract_strided_slice %26 {offsets = [0, 0], sizes = [8, 128], strides = [1, 1]} : vector<8x384xf32> to vector<8x128xf32>
    %29 = arith.addf %27, %28 : vector<8x128xf32>
    %30 = arith.negf %29 : vector<8x128xf32>
    %31 = math.exp %30 : vector<8x128xf32>
    %cst_36 = arith.constant 1.000000e+00 : f32
    %32 = vector.broadcast %cst_36 : f32 to vector<8x128xf32>
    %33 = arith.addf %32, %31 : vector<8x128xf32>
    %34 = arith.divf %32, %33 : vector<8x128xf32>
    %35 = vector.extract_strided_slice %23 {offsets = [0, 128], sizes = [8, 128], strides = [1, 1]} : vector<8x384xf32> to vector<8x128xf32>
    %36 = vector.extract_strided_slice %26 {offsets = [0, 128], sizes = [8, 128], strides = [1, 1]} : vector<8x384xf32> to vector<8x128xf32>
    %37 = arith.addf %35, %36 : vector<8x128xf32>
    %38 = arith.negf %37 : vector<8x128xf32>
    %39 = math.exp %38 : vector<8x128xf32>
    %cst_37 = arith.constant 1.000000e+00 : f32
    %40 = vector.broadcast %cst_37 : f32 to vector<8x128xf32>
    %41 = arith.addf %40, %39 : vector<8x128xf32>
    %42 = arith.divf %40, %41 : vector<8x128xf32>
    %43 = vector.extract_strided_slice %23 {offsets = [0, 256], sizes = [8, 128], strides = [1, 1]} : vector<8x384xf32> to vector<8x128xf32>
    %44 = vector.extract_strided_slice %26 {offsets = [0, 256], sizes = [8, 128], strides = [1, 1]} : vector<8x384xf32> to vector<8x128xf32>
    %45 = arith.mulf %34, %44 : vector<8x128xf32>
    %46 = arith.addf %43, %45 : vector<8x128xf32>
    %47 = math.tanh %46 : vector<8x128xf32>
    %cst_38 = arith.constant 1.000000e+00 : f32
    %48 = vector.broadcast %cst_38 : f32 to vector<8x128xf32>
    %49 = arith.subf %48, %42 : vector<8x128xf32>
    %50 = arith.mulf %49, %47 : vector<8x128xf32>
    %51 = arith.mulf %42, %16 : vector<8x128xf32>
    %52 = arith.addf %50, %51 : vector<8x128xf32>
    %cst_39 = arith.constant dense<0.000000e+00> : vector<8x384xf32>
    %53 = tpu.matmul %52, %6, %cst_39 {dimension_numbers = #tpu.dot_dimension_numbers<[1], [0], [0], [1], [0, 0, 1, 1], [], []>} : vector<8x128xf32>, vector<128x384xf32>, vector<8x384xf32> -> vector<8x384xf32>
    %54 = vector.broadcast %7 : vector<1x384xf32> to vector<8x384xf32>
    %55 = arith.addf %53, %54 : vector<8x384xf32>
    %cst_40 = arith.constant dense<0.000000e+00> : vector<8x384xf32>
    %56 = tpu.matmul %18, %8, %cst_40 {dimension_numbers = #tpu.dot_dimension_numbers<[1], [0], [0], [1], [0, 0, 1, 1], [], []>} : vector<8x128xf32>, vector<128x384xf32>, vector<8x384xf32> -> vector<8x384xf32>
    %57 = vector.broadcast %9 : vector<1x384xf32> to vector<8x384xf32>
    %58 = arith.addf %56, %57 : vector<8x384xf32>
    %59 = vector.extract_strided_slice %55 {offsets = [0, 0], sizes = [8, 128], strides = [1, 1]} : vector<8x384xf32> to vector<8x128xf32>
    %60 = vector.extract_strided_slice %58 {offsets = [0, 0], sizes = [8, 128], strides = [1, 1]} : vector<8x384xf32> to vector<8x128xf32>
    %61 = arith.addf %59, %60 : vector<8x128xf32>
    %62 = arith.negf %61 : vector<8x128xf32>
    %63 = math.exp %62 : vector<8x128xf32>
    %cst_41 = arith.constant 1.000000e+00 : f32
    %64 = vector.broadcast %cst_41 : f32 to vector<8x128xf32>
    %65 = arith.addf %64, %63 : vector<8x128xf32>
    %66 = arith.divf %64, %65 : vector<8x128xf32>
    %67 = vector.extract_strided_slice %55 {offsets = [0, 128], sizes = [8, 128], strides = [1, 1]} : vector<8x384xf32> to vector<8x128xf32>
    %68 = vector.extract_strided_slice %58 {offsets = [0, 128], sizes = [8, 128], strides = [1, 1]} : vector<8x384xf32> to vector<8x128xf32>
    %69 = arith.addf %67, %68 : vector<8x128xf32>
    %70 = arith.negf %69 : vector<8x128xf32>
    %71 = math.exp %70 : vector<8x128xf32>
    %cst_42 = arith.constant 1.000000e+00 : f32
    %72 = vector.broadcast %cst_42 : f32 to vector<8x128xf32>
    %73 = arith.addf %72, %71 : vector<8x128xf32>
    %74 = arith.divf %72, %73 : vector<8x128xf32>
    %75 = vector.extract_strided_slice %55 {offsets = [0, 256], sizes = [8, 128], strides = [1, 1]} : vector<8x384xf32> to vector<8x128xf32>
    %76 = vector.extract_strided_slice %58 {offsets = [0, 256], sizes = [8, 128], strides = [1, 1]} : vector<8x384xf32> to vector<8x128xf32>
    %77 = arith.mulf %66, %76 : vector<8x128xf32>
    %78 = arith.addf %75, %77 : vector<8x128xf32>
    %79 = math.tanh %78 : vector<8x128xf32>
    %cst_43 = arith.constant 1.000000e+00 : f32
    %80 = vector.broadcast %cst_43 : f32 to vector<8x128xf32>
    %81 = arith.subf %80, %74 : vector<8x128xf32>
    %82 = arith.mulf %81, %79 : vector<8x128xf32>
    %83 = arith.mulf %74, %18 : vector<8x128xf32>
    %84 = arith.addf %82, %83 : vector<8x128xf32>
    %cst_44 = arith.constant dense<0.000000e+00> : vector<8x128xf32>
    %85 = tpu.matmul %84, %10, %cst_44 {dimension_numbers = #tpu.dot_dimension_numbers<[1], [0], [0], [1], [0, 0, 1, 1], [], []>} : vector<8x128xf32>, vector<128x128xf32>, vector<8x128xf32> -> vector<8x128xf32>
    %cst_45 = arith.constant dense<0.000000e+00> : vector<8x128xf32>
    %86 = tpu.matmul %84, %12, %cst_45 {dimension_numbers = #tpu.dot_dimension_numbers<[1], [0], [0], [1], [0, 0, 1, 1], [], []>} : vector<8x128xf32>, vector<128x128xf32>, vector<8x128xf32> -> vector<8x128xf32>
    %87 = vector.shape_cast %85 : vector<8x128xf32> to vector<8x1x128xf32>
    %88 = vector.broadcast %87 : vector<8x1x128xf32> to vector<8x16x128xf32>
    %89 = arith.mulf %13, %88 : vector<8x16x128xf32>
    %cst_46 = arith.constant dense<0.000000e+00> : vector<8x16xf32>
    %90 = vector.multi_reduction <add>, %89, %cst_46 [2] : vector<8x16x128xf32> to vector<8x16xf32>
    %91 = arith.addf %90, %14 : vector<8x16xf32>
    %cst_47 = arith.constant dense<0xFF800000> : vector<8xf32>
    %92 = vector.multi_reduction <maximumf>, %91, %cst_47 [1] : vector<8x16xf32> to vector<8xf32>
    %93 = vector.shape_cast %92 : vector<8xf32> to vector<8x1xf32>
    %94 = vector.broadcast %93 : vector<8x1xf32> to vector<8x16xf32>
    %95 = arith.subf %91, %94 : vector<8x16xf32>
    %96 = math.exp %95 : vector<8x16xf32>
    %cst_48 = arith.constant dense<0.000000e+00> : vector<8xf32>
    %97 = vector.multi_reduction <add>, %96, %cst_48 [1] : vector<8x16xf32> to vector<8xf32>
    %98 = vector.shape_cast %97 : vector<8xf32> to vector<8x1xf32>
    %99 = tpu.reciprocal %98 {approx = true} : vector<8x1xf32> -> vector<8x1xf32>
    %100 = vector.broadcast %99 : vector<8x1xf32> to vector<8x16xf32>
    %101 = arith.mulf %96, %100 : vector<8x16xf32>
    %102 = vector.shape_cast %101 : vector<8x16xf32> to vector<8x16x1xf32>
    %103 = vector.broadcast %102 : vector<8x16x1xf32> to vector<8x16x128xf32>
    %104 = arith.mulf %103, %13 : vector<8x16x128xf32>
    %cst_49 = arith.constant dense<0.000000e+00> : vector<8x128xf32>
    %105 = vector.multi_reduction <add>, %104, %cst_49 [1] : vector<8x16x128xf32> to vector<8x128xf32>
    %cst_50 = arith.constant dense<0.000000e+00> : vector<8x128xf32>
    %106 = tpu.matmul %105, %11, %cst_50 {dimension_numbers = #tpu.dot_dimension_numbers<[1], [0], [0], [1], [0, 0, 1, 1], [], []>} : vector<8x128xf32>, vector<128x128xf32>, vector<8x128xf32> -> vector<8x128xf32>
    %107 = arith.addf %106, %86 : vector<8x128xf32>
    %108 = math.tanh %107 : vector<8x128xf32>
    %c0_51 = arith.constant 0 : index
    %c0_52 = arith.constant 0 : index
    %c0_53 = arith.constant 0 : index
    %109 = vector.load %arg16[%c0_51, %c0_52, %c0_53] : memref<3x8x128xf32, #tpu.memory_space<vmem>>, vector<1x8x128xf32>
    %110 = vector.shape_cast %109 : vector<1x8x128xf32> to vector<8x128xf32>
    %111 = vector.shape_cast %108 : vector<8x128xf32> to vector<1x8x128xf32>
    tpu.vector_store %arg16[%c0_51, %c0_52, %c0_53], %111 {strides = array<i32>} : memref<3x8x128xf32, #tpu.memory_space<vmem>>, vector<1x8x128xf32>,
    %c1_54 = arith.constant 1 : index
    %c0_55 = arith.constant 0 : index
    %c0_56 = arith.constant 0 : index
    %112 = vector.load %arg1[%c1_54, %c0_55, %c0_56] : memref<3x8x384xf32, #tpu.memory_space<vmem>>, vector<1x8x384xf32>
    %113 = vector.shape_cast %112 : vector<1x8x384xf32> to vector<8x384xf32>
    %cst_57 = arith.constant dense<0.000000e+00> : vector<8x384xf32>
    %114 = tpu.matmul %108, %3, %cst_57 {dimension_numbers = #tpu.dot_dimension_numbers<[1], [0], [0], [1], [0, 0, 1, 1], [], []>} : vector<8x128xf32>, vector<128x384xf32>, vector<8x384xf32> -> vector<8x384xf32>
    %115 = arith.addf %113, %114 : vector<8x384xf32>
    %cst_58 = arith.constant dense<0.000000e+00> : vector<8x384xf32>
    %116 = tpu.matmul %52, %4, %cst_58 {dimension_numbers = #tpu.dot_dimension_numbers<[1], [0], [0], [1], [0, 0, 1, 1], [], []>} : vector<8x128xf32>, vector<128x384xf32>, vector<8x384xf32> -> vector<8x384xf32>
    %117 = vector.broadcast %5 : vector<1x384xf32> to vector<8x384xf32>
    %118 = arith.addf %116, %117 : vector<8x384xf32>
    %119 = vector.extract_strided_slice %115 {offsets = [0, 0], sizes = [8, 128], strides = [1, 1]} : vector<8x384xf32> to vector<8x128xf32>
    %120 = vector.extract_strided_slice %118 {offsets = [0, 0], sizes = [8, 128], strides = [1, 1]} : vector<8x384xf32> to vector<8x128xf32>
    %121 = arith.addf %119, %120 : vector<8x128xf32>
    %122 = arith.negf %121 : vector<8x128xf32>
    %123 = math.exp %122 : vector<8x128xf32>
    %cst_59 = arith.constant 1.000000e+00 : f32
    %124 = vector.broadcast %cst_59 : f32 to vector<8x128xf32>
    %125 = arith.addf %124, %123 : vector<8x128xf32>
    %126 = arith.divf %124, %125 : vector<8x128xf32>
    %127 = vector.extract_strided_slice %115 {offsets = [0, 128], sizes = [8, 128], strides = [1, 1]} : vector<8x384xf32> to vector<8x128xf32>
    %128 = vector.extract_strided_slice %118 {offsets = [0, 128], sizes = [8, 128], strides = [1, 1]} : vector<8x384xf32> to vector<8x128xf32>
    %129 = arith.addf %127, %128 : vector<8x128xf32>
    %130 = arith.negf %129 : vector<8x128xf32>
    %131 = math.exp %130 : vector<8x128xf32>
    %cst_60 = arith.constant 1.000000e+00 : f32
    %132 = vector.broadcast %cst_60 : f32 to vector<8x128xf32>
    %133 = arith.addf %132, %131 : vector<8x128xf32>
    %134 = arith.divf %132, %133 : vector<8x128xf32>
    %135 = vector.extract_strided_slice %115 {offsets = [0, 256], sizes = [8, 128], strides = [1, 1]} : vector<8x384xf32> to vector<8x128xf32>
    %136 = vector.extract_strided_slice %118 {offsets = [0, 256], sizes = [8, 128], strides = [1, 1]} : vector<8x384xf32> to vector<8x128xf32>
    %137 = arith.mulf %126, %136 : vector<8x128xf32>
    %138 = arith.addf %135, %137 : vector<8x128xf32>
    %139 = math.tanh %138 : vector<8x128xf32>
    %cst_61 = arith.constant 1.000000e+00 : f32
    %140 = vector.broadcast %cst_61 : f32 to vector<8x128xf32>
    %141 = arith.subf %140, %134 : vector<8x128xf32>
    %142 = arith.mulf %141, %139 : vector<8x128xf32>
    %143 = arith.mulf %134, %52 : vector<8x128xf32>
    %144 = arith.addf %142, %143 : vector<8x128xf32>
    %cst_62 = arith.constant dense<0.000000e+00> : vector<8x384xf32>
    %145 = tpu.matmul %144, %6, %cst_62 {dimension_numbers = #tpu.dot_dimension_numbers<[1], [0], [0], [1], [0, 0, 1, 1], [], []>} : vector<8x128xf32>, vector<128x384xf32>, vector<8x384xf32> -> vector<8x384xf32>
    %146 = vector.broadcast %7 : vector<1x384xf32> to vector<8x384xf32>
    %147 = arith.addf %145, %146 : vector<8x384xf32>
    %cst_63 = arith.constant dense<0.000000e+00> : vector<8x384xf32>
    %148 = tpu.matmul %84, %8, %cst_63 {dimension_numbers = #tpu.dot_dimension_numbers<[1], [0], [0], [1], [0, 0, 1, 1], [], []>} : vector<8x128xf32>, vector<128x384xf32>, vector<8x384xf32> -> vector<8x384xf32>
    %149 = vector.broadcast %9 : vector<1x384xf32> to vector<8x384xf32>
    %150 = arith.addf %148, %149 : vector<8x384xf32>
    %151 = vector.extract_strided_slice %147 {offsets = [0, 0], sizes = [8, 128], strides = [1, 1]} : vector<8x384xf32> to vector<8x128xf32>
    %152 = vector.extract_strided_slice %150 {offsets = [0, 0], sizes = [8, 128], strides = [1, 1]} : vector<8x384xf32> to vector<8x128xf32>
    %153 = arith.addf %151, %152 : vector<8x128xf32>
    %154 = arith.negf %153 : vector<8x128xf32>
    %155 = math.exp %154 : vector<8x128xf32>
    %cst_64 = arith.constant 1.000000e+00 : f32
    %156 = vector.broadcast %cst_64 : f32 to vector<8x128xf32>
    %157 = arith.addf %156, %155 : vector<8x128xf32>
    %158 = arith.divf %156, %157 : vector<8x128xf32>
    %159 = vector.extract_strided_slice %147 {offsets = [0, 128], sizes = [8, 128], strides = [1, 1]} : vector<8x384xf32> to vector<8x128xf32>
    %160 = vector.extract_strided_slice %150 {offsets = [0, 128], sizes = [8, 128], strides = [1, 1]} : vector<8x384xf32> to vector<8x128xf32>
    %161 = arith.addf %159, %160 : vector<8x128xf32>
    %162 = arith.negf %161 : vector<8x128xf32>
    %163 = math.exp %162 : vector<8x128xf32>
    %cst_65 = arith.constant 1.000000e+00 : f32
    %164 = vector.broadcast %cst_65 : f32 to vector<8x128xf32>
    %165 = arith.addf %164, %163 : vector<8x128xf32>
    %166 = arith.divf %164, %165 : vector<8x128xf32>
    %167 = vector.extract_strided_slice %147 {offsets = [0, 256], sizes = [8, 128], strides = [1, 1]} : vector<8x384xf32> to vector<8x128xf32>
    %168 = vector.extract_strided_slice %150 {offsets = [0, 256], sizes = [8, 128], strides = [1, 1]} : vector<8x384xf32> to vector<8x128xf32>
    %169 = arith.mulf %158, %168 : vector<8x128xf32>
    %170 = arith.addf %167, %169 : vector<8x128xf32>
    %171 = math.tanh %170 : vector<8x128xf32>
    %cst_66 = arith.constant 1.000000e+00 : f32
    %172 = vector.broadcast %cst_66 : f32 to vector<8x128xf32>
    %173 = arith.subf %172, %166 : vector<8x128xf32>
    %174 = arith.mulf %173, %171 : vector<8x128xf32>
    %175 = arith.mulf %166, %84 : vector<8x128xf32>
    %176 = arith.addf %174, %175 : vector<8x128xf32>
    %cst_67 = arith.constant dense<0.000000e+00> : vector<8x128xf32>
    %177 = tpu.matmul %176, %10, %cst_67 {dimension_numbers = #tpu.dot_dimension_numbers<[1], [0], [0], [1], [0, 0, 1, 1], [], []>} : vector<8x128xf32>, vector<128x128xf32>, vector<8x128xf32> -> vector<8x128xf32>
    %cst_68 = arith.constant dense<0.000000e+00> : vector<8x128xf32>
    %178 = tpu.matmul %176, %12, %cst_68 {dimension_numbers = #tpu.dot_dimension_numbers<[1], [0], [0], [1], [0, 0, 1, 1], [], []>} : vector<8x128xf32>, vector<128x128xf32>, vector<8x128xf32> -> vector<8x128xf32>
    %179 = vector.shape_cast %177 : vector<8x128xf32> to vector<8x1x128xf32>
    %180 = vector.broadcast %179 : vector<8x1x128xf32> to vector<8x16x128xf32>
    %181 = arith.mulf %13, %180 : vector<8x16x128xf32>
    %cst_69 = arith.constant dense<0.000000e+00> : vector<8x16xf32>
    %182 = vector.multi_reduction <add>, %181, %cst_69 [2] : vector<8x16x128xf32> to vector<8x16xf32>
    %183 = arith.addf %182, %14 : vector<8x16xf32>
    %cst_70 = arith.constant dense<0xFF800000> : vector<8xf32>
    %184 = vector.multi_reduction <maximumf>, %183, %cst_70 [1] : vector<8x16xf32> to vector<8xf32>
    %185 = vector.shape_cast %184 : vector<8xf32> to vector<8x1xf32>
    %186 = vector.broadcast %185 : vector<8x1xf32> to vector<8x16xf32>
    %187 = arith.subf %183, %186 : vector<8x16xf32>
    %188 = math.exp %187 : vector<8x16xf32>
    %cst_71 = arith.constant dense<0.000000e+00> : vector<8xf32>
    %189 = vector.multi_reduction <add>, %188, %cst_71 [1] : vector<8x16xf32> to vector<8xf32>
    %190 = vector.shape_cast %189 : vector<8xf32> to vector<8x1xf32>
    %191 = tpu.reciprocal %190 {approx = true} : vector<8x1xf32> -> vector<8x1xf32>
    %192 = vector.broadcast %191 : vector<8x1xf32> to vector<8x16xf32>
    %193 = arith.mulf %188, %192 : vector<8x16xf32>
    %194 = vector.shape_cast %193 : vector<8x16xf32> to vector<8x16x1xf32>
    %195 = vector.broadcast %194 : vector<8x16x1xf32> to vector<8x16x128xf32>
    %196 = arith.mulf %195, %13 : vector<8x16x128xf32>
    %cst_72 = arith.constant dense<0.000000e+00> : vector<8x128xf32>
    %197 = vector.multi_reduction <add>, %196, %cst_72 [1] : vector<8x16x128xf32> to vector<8x128xf32>
    %cst_73 = arith.constant dense<0.000000e+00> : vector<8x128xf32>
    %198 = tpu.matmul %197, %11, %cst_73 {dimension_numbers = #tpu.dot_dimension_numbers<[1], [0], [0], [1], [0, 0, 1, 1], [], []>} : vector<8x128xf32>, vector<128x128xf32>, vector<8x128xf32> -> vector<8x128xf32>
    %199 = arith.addf %198, %178 : vector<8x128xf32>
    %200 = math.tanh %199 : vector<8x128xf32>
    %c1_74 = arith.constant 1 : index
    %c0_75 = arith.constant 0 : index
    %c0_76 = arith.constant 0 : index
    %201 = vector.load %arg16[%c1_74, %c0_75, %c0_76] : memref<3x8x128xf32, #tpu.memory_space<vmem>>, vector<1x8x128xf32>
    %202 = vector.shape_cast %201 : vector<1x8x128xf32> to vector<8x128xf32>
    %203 = vector.shape_cast %200 : vector<8x128xf32> to vector<1x8x128xf32>
    tpu.vector_store %arg16[%c1_74, %c0_75, %c0_76], %203 {strides = array<i32>} : memref<3x8x128xf32, #tpu.memory_space<vmem>>, vector<1x8x128xf32>,
    %c2 = arith.constant 2 : index
    %c0_77 = arith.constant 0 : index
    %c0_78 = arith.constant 0 : index
    %204 = vector.load %arg1[%c2, %c0_77, %c0_78] : memref<3x8x384xf32, #tpu.memory_space<vmem>>, vector<1x8x384xf32>
    %205 = vector.shape_cast %204 : vector<1x8x384xf32> to vector<8x384xf32>
    %cst_79 = arith.constant dense<0.000000e+00> : vector<8x384xf32>
    %206 = tpu.matmul %200, %3, %cst_79 {dimension_numbers = #tpu.dot_dimension_numbers<[1], [0], [0], [1], [0, 0, 1, 1], [], []>} : vector<8x128xf32>, vector<128x384xf32>, vector<8x384xf32> -> vector<8x384xf32>
    %207 = arith.addf %205, %206 : vector<8x384xf32>
    %cst_80 = arith.constant dense<0.000000e+00> : vector<8x384xf32>
    %208 = tpu.matmul %144, %4, %cst_80 {dimension_numbers = #tpu.dot_dimension_numbers<[1], [0], [0], [1], [0, 0, 1, 1], [], []>} : vector<8x128xf32>, vector<128x384xf32>, vector<8x384xf32> -> vector<8x384xf32>
    %209 = vector.broadcast %5 : vector<1x384xf32> to vector<8x384xf32>
    %210 = arith.addf %208, %209 : vector<8x384xf32>
    %211 = vector.extract_strided_slice %207 {offsets = [0, 0], sizes = [8, 128], strides = [1, 1]} : vector<8x384xf32> to vector<8x128xf32>
    %212 = vector.extract_strided_slice %210 {offsets = [0, 0], sizes = [8, 128], strides = [1, 1]} : vector<8x384xf32> to vector<8x128xf32>
    %213 = arith.addf %211, %212 : vector<8x128xf32>
    %214 = arith.negf %213 : vector<8x128xf32>
    %215 = math.exp %214 : vector<8x128xf32>
    %cst_81 = arith.constant 1.000000e+00 : f32
    %216 = vector.broadcast %cst_81 : f32 to vector<8x128xf32>
    %217 = arith.addf %216, %215 : vector<8x128xf32>
    %218 = arith.divf %216, %217 : vector<8x128xf32>
    %219 = vector.extract_strided_slice %207 {offsets = [0, 128], sizes = [8, 128], strides = [1, 1]} : vector<8x384xf32> to vector<8x128xf32>
    %220 = vector.extract_strided_slice %210 {offsets = [0, 128], sizes = [8, 128], strides = [1, 1]} : vector<8x384xf32> to vector<8x128xf32>
    %221 = arith.addf %219, %220 : vector<8x128xf32>
    %222 = arith.negf %221 : vector<8x128xf32>
    %223 = math.exp %222 : vector<8x128xf32>
    %cst_82 = arith.constant 1.000000e+00 : f32
    %224 = vector.broadcast %cst_82 : f32 to vector<8x128xf32>
    %225 = arith.addf %224, %223 : vector<8x128xf32>
    %226 = arith.divf %224, %225 : vector<8x128xf32>
    %227 = vector.extract_strided_slice %207 {offsets = [0, 256], sizes = [8, 128], strides = [1, 1]} : vector<8x384xf32> to vector<8x128xf32>
    %228 = vector.extract_strided_slice %210 {offsets = [0, 256], sizes = [8, 128], strides = [1, 1]} : vector<8x384xf32> to vector<8x128xf32>
    %229 = arith.mulf %218, %228 : vector<8x128xf32>
    %230 = arith.addf %227, %229 : vector<8x128xf32>
    %231 = math.tanh %230 : vector<8x128xf32>
    %cst_83 = arith.constant 1.000000e+00 : f32
    %232 = vector.broadcast %cst_83 : f32 to vector<8x128xf32>
    %233 = arith.subf %232, %226 : vector<8x128xf32>
    %234 = arith.mulf %233, %231 : vector<8x128xf32>
    %235 = arith.mulf %226, %144 : vector<8x128xf32>
    %236 = arith.addf %234, %235 : vector<8x128xf32>
    %cst_84 = arith.constant dense<0.000000e+00> : vector<8x384xf32>
    %237 = tpu.matmul %236, %6, %cst_84 {dimension_numbers = #tpu.dot_dimension_numbers<[1], [0], [0], [1], [0, 0, 1, 1], [], []>} : vector<8x128xf32>, vector<128x384xf32>, vector<8x384xf32> -> vector<8x384xf32>
    %238 = vector.broadcast %7 : vector<1x384xf32> to vector<8x384xf32>
    %239 = arith.addf %237, %238 : vector<8x384xf32>
    %cst_85 = arith.constant dense<0.000000e+00> : vector<8x384xf32>
    %240 = tpu.matmul %176, %8, %cst_85 {dimension_numbers = #tpu.dot_dimension_numbers<[1], [0], [0], [1], [0, 0, 1, 1], [], []>} : vector<8x128xf32>, vector<128x384xf32>, vector<8x384xf32> -> vector<8x384xf32>
    %241 = vector.broadcast %9 : vector<1x384xf32> to vector<8x384xf32>
    %242 = arith.addf %240, %241 : vector<8x384xf32>
    %243 = vector.extract_strided_slice %239 {offsets = [0, 0], sizes = [8, 128], strides = [1, 1]} : vector<8x384xf32> to vector<8x128xf32>
    %244 = vector.extract_strided_slice %242 {offsets = [0, 0], sizes = [8, 128], strides = [1, 1]} : vector<8x384xf32> to vector<8x128xf32>
    %245 = arith.addf %243, %244 : vector<8x128xf32>
    %246 = arith.negf %245 : vector<8x128xf32>
    %247 = math.exp %246 : vector<8x128xf32>
    %cst_86 = arith.constant 1.000000e+00 : f32
    %248 = vector.broadcast %cst_86 : f32 to vector<8x128xf32>
    %249 = arith.addf %248, %247 : vector<8x128xf32>
    %250 = arith.divf %248, %249 : vector<8x128xf32>
    %251 = vector.extract_strided_slice %239 {offsets = [0, 128], sizes = [8, 128], strides = [1, 1]} : vector<8x384xf32> to vector<8x128xf32>
    %252 = vector.extract_strided_slice %242 {offsets = [0, 128], sizes = [8, 128], strides = [1, 1]} : vector<8x384xf32> to vector<8x128xf32>
    %253 = arith.addf %251, %252 : vector<8x128xf32>
    %254 = arith.negf %253 : vector<8x128xf32>
    %255 = math.exp %254 : vector<8x128xf32>
    %cst_87 = arith.constant 1.000000e+00 : f32
    %256 = vector.broadcast %cst_87 : f32 to vector<8x128xf32>
    %257 = arith.addf %256, %255 : vector<8x128xf32>
    %258 = arith.divf %256, %257 : vector<8x128xf32>
    %259 = vector.extract_strided_slice %239 {offsets = [0, 256], sizes = [8, 128], strides = [1, 1]} : vector<8x384xf32> to vector<8x128xf32>
    %260 = vector.extract_strided_slice %242 {offsets = [0, 256], sizes = [8, 128], strides = [1, 1]} : vector<8x384xf32> to vector<8x128xf32>
    %261 = arith.mulf %250, %260 : vector<8x128xf32>
    %262 = arith.addf %259, %261 : vector<8x128xf32>
    %263 = math.tanh %262 : vector<8x128xf32>
    %cst_88 = arith.constant 1.000000e+00 : f32
    %264 = vector.broadcast %cst_88 : f32 to vector<8x128xf32>
    %265 = arith.subf %264, %258 : vector<8x128xf32>
    %266 = arith.mulf %265, %263 : vector<8x128xf32>
    %267 = arith.mulf %258, %176 : vector<8x128xf32>
    %268 = arith.addf %266, %267 : vector<8x128xf32>
    %cst_89 = arith.constant dense<0.000000e+00> : vector<8x128xf32>
    %269 = tpu.matmul %268, %10, %cst_89 {dimension_numbers = #tpu.dot_dimension_numbers<[1], [0], [0], [1], [0, 0, 1, 1], [], []>} : vector<8x128xf32>, vector<128x128xf32>, vector<8x128xf32> -> vector<8x128xf32>
    %cst_90 = arith.constant dense<0.000000e+00> : vector<8x128xf32>
    %270 = tpu.matmul %268, %12, %cst_90 {dimension_numbers = #tpu.dot_dimension_numbers<[1], [0], [0], [1], [0, 0, 1, 1], [], []>} : vector<8x128xf32>, vector<128x128xf32>, vector<8x128xf32> -> vector<8x128xf32>
    %271 = vector.shape_cast %269 : vector<8x128xf32> to vector<8x1x128xf32>
    %272 = vector.broadcast %271 : vector<8x1x128xf32> to vector<8x16x128xf32>
    %273 = arith.mulf %13, %272 : vector<8x16x128xf32>
    %cst_91 = arith.constant dense<0.000000e+00> : vector<8x16xf32>
    %274 = vector.multi_reduction <add>, %273, %cst_91 [2] : vector<8x16x128xf32> to vector<8x16xf32>
    %275 = arith.addf %274, %14 : vector<8x16xf32>
    %cst_92 = arith.constant dense<0xFF800000> : vector<8xf32>
    %276 = vector.multi_reduction <maximumf>, %275, %cst_92 [1] : vector<8x16xf32> to vector<8xf32>
    %277 = vector.shape_cast %276 : vector<8xf32> to vector<8x1xf32>
    %278 = vector.broadcast %277 : vector<8x1xf32> to vector<8x16xf32>
    %279 = arith.subf %275, %278 : vector<8x16xf32>
    %280 = math.exp %279 : vector<8x16xf32>
    %cst_93 = arith.constant dense<0.000000e+00> : vector<8xf32>
    %281 = vector.multi_reduction <add>, %280, %cst_93 [1] : vector<8x16xf32> to vector<8xf32>
    %282 = vector.shape_cast %281 : vector<8xf32> to vector<8x1xf32>
    %283 = tpu.reciprocal %282 {approx = true} : vector<8x1xf32> -> vector<8x1xf32>
    %284 = vector.broadcast %283 : vector<8x1xf32> to vector<8x16xf32>
    %285 = arith.mulf %280, %284 : vector<8x16xf32>
    %286 = vector.shape_cast %285 : vector<8x16xf32> to vector<8x16x1xf32>
    %287 = vector.broadcast %286 : vector<8x16x1xf32> to vector<8x16x128xf32>
    %288 = arith.mulf %287, %13 : vector<8x16x128xf32>
    %cst_94 = arith.constant dense<0.000000e+00> : vector<8x128xf32>
    %289 = vector.multi_reduction <add>, %288, %cst_94 [1] : vector<8x16x128xf32> to vector<8x128xf32>
    %cst_95 = arith.constant dense<0.000000e+00> : vector<8x128xf32>
    %290 = tpu.matmul %289, %11, %cst_95 {dimension_numbers = #tpu.dot_dimension_numbers<[1], [0], [0], [1], [0, 0, 1, 1], [], []>} : vector<8x128xf32>, vector<128x128xf32>, vector<8x128xf32> -> vector<8x128xf32>
    %291 = arith.addf %290, %270 : vector<8x128xf32>
    %292 = math.tanh %291 : vector<8x128xf32>
    %c2_96 = arith.constant 2 : index
    %c0_97 = arith.constant 0 : index
    %c0_98 = arith.constant 0 : index
    %293 = vector.load %arg16[%c2_96, %c0_97, %c0_98] : memref<3x8x128xf32, #tpu.memory_space<vmem>>, vector<1x8x128xf32>
    %294 = vector.shape_cast %293 : vector<1x8x128xf32> to vector<8x128xf32>
    %295 = vector.shape_cast %292 : vector<8x128xf32> to vector<1x8x128xf32>
    tpu.vector_store %arg16[%c2_96, %c0_97, %c0_98], %295 {strides = array<i32>} : memref<3x8x128xf32, #tpu.memory_space<vmem>>, vector<1x8x128xf32>,
    %c0_99 = arith.constant 0 : index
    %c0_100 = arith.constant 0 : index
    %c0_101 = arith.constant 0 : index
    %296 = vector.load %arg19[%c0_99, %c0_100, %c0_101] : memref<2x8x128xf32, #tpu.memory_space<vmem>>, vector<1x8x128xf32>
    %297 = vector.shape_cast %296 : vector<1x8x128xf32> to vector<8x128xf32>
    %298 = vector.shape_cast %236 : vector<8x128xf32> to vector<1x8x128xf32>
    tpu.vector_store %arg19[%c0_99, %c0_100, %c0_101], %298 {strides = array<i32>} : memref<2x8x128xf32, #tpu.memory_space<vmem>>, vector<1x8x128xf32>,
    %c1_102 = arith.constant 1 : index
    %c0_103 = arith.constant 0 : index
    %c0_104 = arith.constant 0 : index
    %299 = vector.load %arg19[%c1_102, %c0_103, %c0_104] : memref<2x8x128xf32, #tpu.memory_space<vmem>>, vector<1x8x128xf32>
    %300 = vector.shape_cast %299 : vector<1x8x128xf32> to vector<8x128xf32>
    %301 = vector.shape_cast %268 : vector<8x128xf32> to vector<1x8x128xf32>
    tpu.vector_store %arg19[%c1_102, %c0_103, %c0_104], %301 {strides = array<i32>} : memref<2x8x128xf32, #tpu.memory_space<vmem>>, vector<1x8x128xf32>,
    %c0_105 = arith.constant 0 : index
    %c0_106 = arith.constant 0 : index
    %302 = vector.load %arg20[%c0_105, %c0_106] : memref<8x128xf32, #tpu.memory_space<vmem>>, vector<8x128xf32>
    tpu.vector_store %arg20[%c0_105, %c0_106], %292 {strides = array<i32>} : memref<8x128xf32, #tpu.memory_space<vmem>>, vector<8x128xf32>,
    %c1_i32 = arith.constant 1 : i32
    %303 = arith.cmpi eq, %arg0, %c1_i32 : i32
    %304 = arith.extui %303 : i1 to i32
    %c0_i32_107 = arith.constant 0 : i32
    %305 = arith.cmpi ne, %304, %c0_i32_107 : i32
    scf.if %305 {
      %c0_108 = arith.constant 0 : index
      %c0_109 = arith.constant 0 : index
      %c0_110 = arith.constant 0 : index
      %306 = vector.load %arg19[%c0_108, %c0_109, %c0_110] : memref<2x8x128xf32, #tpu.memory_space<vmem>>, vector<2x8x128xf32>
      %c0_111 = arith.constant 0 : index
      %c0_112 = arith.constant 0 : index
      %c0_113 = arith.constant 0 : index
      %307 = vector.load %arg17[%c0_111, %c0_112, %c0_113] : memref<2x8x128xf32, #tpu.memory_space<vmem>>, vector<2x8x128xf32>
      tpu.vector_store %arg17[%c0_111, %c0_112, %c0_113], %306 {strides = array<i32>} : memref<2x8x128xf32, #tpu.memory_space<vmem>>, vector<2x8x128xf32>,
      %c0_114 = arith.constant 0 : index
      %c0_115 = arith.constant 0 : index
      %308 = vector.load %arg20[%c0_114, %c0_115] : memref<8x128xf32, #tpu.memory_space<vmem>>, vector<8x128xf32>
      %c0_116 = arith.constant 0 : index
      %c0_117 = arith.constant 0 : index
      %309 = vector.load %arg18[%c0_116, %c0_117] : memref<8x128xf32, #tpu.memory_space<vmem>>, vector<8x128xf32>
      tpu.vector_store %arg18[%c0_116, %c0_117], %308 {strides = array<i32>} : memref<8x128xf32, #tpu.memory_space<vmem>>, vector<8x128xf32>,
    } else {
    }
    return
  }
  func.func @transform_0(%arg0: i32) -> (i32, i32, i32) {
    %c0_i32 = arith.constant 0 : i32
    %c0_i32_0 = arith.constant 0 : i32
    %c0_i32_1 = arith.constant 0 : i32
    return %arg0, %c0_i32, %c0_i32_0 : i32, i32, i32
  }
  func.func @transform_1(%arg0: i32) -> (i32, i32, i32) {
    %c0_i32 = arith.constant 0 : i32
    %c0_i32_0 = arith.constant 0 : i32
    %c0_i32_1 = arith.constant 0 : i32
    %c0_i32_2 = arith.constant 0 : i32
    return %c0_i32, %c0_i32_0, %c0_i32_1 : i32, i32, i32
  }
  func.func @transform_2(%arg0: i32) -> (i32, i32) {
    %c0_i32 = arith.constant 0 : i32
    %c0_i32_0 = arith.constant 0 : i32
    %c0_i32_1 = arith.constant 0 : i32
    return %c0_i32, %c0_i32_0 : i32, i32
  }
  func.func @transform_3(%arg0: i32) -> (i32, i32, i32) {
    %c0_i32 = arith.constant 0 : i32
    %c0_i32_0 = arith.constant 0 : i32
    %c0_i32_1 = arith.constant 0 : i32
    %c0_i32_2 = arith.constant 0 : i32
    return %c0_i32, %c0_i32_0, %c0_i32_1 : i32, i32, i32
  }
  func.func @transform_4(%arg0: i32) -> (i32, i32) {
    %c0_i32 = arith.constant 0 : i32
    %c0_i32_0 = arith.constant 0 : i32
    %c0_i32_1 = arith.constant 0 : i32
    return %c0_i32, %c0_i32_0 : i32, i32
  }
  func.func @transform_5(%arg0: i32) -> (i32, i32) {
    %c0_i32 = arith.constant 0 : i32
    %c0_i32_0 = arith.constant 0 : i32
    %c0_i32_1 = arith.constant 0 : i32
    return %c0_i32, %c0_i32_0 : i32, i32
  }
  func.func @transform_6(%arg0: i32) -> (i32, i32) {
    %c0_i32 = arith.constant 0 : i32
    %c0_i32_0 = arith.constant 0 : i32
    %c0_i32_1 = arith.constant 0 : i32
    return %c0_i32, %c0_i32_0 : i32, i32
  }
  func.func @transform_7(%arg0: i32) -> (i32, i32) {
    %c0_i32 = arith.constant 0 : i32
    %c0_i32_0 = arith.constant 0 : i32
    %c0_i32_1 = arith.constant 0 : i32
    return %c0_i32, %c0_i32_0 : i32, i32
  }
  func.func @transform_8(%arg0: i32) -> (i32, i32) {
    %c0_i32 = arith.constant 0 : i32
    %c0_i32_0 = arith.constant 0 : i32
    %c0_i32_1 = arith.constant 0 : i32
    return %c0_i32, %c0_i32_0 : i32, i32
  }
  func.func @transform_9(%arg0: i32) -> (i32, i32) {
    %c0_i32 = arith.constant 0 : i32
    %c0_i32_0 = arith.constant 0 : i32
    %c0_i32_1 = arith.constant 0 : i32
    return %c0_i32, %c0_i32_0 : i32, i32
  }
  func.func @transform_10(%arg0: i32) -> (i32, i32) {
    %c0_i32 = arith.constant 0 : i32
    %c0_i32_0 = arith.constant 0 : i32
    %c0_i32_1 = arith.constant 0 : i32
    return %c0_i32, %c0_i32_0 : i32, i32
  }
  func.func @transform_11(%arg0: i32) -> (i32, i32) {
    %c0_i32 = arith.constant 0 : i32
    %c0_i32_0 = arith.constant 0 : i32
    %c0_i32_1 = arith.constant 0 : i32
    return %c0_i32, %c0_i32_0 : i32, i32
  }
  func.func @transform_12(%arg0: i32) -> (i32, i32) {
    %c0_i32 = arith.constant 0 : i32
    %c0_i32_0 = arith.constant 0 : i32
    %c0_i32_1 = arith.constant 0 : i32
    return %c0_i32, %c0_i32_0 : i32, i32
  }
  func.func @transform_13(%arg0: i32) -> (i32, i32) {
    %c0_i32 = arith.constant 0 : i32
    %c0_i32_0 = arith.constant 0 : i32
    %c0_i32_1 = arith.constant 0 : i32
    return %c0_i32, %c0_i32_0 : i32, i32
  }
  func.func @transform_14(%arg0: i32) -> (i32, i32) {
    %c0_i32 = arith.constant 0 : i32
    %c0_i32_0 = arith.constant 0 : i32
    %c0_i32_1 = arith.constant 0 : i32
    return %c0_i32, %c0_i32_0 : i32, i32
  }
  func.func @transform_15(%arg0: i32) -> (i32, i32, i32) {
    %c0_i32 = arith.constant 0 : i32
    %c0_i32_0 = arith.constant 0 : i32
    %c0_i32_1 = arith.constant 0 : i32
    return %arg0, %c0_i32, %c0_i32_0 : i32, i32, i32
  }
  func.func @transform_16(%arg0: i32) -> (i32, i32, i32) {
    %c0_i32 = arith.constant 0 : i32
    %c0_i32_0 = arith.constant 0 : i32
    %c0_i32_1 = arith.constant 0 : i32
    %c0_i32_2 = arith.constant 0 : i32
    return %c0_i32, %c0_i32_0, %c0_i32_1 : i32, i32, i32
  }
  func.func @transform_17(%arg0: i32) -> (i32, i32) {
    %c0_i32 = arith.constant 0 : i32
    %c0_i32_0 = arith.constant 0 : i32
    %c0_i32_1 = arith.constant 0 : i32
    return %c0_i32, %c0_i32_0 : i32, i32
  }
}

</mosaic_0001>

<llo_original>
// kernel: rnn_attention_decoder.3
$region0: #{rnn_attention_decoder.3}
  #allocation0 [shape = 'u32[]', space=smem, size = 0x4, offset = 0x4, fixed_abs, tag = 'smem constant byte address 0x4 - core index']
  #allocation1 [shape = 'u32[72,128]{1,0:T(1,128)}', space=vmem, size = 0x9000, scoped, tag = 'internal scratch']
  %s0 = inlined_call_operand.vmem [shape: f32[48,128], index: 0, kind: input, shape index: {}]
  %s1 = inlined_call_operand.vmem [shape: f32[128,384], index: 1, kind: input, shape index: {}]
  %s2 = inlined_call_operand.vmem [shape: f32[1,384], index: 2, kind: input, shape index: {}]
  %s3 = inlined_call_operand.vmem [shape: f32[48,384], index: 3, kind: output, shape index: {}]
  %s4 = sld [smem:[#allocation0]]
  $region117: #{rnn_attention_decoder.3} parent=0
    _
  %s6 = ssub.s32 1, %s4
  %s7 = scalar_select 0, %s6, %s4
  $region1: #{rnn_attention_decoder.3} parent=0
    #allocation2 [shape = 'u8[131072]{0}', space=vmem, size = 0x20000, scoped, tag = 'input window, operand 1']
    #allocation3 [shape = 'u8[49152]{0}', space=vmem, size = 0xc000, scoped, tag = 'output window, operand 0']
    loop: start=0, step=1, limit=5
    $region2: #{rnn_attention_decoder.3} parent=1 // loop_pre_header
      _
    $region3: #{rnn_attention_decoder.3} parent=1 // loop_header
      %s9 = sphi 0, %s13
      %p10 = scmp.ge.s32.totalorder %s9, 5
      %s16 = sphi 0, %s28
      %s17 = sphi 0, %s24
      %s18 = sphi 0, %s16
      %s19 = sphi 0, %s17
      %s20 = sphi 0, %s18
      %s21 = sphi 0, %s19
      %s31 = sphi 0, %s33
      %s34 = sphi 0, %s31
      %s35 = sphi 0, %s34
      %s51 = sphi 0, %s35
      %s57 = sphi 0, %s59
      %s60 = sphi 0, %s57
      %s61 = sphi 0, %s60
      %s77 = sphi 0, %s61
      %s83 = sphi 0, %s85
      %s86 = sphi 0, %s83
      %s87 = sphi 0, %s86
      %s103 = sphi 0, %s87
      %s111 = sphi 0, %s113
      %s114 = sphi 0, %s111
      %s115 = sphi 0, %s114
      %s131 = sphi 0, %s115
    $region4: #{rnn_attention_decoder.3} parent=1 // loop_header_branch
      %12 = sbr.rel (%p10) target = $region8
    $region5: #{rnn_attention_decoder.3} parent=1 // loop_body
      %s14 = ssub.s32 %s9, 1
      %s15 = ssub.s32 %s9, 2
      %s22 = sadd.s32 1, %s17
      %p23 = scmp.ge.s32.totalorder %s22, 1
      %s24 = scalar_select %p23, 0, %s22
      %s25 = sadd.s32 1, %s16
      %s26 = scalar_select %p23, %s25, %s16
      %p27 = scmp.ge.s32.totalorder %s26, 3
      %s28 = scalar_select %p27, 0, %s26
      %s29 = ssub.s32 %s17, %s24
      %p30 = scmp.eq.s32.totalorder %s29, 0
      %s32 = sadd.s32 %s31, 1
      %s33 = scalar_select %p30, %s31, %s32
      %p36 = pneg %p30
      %p37 = scmp.eq.s32.totalorder %s9, 2
      %p38 = por %p36, %p37
      %p39 = scmp.ne.s32.totalorder %s31, %s34
      %p40 = scmp.eq.s32.totalorder %s9, 0
      %p41 = por %p39, %p40
      %p42 = scmp.ne.s32.totalorder %s31, %s34
      %p43 = scmp.eq.s32.totalorder %s14, 2
      %p44 = por %p42, %p43
      %p45 = scmp.ne.s32.totalorder %s34, %s35
      %p46 = scmp.eq.s32.totalorder %s14, 0
      %p47 = por %p45, %p46
      %p48 = scmp.ne.s32.totalorder %s34, %s35
      %p49 = scmp.eq.s32.totalorder %s15, 2
      %p50 = por %p48, %p49
      %p52 = scmp.ne.s32.totalorder %s35, %s51
      %p53 = scmp.eq.s32.totalorder %s15, 0
      %p54 = por %p52, %p53
      %s55 = ssub.s32 %s16, %s28
      %p56 = scmp.eq.s32.totalorder %s55, 0
      %s58 = sadd.s32 %s57, 1
      %s59 = scalar_select %p56, %s57, %s58
      %p62 = pneg %p56
      %p63 = scmp.eq.s32.totalorder %s9, 2
      %p64 = por %p62, %p63
      %p65 = scmp.ne.s32.totalorder %s57, %s60
      %p66 = scmp.eq.s32.totalorder %s9, 0
      %p67 = por %p65, %p66
      %p68 = scmp.ne.s32.totalorder %s57, %s60
      %p69 = scmp.eq.s32.totalorder %s14, 2
      %p70 = por %p68, %p69
      %p71 = scmp.ne.s32.totalorder %s60, %s61
      %p72 = scmp.eq.s32.totalorder %s14, 0
      %p73 = por %p71, %p72
      %p74 = scmp.ne.s32.totalorder %s60, %s61
      %p75 = scmp.eq.s32.totalorder %s15, 2
      %p76 = por %p74, %p75
      %p78 = scmp.ne.s32.totalorder %s61, %s77
      %p79 = scmp.eq.s32.totalorder %s15, 0
      %p80 = por %p78, %p79
      %s81 = ssub.s32 %s16, %s28
      %p82 = scmp.eq.s32.totalorder %s81, 0
      %s84 = sadd.s32 %s83, 1
      %s85 = scalar_select %p82, %s83, %s84
      %p88 = pneg %p82
      %p89 = scmp.eq.s32.totalorder %s9, 2
      %p90 = por %p88, %p89
      %p91 = scmp.ne.s32.totalorder %s83, %s86
      %p92 = scmp.eq.s32.totalorder %s9, 0
      %p93 = por %p91, %p92
      %p94 = scmp.ne.s32.totalorder %s83, %s86
      %p95 = scmp.eq.s32.totalorder %s14, 2
      %p96 = por %p94, %p95
      %p97 = scmp.ne.s32.totalorder %s86, %s87
      %p98 = scmp.eq.s32.totalorder %s14, 0
      %p99 = por %p97, %p98
      %p100 = scmp.ne.s32.totalorder %s86, %s87
      %p101 = scmp.eq.s32.totalorder %s15, 2
      %p102 = por %p100, %p101
      %p104 = scmp.ne.s32.totalorder %s87, %s103
      %p105 = scmp.eq.s32.totalorder %s15, 0
      %p106 = por %p104, %p105
      %s107 = ssub.s32 %s17, %s24
      %s108 = ssub.s32 %s16, %s28
      %s109 = sor.u32 %s107, %s108
      %p110 = scmp.eq.s32.totalorder %s109, 0
      %s112 = sadd.s32 %s111, 1
      %s113 = scalar_select %p110, %s111, %s112
      %p116 = pneg %p110
      %p117 = scmp.eq.s32.totalorder %s9, 2
      %p118 = por %p116, %p117
      %p119 = scmp.ne.s32.totalorder %s111, %s114
      %p120 = scmp.eq.s32.totalorder %s9, 0
      %p121 = por %p119, %p120
      %p122 = scmp.ne.s32.totalorder %s111, %s114
      %p123 = scmp.eq.s32.totalorder %s14, 2
      %p124 = por %p122, %p123
      %p125 = scmp.ne.s32.totalorder %s114, %s115
      %p126 = scmp.eq.s32.totalorder %s14, 0
      %p127 = por %p125, %p126
      %p128 = scmp.ne.s32.totalorder %s114, %s115
      %p129 = scmp.eq.s32.totalorder %s15, 2
      %p130 = por %p128, %p129
      %p132 = scmp.ne.s32.totalorder %s115, %s131
      %p133 = scmp.eq.s32.totalorder %s15, 0
      %p134 = por %p132, %p133
      %p135 = scmp.le.s32.totalorder 1, %s9
      %p136 = scmp.lt.s32.totalorder %s9, 4
      %p137 = pnand %p135, %p136
      %p138 = pneg %p137
      // Predicated region
      $region9: #{rnn_attention_decoder.3} parent=5 // pred_check
        _
      $region10: #{rnn_attention_decoder.3} parent=5 // pred_check_branch
        %140 = sbr.rel (%p137) target = $region12
      $region11: #{rnn_attention_decoder.3} parent=5 // pred_region
        %s141 = ssub.s32 %s9, 1
        // Predicated region
        $region13: #{rnn_attention_decoder.3} parent=11 // pred_check
          %p142 = pneg %p47
        $region14: #{rnn_attention_decoder.3} parent=11 // pred_check_branch
          %144 = sbr.rel (%p142) target = $region16
        $region15: #{rnn_attention_decoder.3} parent=11 // pred_region
          %s145 = smul.u32 6, %s19
          %p146 = scmp.lt.s32.totalorder %s145, 5
          %s147 = scalar_select %p146, %s145, 5
          %s148 = smul.addr %s147, 8
          %s149 = scalar_lea.vmem %s0, %s148
          %s150 = smul.u32 6, %s19
        $region16: #{rnn_attention_decoder.3} parent=11 // pred_fallthru
          _
      $region12: #{rnn_attention_decoder.3} parent=5 // pred_fallthru
        _
      %p151 = scmp.lt.s32.totalorder %s9, 3
      // Predicated region
      $region17: #{rnn_attention_decoder.3} parent=5 // pred_check
        %p152 = pneg %p151
      $region18: #{rnn_attention_decoder.3} parent=5 // pred_check_branch
        %154 = sbr.rel (%p152) target = $region20
      $region19: #{rnn_attention_decoder.3} parent=5 // pred_region
        // Predicated region
        $region21: #{rnn_attention_decoder.3} parent=19 // pred_check
          %p155 = pneg %p67
        $region22: #{rnn_attention_decoder.3} parent=19 // pred_check_branch
          %157 = sbr.rel (%p155) target = $region24
        $region23: #{rnn_attention_decoder.3} parent=19 // pred_region
          %s158 = sand.u32 %s57, 1
          %s159 = sand.u32 %s57, 1
          %s160 = smul.addr %s159, 128
          %s161 = scalar_lea.vmem [#allocation2], %s160
          %s162 = smul.addr %s16, 8
          %s163 = scalar_lea.vmem %s1, %s162
          // Predicated region
          $region25: #{rnn_attention_decoder.3} parent=23 // pred_check
            _
          $region26: #{rnn_attention_decoder.3} parent=23 // pred_check_branch
            %165 = sbr.rel (0) target = $region28
          $region27: #{rnn_attention_decoder.3} parent=23 // pred_region
            // Predicated region
            $region29: #{rnn_attention_decoder.3} parent=27 // pred_check
              _
            $region30: #{rnn_attention_decoder.3} parent=27 // pred_check_branch
              %167 = sbr.rel (0) target = $region32
            $region31: #{rnn_attention_decoder.3} parent=27 // pred_region
              // Predicated region
              $region44: #{rnn_attention_decoder.3} parent=31 // pred_check
                _
              $region45: #{rnn_attention_decoder.3} parent=31 // pred_check_branch
                %213 = sbr.rel (0) target = $region47
              $region46: #{rnn_attention_decoder.3} parent=31 // pred_region
                loop: start=0, step=1, limit=1
                $region48: #{rnn_attention_decoder.3} parent=46 // loop_pre_header
                  _
                $region49: #{rnn_attention_decoder.3} parent=46 // loop_header
                  %s215 = sphi 0, %s219
                  %p216 = scmp.ge.s32.totalorder %s215, 1
                  %s220 = sphi %s163, %s163
                  %s221 = sphi %s161, %s161
                $region50: #{rnn_attention_decoder.3} parent=46 // loop_header_branch
                  %218 = sbr.rel (%p216) target = $region54
                $region51: #{rnn_attention_decoder.3} parent=46 // loop_body
                  %v222 = vld [vmem:[%s220] sm:$0xff]
                  %223 = vst [vmem:[%s221] sm:$0xff] %v222
                  %v224 = vld [vmem:[%s220 + $0x18] sm:$0xff]
                  %225 = vst [vmem:[%s221 + $0x8] sm:$0xff] %v224
                  %v226 = vld [vmem:[%s220 + $0x30] sm:$0xff]
                  %227 = vst [vmem:[%s221 + $0x10] sm:$0xff] %v226
                  %v228 = vld [vmem:[%s220 + $0x48] sm:$0xff]
                  %229 = vst [vmem:[%s221 + $0x18] sm:$0xff] %v228
                  %v230 = vld [vmem:[%s220 + $0x60] sm:$0xff]
                  %231 = vst [vmem:[%s221 + $0x20] sm:$0xff] %v230
                  %v232 = vld [vmem:[%s220 + $0x78] sm:$0xff]
                  %233 = vst [vmem:[%s221 + $0x28] sm:$0xff] %v232
                  %v234 = vld [vmem:[%s220 + $0x90] sm:$0xff]
                  %235 = vst [vmem:[%s221 + $0x30] sm:$0xff] %v234
                  %v236 = vld [vmem:[%s220 + $0xa8] sm:$0xff]
                  %237 = vst [vmem:[%s221 + $0x38] sm:$0xff] %v236
                  %v238 = vld [vmem:[%s220 + $0xc0] sm:$0xff]
                  %239 = vst [vmem:[%s221 + $0x40] sm:$0xff] %v238
                  %v240 = vld [vmem:[%s220 + $0xd8] sm:$0xff]
                  %241 = vst [vmem:[%s221 + $0x48] sm:$0xff] %v240
                  %v242 = vld [vmem:[%s220 + $0xf0] sm:$0xff]
                  %243 = vst [vmem:[%s221 + $0x50] sm:$0xff] %v242
                  %v244 = vld [vmem:[%s220 + $0x108] sm:$0xff]
                  %245 = vst [vmem:[%s221 + $0x58] sm:$0xff] %v244
                  %v246 = vld [vmem:[%s220 + $0x120] sm:$0xff]
                  %247 = vst [vmem:[%s221 + $0x60] sm:$0xff] %v246
                  %v248 = vld [vmem:[%s220 + $0x138] sm:$0xff]
                  %249 = vst [vmem:[%s221 + $0x68] sm:$0xff] %v248
                  %v250 = vld [vmem:[%s220 + $0x150] sm:$0xff]
                  %251 = vst [vmem:[%s221 + $0x70] sm:$0xff] %v250
                  %v252 = vld [vmem:[%s220 + $0x168] sm:$0xff]
                  %253 = vst [vmem:[%s221 + $0x78] sm:$0xff] %v252
                $region52: #{rnn_attention_decoder.3} parent=46 // loop_footer
                  %s219 = sadd.s32 1, %s215
                $region53: #{rnn_attention_decoder.3} parent=46 // loop_footer_branch
                  %214 = sbr.rel target = $region49
                $region54: #{rnn_attention_decoder.3} parent=46 // loop_exit
                  _
              $region47: #{rnn_attention_decoder.3} parent=31 // pred_fallthru
                _
              // Predicated region
              $region55: #{rnn_attention_decoder.3} parent=31 // pred_check
                _
              $region56: #{rnn_attention_decoder.3} parent=31 // pred_check_branch
                %255 = sbr.rel target = $region58
              $region57: #{rnn_attention_decoder.3} parent=31 // pred_region
                _
              $region58: #{rnn_attention_decoder.3} parent=31 // pred_fallthru
                _
            $region32: #{rnn_attention_decoder.3} parent=27 // pred_fallthru
              _
            // Predicated region
            $region33: #{rnn_attention_decoder.3} parent=27 // pred_check
              _
            $region34: #{rnn_attention_decoder.3} parent=27 // pred_check_branch
              %169 = sbr.rel target = $region36
            $region35: #{rnn_attention_decoder.3} parent=27 // pred_region
              %s171 = ssub.s32 256, 1
              loop: start=0, step=1, limit=1
              $region37: #{rnn_attention_decoder.3} parent=35 // loop_pre_header
                _
              $region38: #{rnn_attention_decoder.3} parent=35 // loop_header
                %s173 = sphi 0, %s177
                %p174 = scmp.ge.s32.totalorder %s173, 1
                %s178 = sphi %s163, %s163
                %s179 = sphi %s161, %s161
              $region39: #{rnn_attention_decoder.3} parent=35 // loop_header_branch
                %176 = sbr.rel (%p174) target = $region43
              $region40: #{rnn_attention_decoder.3} parent=35 // loop_body
                %v180 = vld [vmem:[%s178] sm:%s171]
                %181 = vst [vmem:[%s179] sm:%s171] %v180
                %v182 = vld [vmem:[%s178 + $0x18] sm:%s171]
                %183 = vst [vmem:[%s179 + $0x8] sm:%s171] %v182
                %v184 = vld [vmem:[%s178 + $0x30] sm:%s171]
                %185 = vst [vmem:[%s179 + $0x10] sm:%s171] %v184
                %v186 = vld [vmem:[%s178 + $0x48] sm:%s171]
                %187 = vst [vmem:[%s179 + $0x18] sm:%s171] %v186
                %v188 = vld [vmem:[%s178 + $0x60] sm:%s171]
                %189 = vst [vmem:[%s179 + $0x20] sm:%s171] %v188
                %v190 = vld [vmem:[%s178 + $0x78] sm:%s171]
                %191 = vst [vmem:[%s179 + $0x28] sm:%s171] %v190
                %v192 = vld [vmem:[%s178 + $0x90] sm:%s171]
                %193 = vst [vmem:[%s179 + $0x30] sm:%s171] %v192
                %v194 = vld [vmem:[%s178 + $0xa8] sm:%s171]
                %195 = vst [vmem:[%s179 + $0x38] sm:%s171] %v194
                %v196 = vld [vmem:[%s178 + $0xc0] sm:%s171]
                %197 = vst [vmem:[%s179 + $0x40] sm:%s171] %v196
                %v198 = vld [vmem:[%s178 + $0xd8] sm:%s171]
                %199 = vst [vmem:[%s179 + $0x48] sm:%s171] %v198
                %v200 = vld [vmem:[%s178 + $0xf0] sm:%s171]
                %201 = vst [vmem:[%s179 + $0x50] sm:%s171] %v200
                %v202 = vld [vmem:[%s178 + $0x108] sm:%s171]
                %203 = vst [vmem:[%s179 + $0x58] sm:%s171] %v202
                %v204 = vld [vmem:[%s178 + $0x120] sm:%s171]
                %205 = vst [vmem:[%s179 + $0x60] sm:%s171] %v204
                %v206 = vld [vmem:[%s178 + $0x138] sm:%s171]
                %207 = vst [vmem:[%s179 + $0x68] sm:%s171] %v206
                %v208 = vld [vmem:[%s178 + $0x150] sm:%s171]
                %209 = vst [vmem:[%s179 + $0x70] sm:%s171] %v208
                %v210 = vld [vmem:[%s178 + $0x168] sm:%s171]
                %211 = vst [vmem:[%s179 + $0x78] sm:%s171] %v210
              $region41: #{rnn_attention_decoder.3} parent=35 // loop_footer
                %s177 = sadd.s32 1, %s173
              $region42: #{rnn_attention_decoder.3} parent=35 // loop_footer_branch
                %172 = sbr.rel target = $region38
              $region43: #{rnn_attention_decoder.3} parent=35 // loop_exit
                _
            $region36: #{rnn_attention_decoder.3} parent=27 // pred_fallthru
              _
          $region28: #{rnn_attention_decoder.3} parent=23 // pred_fallthru
            _
          %256 = vnop
        $region24: #{rnn_attention_decoder.3} parent=19 // pred_fallthru
          _
        // Predicated region
        $region59: #{rnn_attention_decoder.3} parent=19 // pred_check
          %p257 = pneg %p93
        $region60: #{rnn_attention_decoder.3} parent=19 // pred_check_branch
          %259 = sbr.rel (%p257) target = $region62
        $region61: #{rnn_attention_decoder.3} parent=19 // pred_region
          %p260 = scmp.lt.s32.totalorder %s16, 2
          %s261 = scalar_select %p260, %s16, 2
          %s262 = scalar_lea.vmem %s2, %s261
        $region62: #{rnn_attention_decoder.3} parent=19 // pred_fallthru
          _
      $region20: #{rnn_attention_decoder.3} parent=5 // pred_fallthru
        _
      %p263 = scmp.le.s32.totalorder 1, %s9
      %p264 = scmp.lt.s32.totalorder %s9, 4
      %p265 = pnand %p263, %p264
      %p266 = pneg %p265
      // Predicated region
      $region63: #{rnn_attention_decoder.3} parent=5 // pred_check
        _
      $region64: #{rnn_attention_decoder.3} parent=5 // pred_check_branch
        %268 = sbr.rel (%p265) target = $region66
      $region65: #{rnn_attention_decoder.3} parent=5 // pred_region
        %s269 = ssub.s32 %s9, 1
        %s270 = sand.u32 %s60, 1
        %s271 = sand.u32 %s60, 1
        %s272 = smul.addr %s271, 128
        %s273 = scalar_lea.vmem [#allocation2], %s272
        // Predicated region
        $region67: #{rnn_attention_decoder.3} parent=65 // pred_check
          %p274 = pneg %p73
        $region68: #{rnn_attention_decoder.3} parent=65 // pred_check_branch
          %276 = sbr.rel (%p274) target = $region70
        $region69: #{rnn_attention_decoder.3} parent=65 // pred_region
          _
        $region70: #{rnn_attention_decoder.3} parent=65 // pred_fallthru
          _
        %s277 = smul.u32 6, %s19
        %p278 = scmp.lt.s32.totalorder %s277, 5
        %s279 = scalar_select %p278, %s277, 5
        %s280 = smul.addr %s279, 8
        %s281 = scalar_lea.vmem %s0, %s280
        %p282 = pneg %p47
        %p283 = pneg %p44
        %s284 = sand.u32 %s60, 1
        %s285 = sand.u32 %s60, 1
        %s286 = smul.addr %s285, 128
        %s287 = scalar_lea.vmem [#allocation2], %s286
        %p288 = pneg %p73
        %p289 = pneg %p70
        %p290 = scmp.lt.s32.totalorder %s18, 2
        %s291 = scalar_select %p290, %s18, 2
        %s292 = scalar_lea.vmem %s2, %s291
        %p293 = pneg %p99
        %p294 = pneg %p96
        %p295 = pneg %p127
        %p296 = pneg %p124
        %s297 = sand.u32 %s114, 1
        %s298 = sand.u32 %s114, 1
        %s299 = smul.addr %s298, 48
        %s300 = scalar_lea.vmem [#allocation3], %s299
        %s301 = smul.u32 6, %s19
        %p302 = scmp.lt.s32.totalorder %s301, 5
        %s303 = scalar_select %p302, %s301, 5
        %s304 = smul.addr %s303, 8
        %s305 = scalar_lea.vmem %s0, %s304
        %s306 = smul.u32 6, %s19
        %p307 = scmp.lt.s32.totalorder %s18, 2
        %s308 = scalar_select %p307, %s18, 2
        %s309 = scalar_lea.vmem %s2, %s308
        %s310 = smul.u32 6, %s19
        %v311 = vld [vmem:[%s305] sm:$0xff]
        %v312 = vld [vmem:[%s305 + $0x8] sm:$0xff]
        %v313 = vld [vmem:[%s305 + $0x10] sm:$0xff]
        %v314 = vld [vmem:[%s305 + $0x18] sm:$0xff]
        %v315 = vld [vmem:[%s305 + $0x20] sm:$0xff]
        %v316 = vld [vmem:[%s305 + $0x28] sm:$0xff]
        %v317 = vld [vmem:[%s273] sm:$0xff]
        %v318 = vld [vmem:[%s273 + $0x8] sm:$0xff]
        %v319 = vld [vmem:[%s273 + $0x10] sm:$0xff]
        %v320 = vld [vmem:[%s273 + $0x18] sm:$0xff]
        %v321 = vld [vmem:[%s273 + $0x20] sm:$0xff]
        %v322 = vld [vmem:[%s273 + $0x28] sm:$0xff]
        %v323 = vld [vmem:[%s273 + $0x30] sm:$0xff]
        %v324 = vld [vmem:[%s273 + $0x38] sm:$0xff]
        %v325 = vld [vmem:[%s273 + $0x40] sm:$0xff]
        %v326 = vld [vmem:[%s273 + $0x48] sm:$0xff]
        %v327 = vld [vmem:[%s273 + $0x50] sm:$0xff]
        %v328 = vld [vmem:[%s273 + $0x58] sm:$0xff]
        %v329 = vld [vmem:[%s273 + $0x60] sm:$0xff]
        %v330 = vld [vmem:[%s273 + $0x68] sm:$0xff]
        %v331 = vld [vmem:[%s273 + $0x70] sm:$0xff]
        %v332 = vld [vmem:[%s273 + $0x78] sm:$0xff]
        %v333 = vld [vmem:[%s309] sm:$0x1]
        %v335 = vperm.slane %v333, 0
        %337 = vmatpush.msra.mxu0 %v332
        %338 = vmatpush.msra.mxu0 %v331
        %339 = vmatpush.msra.mxu0 %v330
        %340 = vmatpush.msra.mxu0 %v329
        %341 = vmatpush.msra.mxu0 %v328
        %342 = vmatpush.msra.mxu0 %v327
        %343 = vmatpush.msra.mxu0 %v326
        %344 = vmatpush.msra.mxu0 %v325
        %345 = vmatpush.msra.mxu0 %v324
        %346 = vmatpush.msra.mxu0 %v323
        %347 = vmatpush.msra.mxu0 %v322
        %348 = vmatpush.msra.mxu0 %v321
        %349 = vmatpush.msra.mxu0 %v320
        %350 = vmatpush.msra.mxu0 %v319
        %351 = vmatpush.msra.mxu0 %v318
        %352 = vmatpush.msra.mxu0 %v317
        %353 = vmatmul.f32.gmra.mxu0 %v311
        %v354 = vpop.f32.mrf.mxu0
        %v355 = vadd.f32 %v335, %v354
        %356 = vmatmul.f32.gmra.mxu0 %v312
        %v357 = vpop.f32.mrf.mxu0
        %v358 = vadd.f32 %v335, %v357
        %359 = vmatmul.f32.gmra.mxu0 %v313
        %v360 = vpop.f32.mrf.mxu0
        %v361 = vadd.f32 %v335, %v360
        %362 = vmatmul.f32.gmra.mxu0 %v314
        %v363 = vpop.f32.mrf.mxu0
        %v364 = vadd.f32 %v335, %v363
        %365 = vmatmul.f32.gmra.mxu0 %v315
        %v366 = vpop.f32.mrf.mxu0
        %v367 = vadd.f32 %v335, %v366
        %368 = vmatmul.f32.gmra.mxu0 %v316
        %v369 = vpop.f32.mrf.mxu0
        %v370 = vadd.f32 %v335, %v369
        %371 = vdwg.mxu0
        %372 = vst [vmem:[%s300] sm:$0xff] %v355
        %373 = vst [vmem:[%s300 + $0x8] sm:$0xff] %v358
        %374 = vst [vmem:[%s300 + $0x10] sm:$0xff] %v361
        %375 = vst [vmem:[%s300 + $0x18] sm:$0xff] %v364
        %376 = vst [vmem:[%s300 + $0x20] sm:$0xff] %v367
        %377 = vst [vmem:[%s300 + $0x28] sm:$0xff] %v370
        %s378 = sand.u32 %s114, 1
        %s379 = sand.u32 %s114, 1
        %s380 = smul.addr %s379, 48
        %s381 = scalar_lea.vmem [#allocation3], %s380
        // Predicated region
        $region71: #{rnn_attention_decoder.3} parent=65 // pred_check
          %p382 = pneg %p124
        $region72: #{rnn_attention_decoder.3} parent=65 // pred_check_branch
          %384 = sbr.rel (%p382) target = $region74
        $region73: #{rnn_attention_decoder.3} parent=65 // pred_region
          %s385 = smul.u32 6, %s19
          %s386 = smul.addr %s385, 3
          %s387 = sadd.s32 %s18, %s386
          %s388 = smul.addr %s387, 8
          %s389 = scalar_lea.vmem %s3, %s388
          // Predicated region
          $region75: #{rnn_attention_decoder.3} parent=73 // pred_check
            _
          $region76: #{rnn_attention_decoder.3} parent=73 // pred_check_branch
            %391 = sbr.rel (0) target = $region78
          $region77: #{rnn_attention_decoder.3} parent=73 // pred_region
            // Predicated region
            $region79: #{rnn_attention_decoder.3} parent=77 // pred_check
              _
            $region80: #{rnn_attention_decoder.3} parent=77 // pred_check_branch
              %393 = sbr.rel (0) target = $region82
            $region81: #{rnn_attention_decoder.3} parent=77 // pred_region
              // Predicated region
              $region94: #{rnn_attention_decoder.3} parent=81 // pred_check
                _
              $region95: #{rnn_attention_decoder.3} parent=81 // pred_check_branch
                %419 = sbr.rel (0) target = $region97
              $region96: #{rnn_attention_decoder.3} parent=81 // pred_region
                loop: start=0, step=1, limit=1
                $region98: #{rnn_attention_decoder.3} parent=96 // loop_pre_header
                  _
                $region99: #{rnn_attention_decoder.3} parent=96 // loop_header
                  %s421 = sphi 0, %s425
                  %p422 = scmp.ge.s32.totalorder %s421, 1
                  %s426 = sphi %s381, %s381
                  %s427 = sphi %s389, %s389
                $region100: #{rnn_attention_decoder.3} parent=96 // loop_header_branch
                  %424 = sbr.rel (%p422) target = $region104
                $region101: #{rnn_attention_decoder.3} parent=96 // loop_body
                  %v428 = vld [vmem:[%s426] sm:$0xff]
                  %429 = vst [vmem:[%s427] sm:$0xff] %v428
                  %v430 = vld [vmem:[%s426 + $0x8] sm:$0xff]
                  %431 = vst [vmem:[%s427 + $0x18] sm:$0xff] %v430
                  %v432 = vld [vmem:[%s426 + $0x10] sm:$0xff]
                  %433 = vst [vmem:[%s427 + $0x30] sm:$0xff] %v432
                  %v434 = vld [vmem:[%s426 + $0x18] sm:$0xff]
                  %435 = vst [vmem:[%s427 + $0x48] sm:$0xff] %v434
                  %v436 = vld [vmem:[%s426 + $0x20] sm:$0xff]
                  %437 = vst [vmem:[%s427 + $0x60] sm:$0xff] %v436
                  %v438 = vld [vmem:[%s426 + $0x28] sm:$0xff]
                  %439 = vst [vmem:[%s427 + $0x78] sm:$0xff] %v438
                $region102: #{rnn_attention_decoder.3} parent=96 // loop_footer
                  %s425 = sadd.s32 1, %s421
                $region103: #{rnn_attention_decoder.3} parent=96 // loop_footer_branch
                  %420 = sbr.rel target = $region99
                $region104: #{rnn_attention_decoder.3} parent=96 // loop_exit
                  _
              $region97: #{rnn_attention_decoder.3} parent=81 // pred_fallthru
                _
              // Predicated region
              $region105: #{rnn_attention_decoder.3} parent=81 // pred_check
                _
              $region106: #{rnn_attention_decoder.3} parent=81 // pred_check_branch
                %441 = sbr.rel target = $region108
              $region107: #{rnn_attention_decoder.3} parent=81 // pred_region
                _
              $region108: #{rnn_attention_decoder.3} parent=81 // pred_fallthru
                _
            $region82: #{rnn_attention_decoder.3} parent=77 // pred_fallthru
              _
            // Predicated region
            $region83: #{rnn_attention_decoder.3} parent=77 // pred_check
              _
            $region84: #{rnn_attention_decoder.3} parent=77 // pred_check_branch
              %395 = sbr.rel target = $region86
            $region85: #{rnn_attention_decoder.3} parent=77 // pred_region
              %s397 = ssub.s32 256, 1
              loop: start=0, step=1, limit=1
              $region87: #{rnn_attention_decoder.3} parent=85 // loop_pre_header
                _
              $region88: #{rnn_attention_decoder.3} parent=85 // loop_header
                %s399 = sphi 0, %s403
                %p400 = scmp.ge.s32.totalorder %s399, 1
                %s404 = sphi %s381, %s381
                %s405 = sphi %s389, %s389
              $region89: #{rnn_attention_decoder.3} parent=85 // loop_header_branch
                %402 = sbr.rel (%p400) target = $region93
              $region90: #{rnn_attention_decoder.3} parent=85 // loop_body
                %v406 = vld [vmem:[%s404] sm:%s397]
                %407 = vst [vmem:[%s405] sm:%s397] %v406
                %v408 = vld [vmem:[%s404 + $0x8] sm:%s397]
                %409 = vst [vmem:[%s405 + $0x18] sm:%s397] %v408
                %v410 = vld [vmem:[%s404 + $0x10] sm:%s397]
                %411 = vst [vmem:[%s405 + $0x30] sm:%s397] %v410
                %v412 = vld [vmem:[%s404 + $0x18] sm:%s397]
                %413 = vst [vmem:[%s405 + $0x48] sm:%s397] %v412
                %v414 = vld [vmem:[%s404 + $0x20] sm:%s397]
                %415 = vst [vmem:[%s405 + $0x60] sm:%s397] %v414
                %v416 = vld [vmem:[%s404 + $0x28] sm:%s397]
                %417 = vst [vmem:[%s405 + $0x78] sm:%s397] %v416
              $region91: #{rnn_attention_decoder.3} parent=85 // loop_footer
                %s403 = sadd.s32 1, %s399
              $region92: #{rnn_attention_decoder.3} parent=85 // loop_footer_branch
                %398 = sbr.rel target = $region88
              $region93: #{rnn_attention_decoder.3} parent=85 // loop_exit
                _
            $region86: #{rnn_attention_decoder.3} parent=77 // pred_fallthru
              _
          $region78: #{rnn_attention_decoder.3} parent=73 // pred_fallthru
            _
          %442 = vnop
        $region74: #{rnn_attention_decoder.3} parent=65 // pred_fallthru
          _
      $region66: #{rnn_attention_decoder.3} parent=5 // pred_fallthru
        _
      %p443 = scmp.le.s32.totalorder 2, %s9
      // Predicated region
      $region109: #{rnn_attention_decoder.3} parent=5 // pred_check
        %p444 = pneg %p443
      $region110: #{rnn_attention_decoder.3} parent=5 // pred_check_branch
        %446 = sbr.rel (%p444) target = $region112
      $region111: #{rnn_attention_decoder.3} parent=5 // pred_region
        %s447 = ssub.s32 %s9, 2
        // Predicated region
        $region113: #{rnn_attention_decoder.3} parent=111 // pred_check
          %p448 = pneg %p130
        $region114: #{rnn_attention_decoder.3} parent=111 // pred_check_branch
          %450 = sbr.rel (%p448) target = $region116
        $region115: #{rnn_attention_decoder.3} parent=111 // pred_region
          %s451 = sand.u32 %s115, 1
          %s452 = sand.u32 %s115, 1
          %s453 = smul.addr %s452, 48
          %s454 = scalar_lea.vmem [#allocation3], %s453
        $region116: #{rnn_attention_decoder.3} parent=111 // pred_fallthru
          _
      $region112: #{rnn_attention_decoder.3} parent=5 // pred_fallthru
        _
    $region6: #{rnn_attention_decoder.3} parent=1 // loop_footer
      %s13 = sadd.s32 1, %s9
    $region7: #{rnn_attention_decoder.3} parent=1 // loop_footer_branch
      %8 = sbr.rel target = $region3
    $region8: #{rnn_attention_decoder.3} parent=1 // loop_exit
      _

// kernel: rnn_attention_decoder.2
$region0: #{rnn_attention_decoder.2}
  #allocation0 [shape = 'u32[]', space=smem, size = 0x4, offset = 0x4, fixed_abs, tag = 'smem constant byte address 0x4 - core index']
  #allocation1 [shape = 'u32[72,128]{1,0:T(1,128)}', space=vmem, size = 0x9000, scoped, tag = 'internal scratch']
  #allocation2 [shape = 'f32[2,8,128]{2,1,0:T(8,128)}', space=vmem, size = 0x2000, scoped, tag = 'scratch operand']
  #allocation3 [shape = 'f32[8,128]{1,0:T(8,128)}', space=vmem, size = 0x1000, scoped, tag = 'scratch operand']
  %s0 = inlined_call_operand.vmem [shape: f32[6,8,384], index: 0, kind: input, shape index: {}]
  %s1 = inlined_call_operand.hbm [shape: f32[2,8,128], index: 1, kind: input, shape index: {}]
  %s2 = inlined_call_operand.hbm [shape: f32[8,128], index: 2, kind: input, shape index: {}]
  %s3 = inlined_call_operand.vmem [shape: f32[8,16,128], index: 3, kind: input, shape index: {}]
  %s4 = inlined_call_operand.hbm [shape: f32[8,16], index: 4, kind: input, shape index: {}]
  %s5 = inlined_call_operand.vmem [shape: f32[128,384], index: 5, kind: input, shape index: {}]
  %s6 = inlined_call_operand.vmem [shape: f32[128,384], index: 6, kind: input, shape index: {}]
  %s7 = inlined_call_operand.vmem [shape: f32[1,384], index: 7, kind: input, shape index: {}]
  %s8 = inlined_call_operand.hbm [shape: f32[128,384], index: 8, kind: input, shape index: {}]
  %s9 = inlined_call_operand.hbm [shape: f32[1,384], index: 9, kind: input, shape index: {}]
  %s10 = inlined_call_operand.hbm [shape: f32[128,384], index: 10, kind: input, shape index: {}]
  %s11 = inlined_call_operand.hbm [shape: f32[1,384], index: 11, kind: input, shape index: {}]
  %s12 = inlined_call_operand.hbm [shape: f32[128,128], index: 12, kind: input, shape index: {}]
  %s13 = inlined_call_operand.hbm [shape: f32[128,128], index: 13, kind: input, shape index: {}]
  %s14 = inlined_call_operand.hbm [shape: f32[128,128], index: 14, kind: input, shape index: {}]
  %s15 = inlined_call_operand.vmem [shape: f32[6,8,128], index: 15, kind: output, shape index: {0}]
  %s16 = inlined_call_operand.hbm [shape: f32[2,8,128], index: 16, kind: output, shape index: {1}]
  %s17 = inlined_call_operand.hbm [shape: f32[8,128], index: 17, kind: output, shape index: {2}]
  %18 = xla_tuple %s15, %s16, %s17
  %s19 = sld [smem:[#allocation0]]
  $region157: #{rnn_attention_decoder.2} parent=0
    _
  %s21 = ssub.s32 1, %s19
  %s22 = scalar_select 0, %s21, %s19
  $region1: #{rnn_attention_decoder.2} parent=0
    #allocation4 [shape = 'u8[8192]{0}', space=vmem, size = 0x2000, scoped, tag = 'input window, operand 1, single buffered']
    #allocation5 [shape = 's32[2]{0}', space=sflag, size = 0x8, scoped, tag = 'scoped memory for rnn_attention_decoder.2']
    #allocation6 [shape = 's32[2]{0}', space=sflag, size = 0x8, scoped, tag = 'scoped memory for rnn_attention_decoder.2']
    #allocation7 [shape = 'u8[4096]{0}', space=vmem, size = 0x1000, scoped, tag = 'input window, operand 2, single buffered']
    #allocation8 [shape = 's32[1]{0}', space=sflag, size = 0x4, scoped, tag = 'scoped memory for rnn_attention_decoder.2']
    #allocation9 [shape = 'u8[4096]{0}', space=vmem, size = 0x1000, scoped, tag = 'input window, operand 4, single buffered']
    #allocation10 [shape = 'u8[196608]{0}', space=vmem, size = 0x30000, scoped, tag = 'input window, operand 8, single buffered']
    #allocation11 [shape = 's32[1]{0}', space=sflag, size = 0x4, scoped, tag = 'scoped memory for rnn_attention_decoder.2']
    #allocation12 [shape = 'u8[1536]{0}', space=vmem, size = 0x800, scoped, tag = 'input window, operand 9, single buffered']
    #allocation13 [shape = 'u8[196608]{0}', space=vmem, size = 0x30000, scoped, tag = 'input window, operand 10, single buffered']
    #allocation14 [shape = 's32[1]{0}', space=sflag, size = 0x4, scoped, tag = 'scoped memory for rnn_attention_decoder.2']
    #allocation15 [shape = 'u8[1536]{0}', space=vmem, size = 0x800, scoped, tag = 'input window, operand 11, single buffered']
    #allocation16 [shape = 'u8[65536]{0}', space=vmem, size = 0x10000, scoped, tag = 'input window, operand 12, single buffered']
    #allocation17 [shape = 's32[1]{0}', space=sflag, size = 0x4, scoped, tag = 'scoped memory for rnn_attention_decoder.2']
    #allocation18 [shape = 'u8[65536]{0}', space=vmem, size = 0x10000, scoped, tag = 'input window, operand 13, single buffered']
    #allocation19 [shape = 'u8[65536]{0}', space=vmem, size = 0x10000, scoped, tag = 'input window, operand 14, single buffered']
    #allocation20 [shape = 's32[1]{0}', space=sflag, size = 0x4, scoped, tag = 'scoped memory for rnn_attention_decoder.2']
    #allocation21 [shape = 'u8[8192]{0}', space=vmem, size = 0x2000, scoped, tag = 'output window, operand 1, single buffered']
    #allocation22 [shape = 'u8[4096]{0}', space=vmem, size = 0x1000, scoped, tag = 'output window, operand 2, single buffered']
    #allocation23 [shape = 's32[1]{0}', space=sflag, size = 0x4, scoped, tag = 'scoped memory for rnn_attention_decoder.2']
    %23 = vsyncpa [#allocation5], 0
    %24 = vsyncpa [#allocation8], 0
    %25 = vsyncpa [#allocation11], 0
    %26 = vsyncpa [#allocation14], 0
    %27 = vsyncpa [#allocation17], 0
    %28 = vsyncpa [#allocation20], 0
    %29 = vsyncpa [#allocation6], 0
    %30 = vsyncpa [#allocation23], 0
    loop: start=0, step=1, limit=4
    $region2: #{rnn_attention_decoder.2} parent=1 // loop_pre_header
      _
    $region3: #{rnn_attention_decoder.2} parent=1 // loop_header
      %s32 = sphi 0, %s36
      %p33 = scmp.ge.s32.totalorder %s32, 4
      %s42 = sphi 0, %s44
      %s45 = sphi 0, %s42
      %s46 = sphi 0, %s45
      %s62 = sphi 0, %s46
      %s66 = sphi 0, %s66
      %s68 = sphi 0, %s66
      %s69 = sphi 0, %s68
      %s83 = sphi 0, %s69
      %s87 = sphi 0, %s87
      %s89 = sphi 0, %s87
      %s90 = sphi 0, %s89
      %s104 = sphi 0, %s90
      %s108 = sphi 0, %s108
      %s110 = sphi 0, %s108
      %s111 = sphi 0, %s110
      %s125 = sphi 0, %s111
      %s129 = sphi 0, %s129
      %s131 = sphi 0, %s129
      %s132 = sphi 0, %s131
      %s146 = sphi 0, %s132
      %s150 = sphi 0, %s150
      %s152 = sphi 0, %s150
      %s153 = sphi 0, %s152
      %s167 = sphi 0, %s153
      %s171 = sphi 0, %s171
      %s173 = sphi 0, %s171
      %s174 = sphi 0, %s173
      %s188 = sphi 0, %s174
      %s192 = sphi 0, %s192
      %s194 = sphi 0, %s192
      %s195 = sphi 0, %s194
      %s209 = sphi 0, %s195
      %s213 = sphi 0, %s213
      %s215 = sphi 0, %s213
      %s216 = sphi 0, %s215
      %s230 = sphi 0, %s216
      %s234 = sphi 0, %s234
      %s236 = sphi 0, %s234
      %s237 = sphi 0, %s236
      %s251 = sphi 0, %s237
      %s255 = sphi 0, %s255
      %s257 = sphi 0, %s255
      %s258 = sphi 0, %s257
      %s272 = sphi 0, %s258
      %s276 = sphi 0, %s276
      %s278 = sphi 0, %s276
      %s279 = sphi 0, %s278
      %s293 = sphi 0, %s279
      %s297 = sphi 0, %s297
      %s299 = sphi 0, %s297
      %s300 = sphi 0, %s299
      %s314 = sphi 0, %s300
      %s318 = sphi 0, %s318
      %s320 = sphi 0, %s318
      %s321 = sphi 0, %s320
      %s335 = sphi 0, %s321
      %s339 = sphi 0, %s339
      %s341 = sphi 0, %s339
      %s342 = sphi 0, %s341
      %s356 = sphi 0, %s342
      %s362 = sphi 0, %s364
      %s365 = sphi 0, %s362
      %s366 = sphi 0, %s365
      %s382 = sphi 0, %s366
      %s386 = sphi 0, %s386
      %s388 = sphi 0, %s386
      %s389 = sphi 0, %s388
      %s403 = sphi 0, %s389
      %s407 = sphi 0, %s407
      %s409 = sphi 0, %s407
      %s410 = sphi 0, %s409
      %s424 = sphi 0, %s410
    $region4: #{rnn_attention_decoder.2} parent=1 // loop_header_branch
      %35 = sbr.rel (%p33) target = $region8
    $region5: #{rnn_attention_decoder.2} parent=1 // loop_body
      %s37 = ssub.s32 %s32, 1
      %s38 = ssub.s32 %s32, 2
      %s39 = sadd.s32 %s32, 1
      %s40 = ssub.s32 %s32, %s39
      %p41 = scmp.eq.s32.totalorder %s40, 0
      %s43 = sadd.s32 %s42, 1
      %s44 = scalar_select %p41, %s42, %s43
      %p47 = pneg %p41
      %p48 = scmp.eq.s32.totalorder %s32, 1
      %p49 = por %p47, %p48
      %p50 = scmp.ne.s32.totalorder %s42, %s45
      %p51 = scmp.eq.s32.totalorder %s32, 0
      %p52 = por %p50, %p51
      %p53 = scmp.ne.s32.totalorder %s42, %s45
      %p54 = scmp.eq.s32.totalorder %s37, 1
      %p55 = por %p53, %p54
      %p56 = scmp.ne.s32.totalorder %s45, %s46
      %p57 = scmp.eq.s32.totalorder %s37, 0
      %p58 = por %p56, %p57
      %p59 = scmp.ne.s32.totalorder %s45, %s46
      %p60 = scmp.eq.s32.totalorder %s38, 1
      %p61 = por %p59, %p60
      %p63 = scmp.ne.s32.totalorder %s46, %s62
      %p64 = scmp.eq.s32.totalorder %s38, 0
      %p65 = por %p63, %p64
      %s67 = sadd.s32 %s66, 1
      %p70 = scmp.eq.s32.totalorder %s32, 1
      %p71 = scmp.ne.s32.totalorder %s66, %s68
      %p72 = scmp.eq.s32.totalorder %s32, 0
      %p73 = por %p71, %p72
      %p74 = scmp.ne.s32.totalorder %s66, %s68
      %p75 = scmp.eq.s32.totalorder %s37, 1
      %p76 = por %p74, %p75
      %p77 = scmp.ne.s32.totalorder %s68, %s69
      %p78 = scmp.eq.s32.totalorder %s37, 0
      %p79 = por %p77, %p78
      %p80 = scmp.ne.s32.totalorder %s68, %s69
      %p81 = scmp.eq.s32.totalorder %s38, 1
      %p82 = por %p80, %p81
      %p84 = scmp.ne.s32.totalorder %s69, %s83
      %p85 = scmp.eq.s32.totalorder %s38, 0
      %p86 = por %p84, %p85
      %s88 = sadd.s32 %s87, 1
      %p91 = scmp.eq.s32.totalorder %s32, 1
      %p92 = scmp.ne.s32.totalorder %s87, %s89
      %p93 = scmp.eq.s32.totalorder %s32, 0
      %p94 = por %p92, %p93
      %p95 = scmp.ne.s32.totalorder %s87, %s89
      %p96 = scmp.eq.s32.totalorder %s37, 1
      %p97 = por %p95, %p96
      %p98 = scmp.ne.s32.totalorder %s89, %s90
      %p99 = scmp.eq.s32.totalorder %s37, 0
      %p100 = por %p98, %p99
      %p101 = scmp.ne.s32.totalorder %s89, %s90
      %p102 = scmp.eq.s32.totalorder %s38, 1
      %p103 = por %p101, %p102
      %p105 = scmp.ne.s32.totalorder %s90, %s104
      %p106 = scmp.eq.s32.totalorder %s38, 0
      %p107 = por %p105, %p106
      %s109 = sadd.s32 %s108, 1
      %p112 = scmp.eq.s32.totalorder %s32, 1
      %p113 = scmp.ne.s32.totalorder %s108, %s110
      %p114 = scmp.eq.s32.totalorder %s32, 0
      %p115 = por %p113, %p114
      %p116 = scmp.ne.s32.totalorder %s108, %s110
      %p117 = scmp.eq.s32.totalorder %s37, 1
      %p118 = por %p116, %p117
      %p119 = scmp.ne.s32.totalorder %s110, %s111
      %p120 = scmp.eq.s32.totalorder %s37, 0
      %p121 = por %p119, %p120
      %p122 = scmp.ne.s32.totalorder %s110, %s111
      %p123 = scmp.eq.s32.totalorder %s38, 1
      %p124 = por %p122, %p123
      %p126 = scmp.ne.s32.totalorder %s111, %s125
      %p127 = scmp.eq.s32.totalorder %s38, 0
      %p128 = por %p126, %p127
      %s130 = sadd.s32 %s129, 1
      %p133 = scmp.eq.s32.totalorder %s32, 1
      %p134 = scmp.ne.s32.totalorder %s129, %s131
      %p135 = scmp.eq.s32.totalorder %s32, 0
      %p136 = por %p134, %p135
      %p137 = scmp.ne.s32.totalorder %s129, %s131
      %p138 = scmp.eq.s32.totalorder %s37, 1
      %p139 = por %p137, %p138
      %p140 = scmp.ne.s32.totalorder %s131, %s132
      %p141 = scmp.eq.s32.totalorder %s37, 0
      %p142 = por %p140, %p141
      %p143 = scmp.ne.s32.totalorder %s131, %s132
      %p144 = scmp.eq.s32.totalorder %s38, 1
      %p145 = por %p143, %p144
      %p147 = scmp.ne.s32.totalorder %s132, %s146
      %p148 = scmp.eq.s32.totalorder %s38, 0
      %p149 = por %p147, %p148
      %s151 = sadd.s32 %s150, 1
      %p154 = scmp.eq.s32.totalorder %s32, 1
      %p155 = scmp.ne.s32.totalorder %s150, %s152
      %p156 = scmp.eq.s32.totalorder %s32, 0
      %p157 = por %p155, %p156
      %p158 = scmp.ne.s32.totalorder %s150, %s152
      %p159 = scmp.eq.s32.totalorder %s37, 1
      %p160 = por %p158, %p159
      %p161 = scmp.ne.s32.totalorder %s152, %s153
      %p162 = scmp.eq.s32.totalorder %s37, 0
      %p163 = por %p161, %p162
      %p164 = scmp.ne.s32.totalorder %s152, %s153
      %p165 = scmp.eq.s32.totalorder %s38, 1
      %p166 = por %p164, %p165
      %p168 = scmp.ne.s32.totalorder %s153, %s167
      %p169 = scmp.eq.s32.totalorder %s38, 0
      %p170 = por %p168, %p169
      %s172 = sadd.s32 %s171, 1
      %p175 = scmp.eq.s32.totalorder %s32, 1
      %p176 = scmp.ne.s32.totalorder %s171, %s173
      %p177 = scmp.eq.s32.totalorder %s32, 0
      %p178 = por %p176, %p177
      %p179 = scmp.ne.s32.totalorder %s171, %s173
      %p180 = scmp.eq.s32.totalorder %s37, 1
      %p181 = por %p179, %p180
      %p182 = scmp.ne.s32.totalorder %s173, %s174
      %p183 = scmp.eq.s32.totalorder %s37, 0
      %p184 = por %p182, %p183
      %p185 = scmp.ne.s32.totalorder %s173, %s174
      %p186 = scmp.eq.s32.totalorder %s38, 1
      %p187 = por %p185, %p186
      %p189 = scmp.ne.s32.totalorder %s174, %s188
      %p190 = scmp.eq.s32.totalorder %s38, 0
      %p191 = por %p189, %p190
      %s193 = sadd.s32 %s192, 1
      %p196 = scmp.eq.s32.totalorder %s32, 1
      %p197 = scmp.ne.s32.totalorder %s192, %s194
      %p198 = scmp.eq.s32.totalorder %s32, 0
      %p199 = por %p197, %p198
      %p200 = scmp.ne.s32.totalorder %s192, %s194
      %p201 = scmp.eq.s32.totalorder %s37, 1
      %p202 = por %p200, %p201
      %p203 = scmp.ne.s32.totalorder %s194, %s195
      %p204 = scmp.eq.s32.totalorder %s37, 0
      %p205 = por %p203, %p204
      %p206 = scmp.ne.s32.totalorder %s194, %s195
      %p207 = scmp.eq.s32.totalorder %s38, 1
      %p208 = por %p206, %p207
      %p210 = scmp.ne.s32.totalorder %s195, %s209
      %p211 = scmp.eq.s32.totalorder %s38, 0
      %p212 = por %p210, %p211
      %s214 = sadd.s32 %s213, 1
      %p217 = scmp.eq.s32.totalorder %s32, 1
      %p218 = scmp.ne.s32.totalorder %s213, %s215
      %p219 = scmp.eq.s32.totalorder %s32, 0
      %p220 = por %p218, %p219
      %p221 = scmp.ne.s32.totalorder %s213, %s215
      %p222 = scmp.eq.s32.totalorder %s37, 1
      %p223 = por %p221, %p222
      %p224 = scmp.ne.s32.totalorder %s215, %s216
      %p225 = scmp.eq.s32.totalorder %s37, 0
      %p226 = por %p224, %p225
      %p227 = scmp.ne.s32.totalorder %s215, %s216
      %p228 = scmp.eq.s32.totalorder %s38, 1
      %p229 = por %p227, %p228
      %p231 = scmp.ne.s32.totalorder %s216, %s230
      %p232 = scmp.eq.s32.totalorder %s38, 0
      %p233 = por %p231, %p232
      %s235 = sadd.s32 %s234, 1
      %p238 = scmp.eq.s32.totalorder %s32, 1
      %p239 = scmp.ne.s32.totalorder %s234, %s236
      %p240 = scmp.eq.s32.totalorder %s32, 0
      %p241 = por %p239, %p240
      %p242 = scmp.ne.s32.totalorder %s234, %s236
      %p243 = scmp.eq.s32.totalorder %s37, 1
      %p244 = por %p242, %p243
      %p245 = scmp.ne.s32.totalorder %s236, %s237
      %p246 = scmp.eq.s32.totalorder %s37, 0
      %p247 = por %p245, %p246
      %p248 = scmp.ne.s32.totalorder %s236, %s237
      %p249 = scmp.eq.s32.totalorder %s38, 1
      %p250 = por %p248, %p249
      %p252 = scmp.ne.s32.totalorder %s237, %s251
      %p253 = scmp.eq.s32.totalorder %s38, 0
      %p254 = por %p252, %p253
      %s256 = sadd.s32 %s255, 1
      %p259 = scmp.eq.s32.totalorder %s32, 1
      %p260 = scmp.ne.s32.totalorder %s255, %s257
      %p261 = scmp.eq.s32.totalorder %s32, 0
      %p262 = por %p260, %p261
      %p263 = scmp.ne.s32.totalorder %s255, %s257
      %p264 = scmp.eq.s32.totalorder %s37, 1
      %p265 = por %p263, %p264
      %p266 = scmp.ne.s32.totalorder %s257, %s258
      %p267 = scmp.eq.s32.totalorder %s37, 0
      %p268 = por %p266, %p267
      %p269 = scmp.ne.s32.totalorder %s257, %s258
      %p270 = scmp.eq.s32.totalorder %s38, 1
      %p271 = por %p269, %p270
      %p273 = scmp.ne.s32.totalorder %s258, %s272
      %p274 = scmp.eq.s32.totalorder %s38, 0
      %p275 = por %p273, %p274
      %s277 = sadd.s32 %s276, 1
      %p280 = scmp.eq.s32.totalorder %s32, 1
      %p281 = scmp.ne.s32.totalorder %s276, %s278
      %p282 = scmp.eq.s32.totalorder %s32, 0
      %p283 = por %p281, %p282
      %p284 = scmp.ne.s32.totalorder %s276, %s278
      %p285 = scmp.eq.s32.totalorder %s37, 1
      %p286 = por %p284, %p285
      %p287 = scmp.ne.s32.totalorder %s278, %s279
      %p288 = scmp.eq.s32.totalorder %s37, 0
      %p289 = por %p287, %p288
      %p290 = scmp.ne.s32.totalorder %s278, %s279
      %p291 = scmp.eq.s32.totalorder %s38, 1
      %p292 = por %p290, %p291
      %p294 = scmp.ne.s32.totalorder %s279, %s293
      %p295 = scmp.eq.s32.totalorder %s38, 0
      %p296 = por %p294, %p295
      %s298 = sadd.s32 %s297, 1
      %p301 = scmp.eq.s32.totalorder %s32, 1
      %p302 = scmp.ne.s32.totalorder %s297, %s299
      %p303 = scmp.eq.s32.totalorder %s32, 0
      %p304 = por %p302, %p303
      %p305 = scmp.ne.s32.totalorder %s297, %s299
      %p306 = scmp.eq.s32.totalorder %s37, 1
      %p307 = por %p305, %p306
      %p308 = scmp.ne.s32.totalorder %s299, %s300
      %p309 = scmp.eq.s32.totalorder %s37, 0
      %p310 = por %p308, %p309
      %p311 = scmp.ne.s32.totalorder %s299, %s300
      %p312 = scmp.eq.s32.totalorder %s38, 1
      %p313 = por %p311, %p312
      %p315 = scmp.ne.s32.totalorder %s300, %s314
      %p316 = scmp.eq.s32.totalorder %s38, 0
      %p317 = por %p315, %p316
      %s319 = sadd.s32 %s318, 1
      %p322 = scmp.eq.s32.totalorder %s32, 1
      %p323 = scmp.ne.s32.totalorder %s318, %s320
      %p324 = scmp.eq.s32.totalorder %s32, 0
      %p325 = por %p323, %p324
      %p326 = scmp.ne.s32.totalorder %s318, %s320
      %p327 = scmp.eq.s32.totalorder %s37, 1
      %p328 = por %p326, %p327
      %p329 = scmp.ne.s32.totalorder %s320, %s321
      %p330 = scmp.eq.s32.totalorder %s37, 0
      %p331 = por %p329, %p330
      %p332 = scmp.ne.s32.totalorder %s320, %s321
      %p333 = scmp.eq.s32.totalorder %s38, 1
      %p334 = por %p332, %p333
      %p336 = scmp.ne.s32.totalorder %s321, %s335
      %p337 = scmp.eq.s32.totalorder %s38, 0
      %p338 = por %p336, %p337
      %s340 = sadd.s32 %s339, 1
      %p343 = scmp.eq.s32.totalorder %s32, 1
      %p344 = scmp.ne.s32.totalorder %s339, %s341
      %p345 = scmp.eq.s32.totalorder %s32, 0
      %p346 = por %p344, %p345
      %p347 = scmp.ne.s32.totalorder %s339, %s341
      %p348 = scmp.eq.s32.totalorder %s37, 1
      %p349 = por %p347, %p348
      %p350 = scmp.ne.s32.totalorder %s341, %s342
      %p351 = scmp.eq.s32.totalorder %s37, 0
      %p352 = por %p350, %p351
      %p353 = scmp.ne.s32.totalorder %s341, %s342
      %p354 = scmp.eq.s32.totalorder %s38, 1
      %p355 = por %p353, %p354
      %p357 = scmp.ne.s32.totalorder %s342, %s356
      %p358 = scmp.eq.s32.totalorder %s38, 0
      %p359 = por %p357, %p358
      %s360 = ssub.s32 %s32, %s39
      %p361 = scmp.eq.s32.totalorder %s360, 0
      %s363 = sadd.s32 %s362, 1
      %s364 = scalar_select %p361, %s362, %s363
      %p367 = pneg %p361
      %p368 = scmp.eq.s32.totalorder %s32, 1
      %p369 = por %p367, %p368
      %p370 = scmp.ne.s32.totalorder %s362, %s365
      %p371 = scmp.eq.s32.totalorder %s32, 0
      %p372 = por %p370, %p371
      %p373 = scmp.ne.s32.totalorder %s362, %s365
      %p374 = scmp.eq.s32.totalorder %s37, 1
      %p375 = por %p373, %p374
      %p376 = scmp.ne.s32.totalorder %s365, %s366
      %p377 = scmp.eq.s32.totalorder %s37, 0
      %p378 = por %p376, %p377
      %p379 = scmp.ne.s32.totalorder %s365, %s366
      %p380 = scmp.eq.s32.totalorder %s38, 1
      %p381 = por %p379, %p380
      %p383 = scmp.ne.s32.totalorder %s366, %s382
      %p384 = scmp.eq.s32.totalorder %s38, 0
      %p385 = por %p383, %p384
      %s387 = sadd.s32 %s386, 1
      %p390 = scmp.eq.s32.totalorder %s32, 1
      %p391 = scmp.ne.s32.totalorder %s386, %s388
      %p392 = scmp.eq.s32.totalorder %s32, 0
      %p393 = por %p391, %p392
      %p394 = scmp.ne.s32.totalorder %s386, %s388
      %p395 = scmp.eq.s32.totalorder %s37, 1
      %p396 = por %p394, %p395
      %p397 = scmp.ne.s32.totalorder %s388, %s389
      %p398 = scmp.eq.s32.totalorder %s37, 0
      %p399 = por %p397, %p398
      %p400 = scmp.ne.s32.totalorder %s388, %s389
      %p401 = scmp.eq.s32.totalorder %s38, 1
      %p402 = por %p400, %p401
      %p404 = scmp.ne.s32.totalorder %s389, %s403
      %p405 = scmp.eq.s32.totalorder %s38, 0
      %p406 = por %p404, %p405
      %s408 = sadd.s32 %s407, 1
      %p411 = scmp.eq.s32.totalorder %s32, 1
      %p412 = scmp.ne.s32.totalorder %s407, %s409
      %p413 = scmp.eq.s32.totalorder %s32, 0
      %p414 = por %p412, %p413
      %p415 = scmp.ne.s32.totalorder %s407, %s409
      %p416 = scmp.eq.s32.totalorder %s37, 1
      %p417 = por %p415, %p416
      %p418 = scmp.ne.s32.totalorder %s409, %s410
      %p419 = scmp.eq.s32.totalorder %s37, 0
      %p420 = por %p418, %p419
      %p421 = scmp.ne.s32.totalorder %s409, %s410
      %p422 = scmp.eq.s32.totalorder %s38, 1
      %p423 = por %p421, %p422
      %p425 = scmp.ne.s32.totalorder %s410, %s424
      %p426 = scmp.eq.s32.totalorder %s38, 0
      %p427 = por %p425, %p426
      %p428 = scmp.le.s32.totalorder 1, %s32
      %p429 = scmp.lt.s32.totalorder %s32, 3
      %p430 = pnand %p428, %p429
      %p431 = pneg %p430
      // Predicated region
      $region9: #{rnn_attention_decoder.2} parent=5 // pred_check
        _
      $region10: #{rnn_attention_decoder.2} parent=5 // pred_check_branch
        %433 = sbr.rel (%p430) target = $region12
      $region11: #{rnn_attention_decoder.2} parent=5 // pred_region
        %s434 = ssub.s32 %s32, 1
        // Predicated region
        $region13: #{rnn_attention_decoder.2} parent=11 // pred_check
          %p435 = pneg %p79
        $region14: #{rnn_attention_decoder.2} parent=11 // pred_check_branch
          %437 = sbr.rel (%p435) target = $region16
        $region15: #{rnn_attention_decoder.2} parent=11 // pred_region
          %439 = vsyncadd [#allocation5], 0
          %s440 = sshll.u32 %s1, 4
          %s441 = int_to_ptr.hbm [resolvable:$true] %s440
          %s442 = sshll.u32 [#allocation4], 4
          %s443 = int_to_ptr.vmem [resolvable:$true] %s442
          %448 = dma.hbm_to_vmem [thread:$0]  %s441, 256, %s443, [#allocation5], 128, 128, 8
        $region16: #{rnn_attention_decoder.2} parent=11 // pred_fallthru
          _
        // Predicated region
        $region17: #{rnn_attention_decoder.2} parent=11 // pred_check
          %p449 = pneg %p100
        $region18: #{rnn_attention_decoder.2} parent=11 // pred_check_branch
          %451 = sbr.rel (%p449) target = $region20
        $region19: #{rnn_attention_decoder.2} parent=11 // pred_region
          %453 = vsyncadd [#allocation8], 0
          %s455 = sshll.u32 %s2, 4
          %s456 = int_to_ptr.hbm [resolvable:$true] %s455
          %s457 = sshll.u32 [#allocation7], 4
          %s458 = int_to_ptr.vmem [resolvable:$true] %s457
          %460 = dma.hbm_to_vmem [thread:$0]  %s456, 128, %s458, [#allocation8]
        $region20: #{rnn_attention_decoder.2} parent=11 // pred_fallthru
          _
        // Predicated region
        $region21: #{rnn_attention_decoder.2} parent=11 // pred_check
          %p461 = pneg %p121
        $region22: #{rnn_attention_decoder.2} parent=11 // pred_check_branch
          %463 = sbr.rel (%p461) target = $region24
        $region23: #{rnn_attention_decoder.2} parent=11 // pred_region
          _
        $region24: #{rnn_attention_decoder.2} parent=11 // pred_fallthru
          _
        // Predicated region
        $region25: #{rnn_attention_decoder.2} parent=11 // pred_check
          %p464 = pneg %p142
        $region26: #{rnn_attention_decoder.2} parent=11 // pred_check_branch
          %466 = sbr.rel (%p464) target = $region28
        $region27: #{rnn_attention_decoder.2} parent=11 // pred_region
          %468 = vsyncadd [#allocation8], 0
          %s470 = sshll.u32 %s4, 4
          %s471 = int_to_ptr.hbm [resolvable:$true] %s470
          %s472 = sshll.u32 [#allocation9], 4
          %s473 = int_to_ptr.vmem [resolvable:$true] %s472
          %475 = dma.hbm_to_vmem [thread:$0]  %s471, 128, %s473, [#allocation8]
        $region28: #{rnn_attention_decoder.2} parent=11 // pred_fallthru
          _
        // Predicated region
        $region29: #{rnn_attention_decoder.2} parent=11 // pred_check
          %p476 = pneg %p163
        $region30: #{rnn_attention_decoder.2} parent=11 // pred_check_branch
          %478 = sbr.rel (%p476) target = $region32
        $region31: #{rnn_attention_decoder.2} parent=11 // pred_region
          _
        $region32: #{rnn_attention_decoder.2} parent=11 // pred_fallthru
          _
        // Predicated region
        $region33: #{rnn_attention_decoder.2} parent=11 // pred_check
          %p479 = pneg %p184
        $region34: #{rnn_attention_decoder.2} parent=11 // pred_check_branch
          %481 = sbr.rel (%p479) target = $region36
        $region35: #{rnn_attention_decoder.2} parent=11 // pred_region
          _
        $region36: #{rnn_attention_decoder.2} parent=11 // pred_fallthru
          _
        // Predicated region
        $region37: #{rnn_attention_decoder.2} parent=11 // pred_check
          %p482 = pneg %p205
        $region38: #{rnn_attention_decoder.2} parent=11 // pred_check_branch
          %484 = sbr.rel (%p482) target = $region40
        $region39: #{rnn_attention_decoder.2} parent=11 // pred_region
          _
        $region40: #{rnn_attention_decoder.2} parent=11 // pred_fallthru
          _
        // Predicated region
        $region41: #{rnn_attention_decoder.2} parent=11 // pred_check
          %p485 = pneg %p226
        $region42: #{rnn_attention_decoder.2} parent=11 // pred_check_branch
          %487 = sbr.rel (%p485) target = $region44
        $region43: #{rnn_attention_decoder.2} parent=11 // pred_region
          %489 = vsyncadd [#allocation11], 0
          %s490 = sshll.u32 %s8, 4
          %s491 = int_to_ptr.hbm [resolvable:$true] %s490
          %s492 = sshll.u32 [#allocation10], 4
          %s493 = int_to_ptr.vmem [resolvable:$true] %s492
          %498 = dma.hbm_to_vmem [thread:$0]  %s491, 6144, %s493, [#allocation11], 384, 384, 24
        $region44: #{rnn_attention_decoder.2} parent=11 // pred_fallthru
          _
        // Predicated region
        $region45: #{rnn_attention_decoder.2} parent=11 // pred_check
          %p499 = pneg %p247
        $region46: #{rnn_attention_decoder.2} parent=11 // pred_check_branch
          %501 = sbr.rel (%p499) target = $region48
        $region47: #{rnn_attention_decoder.2} parent=11 // pred_region
          %503 = vsyncadd [#allocation11], 0
          %s505 = sshll.u32 %s9, 4
          %s506 = int_to_ptr.hbm [resolvable:$true] %s505
          %s507 = sshll.u32 [#allocation12], 4
          %s508 = int_to_ptr.vmem [resolvable:$true] %s507
          %510 = dma.hbm_to_vmem [thread:$0]  %s506, 48, %s508, [#allocation11]
        $region48: #{rnn_attention_decoder.2} parent=11 // pred_fallthru
          _
        // Predicated region
        $region49: #{rnn_attention_decoder.2} parent=11 // pred_check
          %p511 = pneg %p268
        $region50: #{rnn_attention_decoder.2} parent=11 // pred_check_branch
          %513 = sbr.rel (%p511) target = $region52
        $region51: #{rnn_attention_decoder.2} parent=11 // pred_region
          %515 = vsyncadd [#allocation14], 0
          %s516 = sshll.u32 %s10, 4
          %s517 = int_to_ptr.hbm [resolvable:$true] %s516
          %s518 = sshll.u32 [#allocation13], 4
          %s519 = int_to_ptr.vmem [resolvable:$true] %s518
          %524 = dma.hbm_to_vmem [thread:$0]  %s517, 6144, %s519, [#allocation14], 384, 384, 24
        $region52: #{rnn_attention_decoder.2} parent=11 // pred_fallthru
          _
        // Predicated region
        $region53: #{rnn_attention_decoder.2} parent=11 // pred_check
          %p525 = pneg %p289
        $region54: #{rnn_attention_decoder.2} parent=11 // pred_check_branch
          %527 = sbr.rel (%p525) target = $region56
        $region55: #{rnn_attention_decoder.2} parent=11 // pred_region
          %529 = vsyncadd [#allocation14], 0
          %s531 = sshll.u32 %s11, 4
          %s532 = int_to_ptr.hbm [resolvable:$true] %s531
          %s533 = sshll.u32 [#allocation15], 4
          %s534 = int_to_ptr.vmem [resolvable:$true] %s533
          %536 = dma.hbm_to_vmem [thread:$0]  %s532, 48, %s534, [#allocation14]
        $region56: #{rnn_attention_decoder.2} parent=11 // pred_fallthru
          _
        // Predicated region
        $region57: #{rnn_attention_decoder.2} parent=11 // pred_check
          %p537 = pneg %p310
        $region58: #{rnn_attention_decoder.2} parent=11 // pred_check_branch
          %539 = sbr.rel (%p537) target = $region60
        $region59: #{rnn_attention_decoder.2} parent=11 // pred_region
          %541 = vsyncadd [#allocation17], 0
          %s542 = sshll.u32 %s12, 4
          %s543 = int_to_ptr.hbm [resolvable:$true] %s542
          %s544 = sshll.u32 [#allocation16], 4
          %s545 = int_to_ptr.vmem [resolvable:$true] %s544
          %550 = dma.hbm_to_vmem [thread:$0]  %s543, 2048, %s545, [#allocation17], 128, 128, 8
        $region60: #{rnn_attention_decoder.2} parent=11 // pred_fallthru
          _
        // Predicated region
        $region61: #{rnn_attention_decoder.2} parent=11 // pred_check
          %p551 = pneg %p331
        $region62: #{rnn_attention_decoder.2} parent=11 // pred_check_branch
          %553 = sbr.rel (%p551) target = $region64
        $region63: #{rnn_attention_decoder.2} parent=11 // pred_region
          %555 = vsyncadd [#allocation17], 0
          %s556 = sshll.u32 %s13, 4
          %s557 = int_to_ptr.hbm [resolvable:$true] %s556
          %s558 = sshll.u32 [#allocation18], 4
          %s559 = int_to_ptr.vmem [resolvable:$true] %s558
          %564 = dma.hbm_to_vmem [thread:$0]  %s557, 2048, %s559, [#allocation17], 128, 128, 8
        $region64: #{rnn_attention_decoder.2} parent=11 // pred_fallthru
          _
        // Predicated region
        $region65: #{rnn_attention_decoder.2} parent=11 // pred_check
          %p565 = pneg %p352
        $region66: #{rnn_attention_decoder.2} parent=11 // pred_check_branch
          %567 = sbr.rel (%p565) target = $region68
        $region67: #{rnn_attention_decoder.2} parent=11 // pred_region
          %569 = vsyncadd [#allocation20], 0
          %s570 = sshll.u32 %s14, 4
          %s571 = int_to_ptr.hbm [resolvable:$true] %s570
          %s572 = sshll.u32 [#allocation19], 4
          %s573 = int_to_ptr.vmem [resolvable:$true] %s572
          %578 = dma.hbm_to_vmem [thread:$0]  %s571, 2048, %s573, [#allocation20], 128, 128, 8
        $region68: #{rnn_attention_decoder.2} parent=11 // pred_fallthru
          _
      $region12: #{rnn_attention_decoder.2} parent=5 // pred_fallthru
        _
      %p579 = scmp.lt.s32.totalorder %s32, 2
      // Predicated region
      $region69: #{rnn_attention_decoder.2} parent=5 // pred_check
        %p580 = pneg %p579
      $region70: #{rnn_attention_decoder.2} parent=5 // pred_check_branch
        %582 = sbr.rel (%p580) target = $region72
      $region71: #{rnn_attention_decoder.2} parent=5 // pred_region
        // Predicated region
        $region73: #{rnn_attention_decoder.2} parent=71 // pred_check
          %p583 = pneg %p52
        $region74: #{rnn_attention_decoder.2} parent=71 // pred_check_branch
          %585 = sbr.rel (%p583) target = $region76
        $region75: #{rnn_attention_decoder.2} parent=71 // pred_region
          %s586 = smul.u32 3, %s32
          %p587 = scmp.lt.s32.totalorder %s586, 5
          %s588 = scalar_select %p587, %s586, 5
          %s589 = smul.addr %s588, 3
          %s590 = smul.addr %s589, 8
          %s591 = scalar_lea.vmem %s0, %s590
          %s592 = smul.u32 3, %s32
        $region76: #{rnn_attention_decoder.2} parent=71 // pred_fallthru
          _
      $region72: #{rnn_attention_decoder.2} parent=5 // pred_fallthru
        _
      %p593 = scmp.le.s32.totalorder 1, %s32
      %p594 = scmp.lt.s32.totalorder %s32, 3
      %p595 = pnand %p593, %p594
      %p596 = pneg %p595
      // Predicated region
      $region77: #{rnn_attention_decoder.2} parent=5 // pred_check
        _
      $region78: #{rnn_attention_decoder.2} parent=5 // pred_check_branch
        %598 = sbr.rel (%p595) target = $region80
      $region79: #{rnn_attention_decoder.2} parent=5 // pred_region
        %s599 = ssub.s32 %s32, 1
        // Predicated region
        $region81: #{rnn_attention_decoder.2} parent=79 // pred_check
          %p600 = pneg %p79
        $region82: #{rnn_attention_decoder.2} parent=79 // pred_check_branch
          %602 = sbr.rel (%p600) target = $region84
        $region83: #{rnn_attention_decoder.2} parent=79 // pred_region
          %604 = dma.done [#allocation5], 256
        $region84: #{rnn_attention_decoder.2} parent=79 // pred_fallthru
          _
        // Predicated region
        $region85: #{rnn_attention_decoder.2} parent=79 // pred_check
          %p605 = pneg %p100
        $region86: #{rnn_attention_decoder.2} parent=79 // pred_check_branch
          %607 = sbr.rel (%p605) target = $region88
        $region87: #{rnn_attention_decoder.2} parent=79 // pred_region
          %609 = dma.done [#allocation8], 128
        $region88: #{rnn_attention_decoder.2} parent=79 // pred_fallthru
          _
        // Predicated region
        $region89: #{rnn_attention_decoder.2} parent=79 // pred_check
          %p610 = pneg %p142
        $region90: #{rnn_attention_decoder.2} parent=79 // pred_check_branch
          %612 = sbr.rel (%p610) target = $region92
        $region91: #{rnn_attention_decoder.2} parent=79 // pred_region
          %614 = dma.done [#allocation8], 128
        $region92: #{rnn_attention_decoder.2} parent=79 // pred_fallthru
          _
        // Predicated region
        $region93: #{rnn_attention_decoder.2} parent=79 // pred_check
          %p615 = pneg %p226
        $region94: #{rnn_attention_decoder.2} parent=79 // pred_check_branch
          %617 = sbr.rel (%p615) target = $region96
        $region95: #{rnn_attention_decoder.2} parent=79 // pred_region
          %619 = dma.done [#allocation11], 6144
        $region96: #{rnn_attention_decoder.2} parent=79 // pred_fallthru
          _
        // Predicated region
        $region97: #{rnn_attention_decoder.2} parent=79 // pred_check
          %p620 = pneg %p247
        $region98: #{rnn_attention_decoder.2} parent=79 // pred_check_branch
          %622 = sbr.rel (%p620) target = $region100
        $region99: #{rnn_attention_decoder.2} parent=79 // pred_region
          %624 = dma.done [#allocation11], 48
        $region100: #{rnn_attention_decoder.2} parent=79 // pred_fallthru
          _
        // Predicated region
        $region101: #{rnn_attention_decoder.2} parent=79 // pred_check
          %p625 = pneg %p268
        $region102: #{rnn_attention_decoder.2} parent=79 // pred_check_branch
          %627 = sbr.rel (%p625) target = $region104
        $region103: #{rnn_attention_decoder.2} parent=79 // pred_region
          %629 = dma.done [#allocation14], 6144
        $region104: #{rnn_attention_decoder.2} parent=79 // pred_fallthru
          _
        // Predicated region
        $region105: #{rnn_attention_decoder.2} parent=79 // pred_check
          %p630 = pneg %p289
        $region106: #{rnn_attention_decoder.2} parent=79 // pred_check_branch
          %632 = sbr.rel (%p630) target = $region108
        $region107: #{rnn_attention_decoder.2} parent=79 // pred_region
          %634 = dma.done [#allocation14], 48
        $region108: #{rnn_attention_decoder.2} parent=79 // pred_fallthru
          _
        // Predicated region
        $region109: #{rnn_attention_decoder.2} parent=79 // pred_check
          %p635 = pneg %p310
        $region110: #{rnn_attention_decoder.2} parent=79 // pred_check_branch
          %637 = sbr.rel (%p635) target = $region112
        $region111: #{rnn_attention_decoder.2} parent=79 // pred_region
          %639 = dma.done [#allocation17], 2048
        $region112: #{rnn_attention_decoder.2} parent=79 // pred_fallthru
          _
        // Predicated region
        $region113: #{rnn_attention_decoder.2} parent=79 // pred_check
          %p640 = pneg %p331
        $region114: #{rnn_attention_decoder.2} parent=79 // pred_check_branch
          %642 = sbr.rel (%p640) target = $region116
        $region115: #{rnn_attention_decoder.2} parent=79 // pred_region
          %644 = dma.done [#allocation17], 2048
        $region116: #{rnn_attention_decoder.2} parent=79 // pred_fallthru
          _
        // Predicated region
        $region117: #{rnn_attention_decoder.2} parent=79 // pred_check
          %p645 = pneg %p352
        $region118: #{rnn_attention_decoder.2} parent=79 // pred_check_branch
          %647 = sbr.rel (%p645) target = $region120
        $region119: #{rnn_attention_decoder.2} parent=79 // pred_region
          %649 = dma.done [#allocation20], 2048
        $region120: #{rnn_attention_decoder.2} parent=79 // pred_fallthru
          _
        %s650 = smul.u32 3, %s37
        %p651 = scmp.lt.s32.totalorder %s650, 5
        %s652 = scalar_select %p651, %s650, 5
        %s653 = smul.addr %s652, 3
        %s654 = smul.addr %s653, 8
        %s655 = scalar_lea.vmem %s0, %s654
        %p656 = pneg %p58
        %p657 = pneg %p55
        %p658 = pneg %p79
        %p659 = pneg %p76
        %p660 = pneg %p100
        %p661 = pneg %p97
        %p662 = pneg %p121
        %p663 = pneg %p118
        %p664 = pneg %p142
        %p665 = pneg %p139
        %p666 = pneg %p163
        %p667 = pneg %p160
        %p668 = pneg %p184
        %p669 = pneg %p181
        %p670 = pneg %p205
        %p671 = pneg %p202
        %p672 = pneg %p226
        %p673 = pneg %p223
        %p674 = pneg %p247
        %p675 = pneg %p244
        %p676 = pneg %p268
        %p677 = pneg %p265
        %p678 = pneg %p289
        %p679 = pneg %p286
        %p680 = pneg %p310
        %p681 = pneg %p307
        %p682 = pneg %p331
        %p683 = pneg %p328
        %p684 = pneg %p352
        %p685 = pneg %p349
        %p686 = pneg %p378
        %p687 = pneg %p375
        %s688 = smul.u32 3, %s37
        %p689 = scmp.lt.s32.totalorder %s688, 5
        %s690 = scalar_select %p689, %s688, 5
        %s691 = smul.addr %s690, 8
        %s692 = scalar_lea.vmem %s15, %s691
        %p693 = pneg %p399
        %p694 = pneg %p396
        %p695 = pneg %p420
        %p696 = pneg %p417
        %s697 = smul.u32 3, %s37
        %p698 = scmp.lt.s32.totalorder %s697, 5
        %s699 = scalar_select %p698, %s697, 5
        %s700 = smul.addr %s699, 3
        %s701 = smul.addr %s700, 8
        %s702 = scalar_lea.vmem %s0, %s701
        %s703 = smul.u32 3, %s37
        %s704 = smul.u32 3, %s37
        %p705 = scmp.lt.s32.totalorder %s704, 5
        %s706 = scalar_select %p705, %s704, 5
        %s707 = smul.addr %s706, 8
        %s708 = scalar_lea.vmem %s15, %s707
        %s709 = smul.u32 3, %s37
        %p710 = scmp.eq.s32.totalorder %s37, 0
        // Predicated region
        $region121: #{rnn_attention_decoder.2} parent=79 // pred_check
          %p711 = pneg %p710
        $region122: #{rnn_attention_decoder.2} parent=79 // pred_check_branch
          %713 = sbr.rel (%p711) target = $region124
        $region123: #{rnn_attention_decoder.2} parent=79 // pred_region
          %v714 = vld [vmem:[#allocation4] sm:$0xff]
          %v715 = vld [vmem:[#allocation4 + $0x8] sm:$0xff]
          %716 = vst [vmem:[#allocation2] sm:$0xff] %v714
          %717 = vst [vmem:[#allocation2 + $0x8] sm:$0xff] %v715
          %v718 = vld [vmem:[#allocation7] sm:$0xff]
          %719 = vst [vmem:[#allocation3] sm:$0xff] %v718
        $region124: #{rnn_attention_decoder.2} parent=79 // pred_fallthru
          _
        %v720 = vld [vmem:[%s5] sm:$0xff]
        %v721 = vld [vmem:[%s5 + $0x8] sm:$0xff]
        %v722 = vld [vmem:[%s5 + $0x10] sm:$0xff]
        %v723 = vld [vmem:[%s5 + $0x18] sm:$0xff]
        %v724 = vld [vmem:[%s5 + $0x20] sm:$0xff]
        %v725 = vld [vmem:[%s5 + $0x28] sm:$0xff]
        %v726 = vld [vmem:[%s5 + $0x30] sm:$0xff]
        %v727 = vld [vmem:[%s5 + $0x38] sm:$0xff]
        %v728 = vld [vmem:[%s5 + $0x40] sm:$0xff]
        %v729 = vld [vmem:[%s5 + $0x48] sm:$0xff]
        %v730 = vld [vmem:[%s5 + $0x50] sm:$0xff]
        %v731 = vld [vmem:[%s5 + $0x58] sm:$0xff]
        %v732 = vld [vmem:[%s5 + $0x60] sm:$0xff]
        %v733 = vld [vmem:[%s5 + $0x68] sm:$0xff]
        %v734 = vld [vmem:[%s5 + $0x70] sm:$0xff]
        %v735 = vld [vmem:[%s5 + $0x78] sm:$0xff]
        %v736 = vld [vmem:[%s5 + $0x80] sm:$0xff]
        %v737 = vld [vmem:[%s5 + $0x88] sm:$0xff]
        %v738 = vld [vmem:[%s5 + $0x90] sm:$0xff]
        %v739 = vld [vmem:[%s5 + $0x98] sm:$0xff]
        %v740 = vld [vmem:[%s5 + $0xa0] sm:$0xff]
        %v741 = vld [vmem:[%s5 + $0xa8] sm:$0xff]
        %v742 = vld [vmem:[%s5 + $0xb0] sm:$0xff]
        %v743 = vld [vmem:[%s5 + $0xb8] sm:$0xff]
        %v744 = vld [vmem:[%s5 + $0xc0] sm:$0xff]
        %v745 = vld [vmem:[%s5 + $0xc8] sm:$0xff]
        %v746 = vld [vmem:[%s5 + $0xd0] sm:$0xff]
        %v747 = vld [vmem:[%s5 + $0xd8] sm:$0xff]
        %v748 = vld [vmem:[%s5 + $0xe0] sm:$0xff]
        %v749 = vld [vmem:[%s5 + $0xe8] sm:$0xff]
        %v750 = vld [vmem:[%s5 + $0xf0] sm:$0xff]
        %v751 = vld [vmem:[%s5 + $0xf8] sm:$0xff]
        %v752 = vld [vmem:[%s5 + $0x100] sm:$0xff]
        %v753 = vld [vmem:[%s5 + $0x108] sm:$0xff]
        %v754 = vld [vmem:[%s5 + $0x110] sm:$0xff]
        %v755 = vld [vmem:[%s5 + $0x118] sm:$0xff]
        %v756 = vld [vmem:[%s5 + $0x120] sm:$0xff]
        %v757 = vld [vmem:[%s5 + $0x128] sm:$0xff]
        %v758 = vld [vmem:[%s5 + $0x130] sm:$0xff]
        %v759 = vld [vmem:[%s5 + $0x138] sm:$0xff]
        %v760 = vld [vmem:[%s5 + $0x140] sm:$0xff]
        %v761 = vld [vmem:[%s5 + $0x148] sm:$0xff]
        %v762 = vld [vmem:[%s5 + $0x150] sm:$0xff]
        %v763 = vld [vmem:[%s5 + $0x158] sm:$0xff]
        %v764 = vld [vmem:[%s5 + $0x160] sm:$0xff]
        %v765 = vld [vmem:[%s5 + $0x168] sm:$0xff]
        %v766 = vld [vmem:[%s5 + $0x170] sm:$0xff]
        %v767 = vld [vmem:[%s5 + $0x178] sm:$0xff]
        %v768 = vld [vmem:[%s6] sm:$0xff]
        %v769 = vld [vmem:[%s6 + $0x8] sm:$0xff]
        %v770 = vld [vmem:[%s6 + $0x10] sm:$0xff]
        %v771 = vld [vmem:[%s6 + $0x18] sm:$0xff]
        %v772 = vld [vmem:[%s6 + $0x20] sm:$0xff]
        %v773 = vld [vmem:[%s6 + $0x28] sm:$0xff]
        %v774 = vld [vmem:[%s6 + $0x30] sm:$0xff]
        %v775 = vld [vmem:[%s6 + $0x38] sm:$0xff]
        %v776 = vld [vmem:[%s6 + $0x40] sm:$0xff]
        %v777 = vld [vmem:[%s6 + $0x48] sm:$0xff]
        %v778 = vld [vmem:[%s6 + $0x50] sm:$0xff]
        %v779 = vld [vmem:[%s6 + $0x58] sm:$0xff]
        %v780 = vld [vmem:[%s6 + $0x60] sm:$0xff]
        %v781 = vld [vmem:[%s6 + $0x68] sm:$0xff]
        %v782 = vld [vmem:[%s6 + $0x70] sm:$0xff]
        %v783 = vld [vmem:[%s6 + $0x78] sm:$0xff]
        %v784 = vld [vmem:[%s6 + $0x80] sm:$0xff]
        %v785 = vld [vmem:[%s6 + $0x88] sm:$0xff]
        %v786 = vld [vmem:[%s6 + $0x90] sm:$0xff]
        %v787 = vld [vmem:[%s6 + $0x98] sm:$0xff]
        %v788 = vld [vmem:[%s6 + $0xa0] sm:$0xff]
        %v789 = vld [vmem:[%s6 + $0xa8] sm:$0xff]
        %v790 = vld [vmem:[%s6 + $0xb0] sm:$0xff]
        %v791 = vld [vmem:[%s6 + $0xb8] sm:$0xff]
        %v792 = vld [vmem:[%s6 + $0xc0] sm:$0xff]
        %v793 = vld [vmem:[%s6 + $0xc8] sm:$0xff]
        %v794 = vld [vmem:[%s6 + $0xd0] sm:$0xff]
        %v795 = vld [vmem:[%s6 + $0xd8] sm:$0xff]
        %v796 = vld [vmem:[%s6 + $0xe0] sm:$0xff]
        %v797 = vld [vmem:[%s6 + $0xe8] sm:$0xff]
        %v798 = vld [vmem:[%s6 + $0xf0] sm:$0xff]
        %v799 = vld [vmem:[%s6 + $0xf8] sm:$0xff]
        %v800 = vld [vmem:[%s6 + $0x100] sm:$0xff]
        %v801 = vld [vmem:[%s6 + $0x108] sm:$0xff]
        %v802 = vld [vmem:[%s6 + $0x110] sm:$0xff]
        %v803 = vld [vmem:[%s6 + $0x118] sm:$0xff]
        %v804 = vld [vmem:[%s6 + $0x120] sm:$0xff]
        %v805 = vld [vmem:[%s6 + $0x128] sm:$0xff]
        %v806 = vld [vmem:[%s6 + $0x130] sm:$0xff]
        %v807 = vld [vmem:[%s6 + $0x138] sm:$0xff]
        %v808 = vld [vmem:[%s6 + $0x140] sm:$0xff]
        %v809 = vld [vmem:[%s6 + $0x148] sm:$0xff]
        %v810 = vld [vmem:[%s6 + $0x150] sm:$0xff]
        %v811 = vld [vmem:[%s6 + $0x158] sm:$0xff]
        %v812 = vld [vmem:[%s6 + $0x160] sm:$0xff]
        %v813 = vld [vmem:[%s6 + $0x168] sm:$0xff]
        %v814 = vld [vmem:[%s6 + $0x170] sm:$0xff]
        %v815 = vld [vmem:[%s6 + $0x178] sm:$0xff]
        %v816 = vld [vmem:[%s7] sm:$0x7]
        %v817 = vld [vmem:[#allocation10] sm:$0xff]
        %v818 = vld [vmem:[#allocation10 + $0x8] sm:$0xff]
        %v819 = vld [vmem:[#allocation10 + $0x10] sm:$0xff]
        %v820 = vld [vmem:[#allocation10 + $0x18] sm:$0xff]
        %v821 = vld [vmem:[#allocation10 + $0x20] sm:$0xff]
        %v822 = vld [vmem:[#allocation10 + $0x28] sm:$0xff]
        %v823 = vld [vmem:[#allocation10 + $0x30] sm:$0xff]
        %v824 = vld [vmem:[#allocation10 + $0x38] sm:$0xff]
        %v825 = vld [vmem:[#allocation10 + $0x40] sm:$0xff]
        %v826 = vld [vmem:[#allocation10 + $0x48] sm:$0xff]
        %v827 = vld [vmem:[#allocation10 + $0x50] sm:$0xff]
        %v828 = vld [vmem:[#allocation10 + $0x58] sm:$0xff]
        %v829 = vld [vmem:[#allocation10 + $0x60] sm:$0xff]
        %v830 = vld [vmem:[#allocation10 + $0x68] sm:$0xff]
        %v831 = vld [vmem:[#allocation10 + $0x70] sm:$0xff]
        %v832 = vld [vmem:[#allocation10 + $0x78] sm:$0xff]
        %v833 = vld [vmem:[#allocation10 + $0x80] sm:$0xff]
        %v834 = vld [vmem:[#allocation10 + $0x88] sm:$0xff]
        %v835 = vld [vmem:[#allocation10 + $0x90] sm:$0xff]
        %v836 = vld [vmem:[#allocation10 + $0x98] sm:$0xff]
        %v837 = vld [vmem:[#allocation10 + $0xa0] sm:$0xff]
        %v838 = vld [vmem:[#allocation10 + $0xa8] sm:$0xff]
        %v839 = vld [vmem:[#allocation10 + $0xb0] sm:$0xff]
        %v840 = vld [vmem:[#allocation10 + $0xb8] sm:$0xff]
        %v841 = vld [vmem:[#allocation10 + $0xc0] sm:$0xff]
        %v842 = vld [vmem:[#allocation10 + $0xc8] sm:$0xff]
        %v843 = vld [vmem:[#allocation10 + $0xd0] sm:$0xff]
        %v844 = vld [vmem:[#allocation10 + $0xd8] sm:$0xff]
        %v845 = vld [vmem:[#allocation10 + $0xe0] sm:$0xff]
        %v846 = vld [vmem:[#allocation10 + $0xe8] sm:$0xff]
        %v847 = vld [vmem:[#allocation10 + $0xf0] sm:$0xff]
        %v848 = vld [vmem:[#allocation10 + $0xf8] sm:$0xff]
        %v849 = vld [vmem:[#allocation10 + $0x100] sm:$0xff]
        %v850 = vld [vmem:[#allocation10 + $0x108] sm:$0xff]
        %v851 = vld [vmem:[#allocation10 + $0x110] sm:$0xff]
        %v852 = vld [vmem:[#allocation10 + $0x118] sm:$0xff]
        %v853 = vld [vmem:[#allocation10 + $0x120] sm:$0xff]
        %v854 = vld [vmem:[#allocation10 + $0x128] sm:$0xff]
        %v855 = vld [vmem:[#allocation10 + $0x130] sm:$0xff]
        %v856 = vld [vmem:[#allocation10 + $0x138] sm:$0xff]
        %v857 = vld [vmem:[#allocation10 + $0x140] sm:$0xff]
        %v858 = vld [vmem:[#allocation10 + $0x148] sm:$0xff]
        %v859 = vld [vmem:[#allocation10 + $0x150] sm:$0xff]
        %v860 = vld [vmem:[#allocation10 + $0x158] sm:$0xff]
        %v861 = vld [vmem:[#allocation10 + $0x160] sm:$0xff]
        %v862 = vld [vmem:[#allocation10 + $0x168] sm:$0xff]
        %v863 = vld [vmem:[#allocation10 + $0x170] sm:$0xff]
        %v864 = vld [vmem:[#allocation10 + $0x178] sm:$0xff]
        %v865 = vld [vmem:[#allocation12] sm:$0x7]
        %v866 = vld [vmem:[#allocation13] sm:$0xff]
        %v867 = vld [vmem:[#allocation13 + $0x8] sm:$0xff]
        %v868 = vld [vmem:[#allocation13 + $0x10] sm:$0xff]
        %v869 = vld [vmem:[#allocation13 + $0x18] sm:$0xff]
        %v870 = vld [vmem:[#allocation13 + $0x20] sm:$0xff]
        %v871 = vld [vmem:[#allocation13 + $0x28] sm:$0xff]
        %v872 = vld [vmem:[#allocation13 + $0x30] sm:$0xff]
        %v873 = vld [vmem:[#allocation13 + $0x38] sm:$0xff]
        %v874 = vld [vmem:[#allocation13 + $0x40] sm:$0xff]
        %v875 = vld [vmem:[#allocation13 + $0x48] sm:$0xff]
        %v876 = vld [vmem:[#allocation13 + $0x50] sm:$0xff]
        %v877 = vld [vmem:[#allocation13 + $0x58] sm:$0xff]
        %v878 = vld [vmem:[#allocation13 + $0x60] sm:$0xff]
        %v879 = vld [vmem:[#allocation13 + $0x68] sm:$0xff]
        %v880 = vld [vmem:[#allocation13 + $0x70] sm:$0xff]
        %v881 = vld [vmem:[#allocation13 + $0x78] sm:$0xff]
        %v882 = vld [vmem:[#allocation13 + $0x80] sm:$0xff]
        %v883 = vld [vmem:[#allocation13 + $0x88] sm:$0xff]
        %v884 = vld [vmem:[#allocation13 + $0x90] sm:$0xff]
        %v885 = vld [vmem:[#allocation13 + $0x98] sm:$0xff]
        %v886 = vld [vmem:[#allocation13 + $0xa0] sm:$0xff]
        %v887 = vld [vmem:[#allocation13 + $0xa8] sm:$0xff]
        %v888 = vld [vmem:[#allocation13 + $0xb0] sm:$0xff]
        %v889 = vld [vmem:[#allocation13 + $0xb8] sm:$0xff]
        %v890 = vld [vmem:[#allocation13 + $0xc0] sm:$0xff]
        %v891 = vld [vmem:[#allocation13 + $0xc8] sm:$0xff]
        %v892 = vld [vmem:[#allocation13 + $0xd0] sm:$0xff]
        %v893 = vld [vmem:[#allocation13 + $0xd8] sm:$0xff]
        %v894 = vld [vmem:[#allocation13 + $0xe0] sm:$0xff]
        %v895 = vld [vmem:[#allocation13 + $0xe8] sm:$0xff]
        %v896 = vld [vmem:[#allocation13 + $0xf0] sm:$0xff]
        %v897 = vld [vmem:[#allocation13 + $0xf8] sm:$0xff]
        %v898 = vld [vmem:[#allocation13 + $0x100] sm:$0xff]
        %v899 = vld [vmem:[#allocation13 + $0x108] sm:$0xff]
        %v900 = vld [vmem:[#allocation13 + $0x110] sm:$0xff]
        %v901 = vld [vmem:[#allocation13 + $0x118] sm:$0xff]
        %v902 = vld [vmem:[#allocation13 + $0x120] sm:$0xff]
        %v903 = vld [vmem:[#allocation13 + $0x128] sm:$0xff]
        %v904 = vld [vmem:[#allocation13 + $0x130] sm:$0xff]
        %v905 = vld [vmem:[#allocation13 + $0x138] sm:$0xff]
        %v906 = vld [vmem:[#allocation13 + $0x140] sm:$0xff]
        %v907 = vld [vmem:[#allocation13 + $0x148] sm:$0xff]
        %v908 = vld [vmem:[#allocation13 + $0x150] sm:$0xff]
        %v909 = vld [vmem:[#allocation13 + $0x158] sm:$0xff]
        %v910 = vld [vmem:[#allocation13 + $0x160] sm:$0xff]
        %v911 = vld [vmem:[#allocation13 + $0x168] sm:$0xff]
        %v912 = vld [vmem:[#allocation13 + $0x170] sm:$0xff]
        %v913 = vld [vmem:[#allocation13 + $0x178] sm:$0xff]
        %v914 = vld [vmem:[#allocation15] sm:$0x7]
        %v915 = vld [vmem:[#allocation16] sm:$0xff]
        %v916 = vld [vmem:[#allocation16 + $0x8] sm:$0xff]
        %v917 = vld [vmem:[#allocation16 + $0x10] sm:$0xff]
        %v918 = vld [vmem:[#allocation16 + $0x18] sm:$0xff]
        %v919 = vld [vmem:[#allocation16 + $0x20] sm:$0xff]
        %v920 = vld [vmem:[#allocation16 + $0x28] sm:$0xff]
        %v921 = vld [vmem:[#allocation16 + $0x30] sm:$0xff]
        %v922 = vld [vmem:[#allocation16 + $0x38] sm:$0xff]
        %v923 = vld [vmem:[#allocation16 + $0x40] sm:$0xff]
        %v924 = vld [vmem:[#allocation16 + $0x48] sm:$0xff]
        %v925 = vld [vmem:[#allocation16 + $0x50] sm:$0xff]
        %v926 = vld [vmem:[#allocation16 + $0x58] sm:$0xff]
        %v927 = vld [vmem:[#allocation16 + $0x60] sm:$0xff]
        %v928 = vld [vmem:[#allocation16 + $0x68] sm:$0xff]
        %v929 = vld [vmem:[#allocation16 + $0x70] sm:$0xff]
        %v930 = vld [vmem:[#allocation16 + $0x78] sm:$0xff]
        %v931 = vld [vmem:[#allocation18] sm:$0xff]
        %v932 = vld [vmem:[#allocation18 + $0x8] sm:$0xff]
        %v933 = vld [vmem:[#allocation18 + $0x10] sm:$0xff]
        %v934 = vld [vmem:[#allocation18 + $0x18] sm:$0xff]
        %v935 = vld [vmem:[#allocation18 + $0x20] sm:$0xff]
        %v936 = vld [vmem:[#allocation18 + $0x28] sm:$0xff]
        %v937 = vld [vmem:[#allocation18 + $0x30] sm:$0xff]
        %v938 = vld [vmem:[#allocation18 + $0x38] sm:$0xff]
        %v939 = vld [vmem:[#allocation18 + $0x40] sm:$0xff]
        %v940 = vld [vmem:[#allocation18 + $0x48] sm:$0xff]
        %v941 = vld [vmem:[#allocation18 + $0x50] sm:$0xff]
        %v942 = vld [vmem:[#allocation18 + $0x58] sm:$0xff]
        %v943 = vld [vmem:[#allocation18 + $0x60] sm:$0xff]
        %v944 = vld [vmem:[#allocation18 + $0x68] sm:$0xff]
        %v945 = vld [vmem:[#allocation18 + $0x70] sm:$0xff]
        %v946 = vld [vmem:[#allocation18 + $0x78] sm:$0xff]
        %v947 = vld [vmem:[#allocation19] sm:$0xff]
        %v948 = vld [vmem:[#allocation19 + $0x8] sm:$0xff]
        %v949 = vld [vmem:[#allocation19 + $0x10] sm:$0xff]
        %v950 = vld [vmem:[#allocation19 + $0x18] sm:$0xff]
        %v951 = vld [vmem:[#allocation19 + $0x20] sm:$0xff]
        %v952 = vld [vmem:[#allocation19 + $0x28] sm:$0xff]
        %v953 = vld [vmem:[#allocation19 + $0x30] sm:$0xff]
        %v954 = vld [vmem:[#allocation19 + $0x38] sm:$0xff]
        %v955 = vld [vmem:[#allocation19 + $0x40] sm:$0xff]
        %v956 = vld [vmem:[#allocation19 + $0x48] sm:$0xff]
        %v957 = vld [vmem:[#allocation19 + $0x50] sm:$0xff]
        %v958 = vld [vmem:[#allocation19 + $0x58] sm:$0xff]
        %v959 = vld [vmem:[#allocation19 + $0x60] sm:$0xff]
        %v960 = vld [vmem:[#allocation19 + $0x68] sm:$0xff]
        %v961 = vld [vmem:[#allocation19 + $0x70] sm:$0xff]
        %v962 = vld [vmem:[#allocation19 + $0x78] sm:$0xff]
        %v963 = vld [vmem:[%s3] sm:$0xff]
        %v964 = vld [vmem:[%s3 + $0x8] sm:$0xff]
        %v965 = vld [vmem:[%s3 + $0x10] sm:$0xff]
        %v966 = vld [vmem:[%s3 + $0x18] sm:$0xff]
        %v967 = vld [vmem:[%s3 + $0x20] sm:$0xff]
        %v968 = vld [vmem:[%s3 + $0x28] sm:$0xff]
        %v969 = vld [vmem:[%s3 + $0x30] sm:$0xff]
        %v970 = vld [vmem:[%s3 + $0x38] sm:$0xff]
        %v971 = vld [vmem:[%s3 + $0x40] sm:$0xff]
        %v972 = vld [vmem:[%s3 + $0x48] sm:$0xff]
        %v973 = vld [vmem:[%s3 + $0x50] sm:$0xff]
        %v974 = vld [vmem:[%s3 + $0x58] sm:$0xff]
        %v975 = vld [vmem:[%s3 + $0x60] sm:$0xff]
        %v976 = vld [vmem:[%s3 + $0x68] sm:$0xff]
        %v977 = vld [vmem:[%s3 + $0x70] sm:$0xff]
        %v978 = vld [vmem:[%s3 + $0x78] sm:$0xff]
        %v979 = vld [vmem:[#allocation9] sm:$0xff]
        %v980 = vld [vmem:[#allocation2] sm:$0xff]
        %s981 = scalar_lea.vmem [#allocation2], 8
        %v982 = vld [vmem:[%s981] sm:$0xff]
        %v983 = vld [vmem:[#allocation3] sm:$0xff]
        %v984 = vld [vmem:[%s702] sm:$0xff]
        %v985 = vld [vmem:[%s702 + $0x8] sm:$0xff]
        %v986 = vld [vmem:[%s702 + $0x10] sm:$0xff]
        %987 = vmatpush.msra.mxu0 %v765
        %988 = vmatpush.msra.mxu0 %v762
        %989 = vmatpush.msra.mxu0 %v759
        %990 = vmatpush.msra.mxu0 %v756
        %991 = vmatpush.msra.mxu0 %v753
        %992 = vmatpush.msra.mxu0 %v750
        %993 = vmatpush.msra.mxu0 %v747
        %994 = vmatpush.msra.mxu0 %v744
        %995 = vmatpush.msra.mxu0 %v741
        %996 = vmatpush.msra.mxu0 %v738
        %997 = vmatpush.msra.mxu0 %v735
        %998 = vmatpush.msra.mxu0 %v732
        %999 = vmatpush.msra.mxu0 %v729
        %1000 = vmatpush.msra.mxu0 %v726
        %1001 = vmatpush.msra.mxu0 %v723
        %1002 = vmatpush.msra.mxu0 %v720
        %1003 = vmatmul.f32.gmra.mxu0 %v983
        %v1004 = vpop.f32.mrf.mxu0
        %v1005 = vadd.f32 0.0, %v1004
        %1006 = vdwg.mxu0
        %1007 = vmatpush.msra.mxu0 %v766
        %1008 = vmatpush.msra.mxu0 %v763
        %1009 = vmatpush.msra.mxu0 %v760
        %1010 = vmatpush.msra.mxu0 %v757
        %1011 = vmatpush.msra.mxu0 %v754
        %1012 = vmatpush.msra.mxu0 %v751
        %1013 = vmatpush.msra.mxu0 %v748
        %1014 = vmatpush.msra.mxu0 %v745
        %1015 = vmatpush.msra.mxu0 %v742
        %1016 = vmatpush.msra.mxu0 %v739
        %1017 = vmatpush.msra.mxu0 %v736
        %1018 = vmatpush.msra.mxu0 %v733
        %1019 = vmatpush.msra.mxu0 %v730
        %1020 = vmatpush.msra.mxu0 %v727
        %1021 = vmatpush.msra.mxu0 %v724
        %1022 = vmatpush.msra.mxu0 %v721
        %1023 = vmatmul.f32.gmra.mxu0 %v983
        %v1024 = vpop.f32.mrf.mxu0
        %v1025 = vadd.f32 0.0, %v1024
        %1026 = vdwg.mxu0
        %1027 = vmatpush.msra.mxu0 %v767
        %1028 = vmatpush.msra.mxu0 %v764
        %1029 = vmatpush.msra.mxu0 %v761
        %1030 = vmatpush.msra.mxu0 %v758
        %1031 = vmatpush.msra.mxu0 %v755
        %1032 = vmatpush.msra.mxu0 %v752
        %1033 = vmatpush.msra.mxu0 %v749
        %1034 = vmatpush.msra.mxu0 %v746
        %1035 = vmatpush.msra.mxu0 %v743
        %1036 = vmatpush.msra.mxu0 %v740
        %1037 = vmatpush.msra.mxu0 %v737
        %1038 = vmatpush.msra.mxu0 %v734
        %1039 = vmatpush.msra.mxu0 %v731
        %1040 = vmatpush.msra.mxu0 %v728
        %1041 = vmatpush.msra.mxu0 %v725
        %1042 = vmatpush.msra.mxu0 %v722
        %1043 = vmatmul.f32.gmra.mxu0 %v983
        %v1044 = vpop.f32.mrf.mxu0
        %v1045 = vadd.f32 0.0, %v1044
        %1046 = vdwg.mxu0
        %v1047 = vadd.f32 %v984, %v1005
        %v1048 = vadd.f32 %v985, %v1025
        %v1049 = vadd.f32 %v986, %v1045
        %v1051 = vperm.slane %v816, 0
        %v1052 = vperm.slane %v816, 1
        %v1053 = vperm.slane %v816, 2
        %1057 = vmatpush.msra.mxu0 %v813
        %1058 = vmatpush.msra.mxu0 %v810
        %1059 = vmatpush.msra.mxu0 %v807
        %1060 = vmatpush.msra.mxu0 %v804
        %1061 = vmatpush.msra.mxu0 %v801
        %1062 = vmatpush.msra.mxu0 %v798
        %1063 = vmatpush.msra.mxu0 %v795
        %1064 = vmatpush.msra.mxu0 %v792
        %1065 = vmatpush.msra.mxu0 %v789
        %1066 = vmatpush.msra.mxu0 %v786
        %1067 = vmatpush.msra.mxu0 %v783
        %1068 = vmatpush.msra.mxu0 %v780
        %1069 = vmatpush.msra.mxu0 %v777
        %1070 = vmatpush.msra.mxu0 %v774
        %1071 = vmatpush.msra.mxu0 %v771
        %1072 = vmatpush.msra.mxu0 %v768
        %1073 = vmatmul.f32.gmra.mxu0 %v980
        %v1074 = vpop.f32.mrf.mxu0
        %v1075 = vadd.f32 %v1051, %v1074
        %1076 = vdwg.mxu0
        %1077 = vmatpush.msra.mxu0 %v814
        %1078 = vmatpush.msra.mxu0 %v811
        %1079 = vmatpush.msra.mxu0 %v808
        %1080 = vmatpush.msra.mxu0 %v805
        %1081 = vmatpush.msra.mxu0 %v802
        %1082 = vmatpush.msra.mxu0 %v799
        %1083 = vmatpush.msra.mxu0 %v796
        %1084 = vmatpush.msra.mxu0 %v793
        %1085 = vmatpush.msra.mxu0 %v790
        %1086 = vmatpush.msra.mxu0 %v787
        %1087 = vmatpush.msra.mxu0 %v784
        %1088 = vmatpush.msra.mxu0 %v781
        %1089 = vmatpush.msra.mxu0 %v778
        %1090 = vmatpush.msra.mxu0 %v775
        %1091 = vmatpush.msra.mxu0 %v772
        %1092 = vmatpush.msra.mxu0 %v769
        %1093 = vmatmul.f32.gmra.mxu0 %v980
        %v1094 = vpop.f32.mrf.mxu0
        %v1095 = vadd.f32 %v1052, %v1094
        %1096 = vdwg.mxu0
        %1097 = vmatpush.msra.mxu0 %v815
        %1098 = vmatpush.msra.mxu0 %v812
        %1099 = vmatpush.msra.mxu0 %v809
        %1100 = vmatpush.msra.mxu0 %v806
        %1101 = vmatpush.msra.mxu0 %v803
        %1102 = vmatpush.msra.mxu0 %v800
        %1103 = vmatpush.msra.mxu0 %v797
        %1104 = vmatpush.msra.mxu0 %v794
        %1105 = vmatpush.msra.mxu0 %v791
        %1106 = vmatpush.msra.mxu0 %v788
        %1107 = vmatpush.msra.mxu0 %v785
        %1108 = vmatpush.msra.mxu0 %v782
        %1109 = vmatpush.msra.mxu0 %v779
        %1110 = vmatpush.msra.mxu0 %v776
        %1111 = vmatpush.msra.mxu0 %v773
        %1112 = vmatpush.msra.mxu0 %v770
        %1113 = vmatmul.f32.gmra.mxu0 %v980
        %v1114 = vpop.f32.mrf.mxu0
        %v1115 = vadd.f32 %v1053, %v1114
        %1116 = vdwg.mxu0
        %v1117 = vadd.f32 %v1047, %v1075
        %v1118 = vxor.u32 %v1117, 2147483648
        %v1119 = vmul.f32 %v1118, 1.442695
        %v1120 = vpow.pop %v1119
        %v1121 = vadd.f32 %v1120, 1.0
        %v1122 = vrcp.pop %v1121
        %v1123 = vmul.f32 %v1121, %v1122
        %v1124 = vsub.f32 1.0, %v1123
        %v1125 = vmul.f32 %v1122, %v1124
        %v1126 = vadd.f32 %v1122, %v1125
        %vm1127 = vweird.f32 %v1121
        %vm1128 = vweird.f32 %v1122
        %vm1129 = vmor %vm1127, %vm1128
        %v1130 = vsel %vm1129, %v1122, %v1126
        %v1131 = vand.u32 2147483647, %v1121
        %vm1132 = vcmp.eq.f32.partialorder %v1131, 8.507059e+37
        %v1133 = vand.u32 %v1121, 2147483648
        %v1134 = vor.u32 1.1754944e-38, %v1133
        %v1135 = vsel %vm1132, %v1134, %v1130
        %v1136 = vmul.f32 1.0, %v1135
        %v1137 = vadd.f32 %v1048, %v1095
        %v1138 = vxor.u32 %v1137, 2147483648
        %v1139 = vmul.f32 %v1138, 1.442695
        %v1140 = vpow.pop %v1139
        %v1141 = vadd.f32 %v1140, 1.0
        %v1142 = vrcp.pop %v1141
        %v1143 = vmul.f32 %v1141, %v1142
        %v1144 = vsub.f32 1.0, %v1143
        %v1145 = vmul.f32 %v1142, %v1144
        %v1146 = vadd.f32 %v1142, %v1145
        %vm1147 = vweird.f32 %v1141
        %vm1148 = vweird.f32 %v1142
        %vm1149 = vmor %vm1147, %vm1148
        %v1150 = vsel %vm1149, %v1142, %v1146
        %v1151 = vand.u32 2147483647, %v1141
        %vm1152 = vcmp.eq.f32.partialorder %v1151, 8.507059e+37
        %v1153 = vand.u32 %v1141, 2147483648
        %v1154 = vor.u32 1.1754944e-38, %v1153
        %v1155 = vsel %vm1152, %v1154, %v1150
        %v1156 = vmul.f32 1.0, %v1155
        %v1157 = vmul.f32 %v1136, %v1115
        %v1158 = vadd.f32 %v1049, %v1157
        %v1159 = vtanh.pop %v1158
        %v1160 = vsub.f32 1.0, %v1156
        %v1161 = vmul.f32 %v1160, %v1159
        %v1162 = vmul.f32 %v1156, %v980
        %v1163 = vadd.f32 %v1161, %v1162
        %v1165 = vperm.slane %v865, 0
        %v1166 = vperm.slane %v865, 1
        %v1167 = vperm.slane %v865, 2
        %1171 = vmatpush.msra.mxu0 %v862
        %1172 = vmatpush.msra.mxu0 %v859
        %1173 = vmatpush.msra.mxu0 %v856
        %1174 = vmatpush.msra.mxu0 %v853
        %1175 = vmatpush.msra.mxu0 %v850
        %1176 = vmatpush.msra.mxu0 %v847
        %1177 = vmatpush.msra.mxu0 %v844
        %1178 = vmatpush.msra.mxu0 %v841
        %1179 = vmatpush.msra.mxu0 %v838
        %1180 = vmatpush.msra.mxu0 %v835
        %1181 = vmatpush.msra.mxu0 %v832
        %1182 = vmatpush.msra.mxu0 %v829
        %1183 = vmatpush.msra.mxu0 %v826
        %1184 = vmatpush.msra.mxu0 %v823
        %1185 = vmatpush.msra.mxu0 %v820
        %1186 = vmatpush.msra.mxu0 %v817
        %1187 = vmatmul.f32.gmra.mxu0 %v1163
        %v1188 = vpop.f32.mrf.mxu0
        %v1189 = vadd.f32 %v1165, %v1188
        %1190 = vdwg.mxu0
        %1191 = vmatpush.msra.mxu0 %v863
        %1192 = vmatpush.msra.mxu0 %v860
        %1193 = vmatpush.msra.mxu0 %v857
        %1194 = vmatpush.msra.mxu0 %v854
        %1195 = vmatpush.msra.mxu0 %v851
        %1196 = vmatpush.msra.mxu0 %v848
        %1197 = vmatpush.msra.mxu0 %v845
        %1198 = vmatpush.msra.mxu0 %v842
        %1199 = vmatpush.msra.mxu0 %v839
        %1200 = vmatpush.msra.mxu0 %v836
        %1201 = vmatpush.msra.mxu0 %v833
        %1202 = vmatpush.msra.mxu0 %v830
        %1203 = vmatpush.msra.mxu0 %v827
        %1204 = vmatpush.msra.mxu0 %v824
        %1205 = vmatpush.msra.mxu0 %v821
        %1206 = vmatpush.msra.mxu0 %v818
        %1207 = vmatmul.f32.gmra.mxu0 %v1163
        %v1208 = vpop.f32.mrf.mxu0
        %v1209 = vadd.f32 %v1166, %v1208
        %1210 = vdwg.mxu0
        %1211 = vmatpush.msra.mxu0 %v864
        %1212 = vmatpush.msra.mxu0 %v861
        %1213 = vmatpush.msra.mxu0 %v858
        %1214 = vmatpush.msra.mxu0 %v855
        %1215 = vmatpush.msra.mxu0 %v852
        %1216 = vmatpush.msra.mxu0 %v849
        %1217 = vmatpush.msra.mxu0 %v846
        %1218 = vmatpush.msra.mxu0 %v843
        %1219 = vmatpush.msra.mxu0 %v840
        %1220 = vmatpush.msra.mxu0 %v837
        %1221 = vmatpush.msra.mxu0 %v834
        %1222 = vmatpush.msra.mxu0 %v831
        %1223 = vmatpush.msra.mxu0 %v828
        %1224 = vmatpush.msra.mxu0 %v825
        %1225 = vmatpush.msra.mxu0 %v822
        %1226 = vmatpush.msra.mxu0 %v819
        %1227 = vmatmul.f32.gmra.mxu0 %v1163
        %v1228 = vpop.f32.mrf.mxu0
        %v1229 = vadd.f32 %v1167, %v1228
        %1230 = vdwg.mxu0
        %v1232 = vperm.slane %v914, 0
        %v1233 = vperm.slane %v914, 1
        %v1234 = vperm.slane %v914, 2
        %1238 = vmatpush.msra.mxu0 %v911
        %1239 = vmatpush.msra.mxu0 %v908
        %1240 = vmatpush.msra.mxu0 %v905
        %1241 = vmatpush.msra.mxu0 %v902
        %1242 = vmatpush.msra.mxu0 %v899
        %1243 = vmatpush.msra.mxu0 %v896
        %1244 = vmatpush.msra.mxu0 %v893
        %1245 = vmatpush.msra.mxu0 %v890
        %1246 = vmatpush.msra.mxu0 %v887
        %1247 = vmatpush.msra.mxu0 %v884
        %1248 = vmatpush.msra.mxu0 %v881
        %1249 = vmatpush.msra.mxu0 %v878
        %1250 = vmatpush.msra.mxu0 %v875
        %1251 = vmatpush.msra.mxu0 %v872
        %1252 = vmatpush.msra.mxu0 %v869
        %1253 = vmatpush.msra.mxu0 %v866
        %1254 = vmatmul.f32.gmra.mxu0 %v982
        %v1255 = vpop.f32.mrf.mxu0
        %v1256 = vadd.f32 %v1232, %v1255
        %1257 = vdwg.mxu0
        %1258 = vmatpush.msra.mxu0 %v912
        %1259 = vmatpush.msra.mxu0 %v909
        %1260 = vmatpush.msra.mxu0 %v906
        %1261 = vmatpush.msra.mxu0 %v903
        %1262 = vmatpush.msra.mxu0 %v900
        %1263 = vmatpush.msra.mxu0 %v897
        %1264 = vmatpush.msra.mxu0 %v894
        %1265 = vmatpush.msra.mxu0 %v891
        %1266 = vmatpush.msra.mxu0 %v888
        %1267 = vmatpush.msra.mxu0 %v885
        %1268 = vmatpush.msra.mxu0 %v882
        %1269 = vmatpush.msra.mxu0 %v879
        %1270 = vmatpush.msra.mxu0 %v876
        %1271 = vmatpush.msra.mxu0 %v873
        %1272 = vmatpush.msra.mxu0 %v870
        %1273 = vmatpush.msra.mxu0 %v867
        %1274 = vmatmul.f32.gmra.mxu0 %v982
        %v1275 = vpop.f32.mrf.mxu0
        %v1276 = vadd.f32 %v1233, %v1275
        %1277 = vdwg.mxu0
        %1278 = vmatpush.msra.mxu0 %v913
        %1279 = vmatpush.msra.mxu0 %v910
        %1280 = vmatpush.msra.mxu0 %v907
        %1281 = vmatpush.msra.mxu0 %v904
        %1282 = vmatpush.msra.mxu0 %v901
        %1283 = vmatpush.msra.mxu0 %v898
        %1284 = vmatpush.msra.mxu0 %v895
        %1285 = vmatpush.msra.mxu0 %v892
        %1286 = vmatpush.msra.mxu0 %v889
        %1287 = vmatpush.msra.mxu0 %v886
        %1288 = vmatpush.msra.mxu0 %v883
        %1289 = vmatpush.msra.mxu0 %v880
        %1290 = vmatpush.msra.mxu0 %v877
        %1291 = vmatpush.msra.mxu0 %v874
        %1292 = vmatpush.msra.mxu0 %v871
        %1293 = vmatpush.msra.mxu0 %v868
        %1294 = vmatmul.f32.gmra.mxu0 %v982
        %v1295 = vpop.f32.mrf.mxu0
        %v1296 = vadd.f32 %v1234, %v1295
        %1297 = vdwg.mxu0
        %v1298 = vadd.f32 %v1189, %v1256
        %v1299 = vxor.u32 %v1298, 2147483648
        %v1300 = vmul.f32 %v1299, 1.442695
        %v1301 = vpow.pop %v1300
        %v1302 = vadd.f32 %v1301, 1.0
        %v1303 = vrcp.pop %v1302
        %v1304 = vmul.f32 %v1302, %v1303
        %v1305 = vsub.f32 1.0, %v1304
        %v1306 = vmul.f32 %v1303, %v1305
        %v1307 = vadd.f32 %v1303, %v1306
        %vm1308 = vweird.f32 %v1302
        %vm1309 = vweird.f32 %v1303
        %vm1310 = vmor %vm1308, %vm1309
        %v1311 = vsel %vm1310, %v1303, %v1307
        %v1312 = vand.u32 2147483647, %v1302
        %vm1313 = vcmp.eq.f32.partialorder %v1312, 8.507059e+37
        %v1314 = vand.u32 %v1302, 2147483648
        %v1315 = vor.u32 1.1754944e-38, %v1314
        %v1316 = vsel %vm1313, %v1315, %v1311
        %v1317 = vmul.f32 1.0, %v1316
        %v1318 = vadd.f32 %v1209, %v1276
        %v1319 = vxor.u32 %v1318, 2147483648
        %v1320 = vmul.f32 %v1319, 1.442695
        %v1321 = vpow.pop %v1320
        %v1322 = vadd.f32 %v1321, 1.0
        %v1323 = vrcp.pop %v1322
        %v1324 = vmul.f32 %v1322, %v1323
        %v1325 = vsub.f32 1.0, %v1324
        %v1326 = vmul.f32 %v1323, %v1325
        %v1327 = vadd.f32 %v1323, %v1326
        %vm1328 = vweird.f32 %v1322
        %vm1329 = vweird.f32 %v1323
        %vm1330 = vmor %vm1328, %vm1329
        %v1331 = vsel %vm1330, %v1323, %v1327
        %v1332 = vand.u32 2147483647, %v1322
        %vm1333 = vcmp.eq.f32.partialorder %v1332, 8.507059e+37
        %v1334 = vand.u32 %v1322, 2147483648
        %v1335 = vor.u32 1.1754944e-38, %v1334
        %v1336 = vsel %vm1333, %v1335, %v1331
        %v1337 = vmul.f32 1.0, %v1336
        %v1338 = vmul.f32 %v1317, %v1296
        %v1339 = vadd.f32 %v1229, %v1338
        %v1340 = vtanh.pop %v1339
        %v1341 = vsub.f32 1.0, %v1337
        %v1342 = vmul.f32 %v1341, %v1340
        %v1343 = vmul.f32 %v1337, %v982
        %v1344 = vadd.f32 %v1342, %v1343
        %1345 = vmatpush.msra.mxu0 %v930
        %1346 = vmatpush.msra.mxu0 %v929
        %1347 = vmatpush.msra.mxu0 %v928
        %1348 = vmatpush.msra.mxu0 %v927
        %1349 = vmatpush.msra.mxu0 %v926
        %1350 = vmatpush.msra.mxu0 %v925
        %1351 = vmatpush.msra.mxu0 %v924
        %1352 = vmatpush.msra.mxu0 %v923
        %1353 = vmatpush.msra.mxu0 %v922
        %1354 = vmatpush.msra.mxu0 %v921
        %1355 = vmatpush.msra.mxu0 %v920
        %1356 = vmatpush.msra.mxu0 %v919
        %1357 = vmatpush.msra.mxu0 %v918
        %1358 = vmatpush.msra.mxu0 %v917
        %1359 = vmatpush.msra.mxu0 %v916
        %1360 = vmatpush.msra.mxu0 %v915
        %1361 = vmatmul.f32.gmra.mxu0 %v1344
        %v1362 = vpop.f32.mrf.mxu0
        %v1363 = vadd.f32 0.0, %v1362
        %1364 = vdwg.mxu0
        %1365 = vmatpush.msra.mxu0 %v962
        %1366 = vmatpush.msra.mxu0 %v961
        %1367 = vmatpush.msra.mxu0 %v960
        %1368 = vmatpush.msra.mxu0 %v959
        %1369 = vmatpush.msra.mxu0 %v958
        %1370 = vmatpush.msra.mxu0 %v957
        %1371 = vmatpush.msra.mxu0 %v956
        %1372 = vmatpush.msra.mxu0 %v955
        %1373 = vmatpush.msra.mxu0 %v954
        %1374 = vmatpush.msra.mxu0 %v953
        %1375 = vmatpush.msra.mxu0 %v952
        %1376 = vmatpush.msra.mxu0 %v951
        %1377 = vmatpush.msra.mxu0 %v950
        %1378 = vmatpush.msra.mxu0 %v949
        %1379 = vmatpush.msra.mxu0 %v948
        %1380 = vmatpush.msra.mxu0 %v947
        %1381 = vmatmul.f32.gmra.mxu0 %v1344
        %v1382 = vpop.f32.mrf.mxu0
        %v1383 = vadd.f32 0.0, %v1382
        %1384 = vdwg.mxu0
        %v1386 = vrot.slane %v1363, 1
        %v1387 = vrot.slane %v1363, 2
        %v1388 = vrot.slane %v1363, 3
        %v1389 = vrot.slane %v1363, 4
        %v1390 = vrot.slane %v1363, 5
        %v1391 = vrot.slane %v1363, 6
        %v1392 = vrot.slane %v1363, 7
        %v1393 = vperm.slane %v1363, 0
        %v1394 = vperm.slane %v1386, 0
        %v1395 = vperm.slane %v1387, 0
        %v1396 = vperm.slane %v1388, 0
        %v1397 = vperm.slane %v1389, 0
        %v1398 = vperm.slane %v1390, 0
        %v1399 = vperm.slane %v1391, 0
        %v1400 = vperm.slane %v1392, 0
        %v1409 = vmul.f32 %v963, %v1393
        %v1410 = vmul.f32 %v964, %v1393
        %v1411 = vmul.f32 %v965, %v1394
        %v1412 = vmul.f32 %v966, %v1394
        %v1413 = vmul.f32 %v967, %v1395
        %v1414 = vmul.f32 %v968, %v1395
        %v1415 = vmul.f32 %v969, %v1396
        %v1416 = vmul.f32 %v970, %v1396
        %v1417 = vmul.f32 %v971, %v1397
        %v1418 = vmul.f32 %v972, %v1397
        %v1419 = vmul.f32 %v973, %v1398
        %v1420 = vmul.f32 %v974, %v1398
        %v1421 = vmul.f32 %v975, %v1399
        %v1422 = vmul.f32 %v976, %v1399
        %v1423 = vmul.f32 %v977, %v1400
        %v1424 = vmul.f32 %v978, %v1400
        %1425 = vadd.xlane.f32.xlu0 %v1409
        %v1426 = vpop.xlane.xlu0 %1425
        %1427 = vadd.xlane.f32.xlu0 %v1410
        %v1428 = vpop.xlane.xlu0 %1427
        %1429 = vadd.xlane.f32.xlu0 %v1411
        %v1430 = vpop.xlane.xlu0 %1429
        %1431 = vadd.xlane.f32.xlu0 %v1412
        %v1432 = vpop.xlane.xlu0 %1431
        %1433 = vadd.xlane.f32.xlu0 %v1413
        %v1434 = vpop.xlane.xlu0 %1433
        %1435 = vadd.xlane.f32.xlu0 %v1414
        %v1436 = vpop.xlane.xlu0 %1435
        %1437 = vadd.xlane.f32.xlu0 %v1415
        %v1438 = vpop.xlane.xlu0 %1437
        %1439 = vadd.xlane.f32.xlu0 %v1416
        %v1440 = vpop.xlane.xlu0 %1439
        %1441 = vadd.xlane.f32.xlu0 %v1417
        %v1442 = vpop.xlane.xlu0 %1441
        %1443 = vadd.xlane.f32.xlu0 %v1418
        %v1444 = vpop.xlane.xlu0 %1443
        %1445 = vadd.xlane.f32.xlu0 %v1419
        %v1446 = vpop.xlane.xlu0 %1445
        %1447 = vadd.xlane.f32.xlu0 %v1420
        %v1448 = vpop.xlane.xlu0 %1447
        %1449 = vadd.xlane.f32.xlu0 %v1421
        %v1450 = vpop.xlane.xlu0 %1449
        %1451 = vadd.xlane.f32.xlu0 %v1422
        %v1452 = vpop.xlane.xlu0 %1451
        %1453 = vadd.xlane.f32.xlu0 %v1423
        %v1454 = vpop.xlane.xlu0 %1453
        %1455 = vadd.xlane.f32.xlu0 %v1424
        %v1456 = vpop.xlane.xlu0 %1455
        %v1458 = vperm.slane %v979, 0
        %v1459 = vlaneseq
        %v1460 = vshrl.u32 %v1459, 7
        %1462 = vset.pattern.permute.xlu0 %v1460
        %1463 = vperm.xlu0 %1462, %v1458
        %v1464 = vpop.permute.xlu0 %1463
        %v1465 = vlaneseq
        %v1466 = vshrl.u32 %v1465, 7
        %v1467 = vadd.s32 %v1466, 8
        %1468 = vset.pattern.permute.xlu0 %v1467
        %1469 = vperm.xlu0 %1468, %v1458
        %v1470 = vpop.permute.xlu0 %1469
        %v1471 = vperm.slane %v979, 1
        %v1472 = vlaneseq
        %v1473 = vshrl.u32 %v1472, 7
        %1475 = vset.pattern.permute.xlu0 %v1473
        %1476 = vperm.xlu0 %1475, %v1471
        %v1477 = vpop.permute.xlu0 %1476
        %v1478 = vlaneseq
        %v1479 = vshrl.u32 %v1478, 7
        %v1480 = vadd.s32 %v1479, 8
        %1481 = vset.pattern.permute.xlu0 %v1480
        %1482 = vperm.xlu0 %1481, %v1471
        %v1483 = vpop.permute.xlu0 %1482
        %v1484 = vperm.slane %v979, 2
        %v1485 = vlaneseq
        %v1486 = vshrl.u32 %v1485, 7
        %1488 = vset.pattern.permute.xlu0 %v1486
        %1489 = vperm.xlu0 %1488, %v1484
        %v1490 = vpop.permute.xlu0 %1489
        %v1491 = vlaneseq
        %v1492 = vshrl.u32 %v1491, 7
        %v1493 = vadd.s32 %v1492, 8
        %1494 = vset.pattern.permute.xlu0 %v1493
        %1495 = vperm.xlu0 %1494, %v1484
        %v1496 = vpop.permute.xlu0 %1495
        %v1497 = vperm.slane %v979, 3
        %v1498 = vlaneseq
        %v1499 = vshrl.u32 %v1498, 7
        %1501 = vset.pattern.permute.xlu0 %v1499
        %1502 = vperm.xlu0 %1501, %v1497
        %v1503 = vpop.permute.xlu0 %1502
        %v1504 = vlaneseq
        %v1505 = vshrl.u32 %v1504, 7
        %v1506 = vadd.s32 %v1505, 8
        %1507 = vset.pattern.permute.xlu0 %v1506
        %1508 = vperm.xlu0 %1507, %v1497
        %v1509 = vpop.permute.xlu0 %1508
        %v1510 = vperm.slane %v979, 4
        %v1511 = vlaneseq
        %v1512 = vshrl.u32 %v1511, 7
        %1514 = vset.pattern.permute.xlu0 %v1512
        %1515 = vperm.xlu0 %1514, %v1510
        %v1516 = vpop.permute.xlu0 %1515
        %v1517 = vlaneseq
        %v1518 = vshrl.u32 %v1517, 7
        %v1519 = vadd.s32 %v1518, 8
        %1520 = vset.pattern.permute.xlu0 %v1519
        %1521 = vperm.xlu0 %1520, %v1510
        %v1522 = vpop.permute.xlu0 %1521
        %v1523 = vperm.slane %v979, 5
        %v1524 = vlaneseq
        %v1525 = vshrl.u32 %v1524, 7
        %1527 = vset.pattern.permute.xlu0 %v1525
        %1528 = vperm.xlu0 %1527, %v1523
        %v1529 = vpop.permute.xlu0 %1528
        %v1530 = vlaneseq
        %v1531 = vshrl.u32 %v1530, 7
        %v1532 = vadd.s32 %v1531, 8
        %1533 = vset.pattern.permute.xlu0 %v1532
        %1534 = vperm.xlu0 %1533, %v1523
        %v1535 = vpop.permute.xlu0 %1534
        %v1536 = vperm.slane %v979, 6
        %v1537 = vlaneseq
        %v1538 = vshrl.u32 %v1537, 7
        %1540 = vset.pattern.permute.xlu0 %v1538
        %1541 = vperm.xlu0 %1540, %v1536
        %v1542 = vpop.permute.xlu0 %1541
        %v1543 = vlaneseq
        %v1544 = vshrl.u32 %v1543, 7
        %v1545 = vadd.s32 %v1544, 8
        %1546 = vset.pattern.permute.xlu0 %v1545
        %1547 = vperm.xlu0 %1546, %v1536
        %v1548 = vpop.permute.xlu0 %1547
        %v1549 = vperm.slane %v979, 7
        %v1550 = vlaneseq
        %v1551 = vshrl.u32 %v1550, 7
        %1553 = vset.pattern.permute.xlu0 %v1551
        %1554 = vperm.xlu0 %1553, %v1549
        %v1555 = vpop.permute.xlu0 %1554
        %v1556 = vlaneseq
        %v1557 = vshrl.u32 %v1556, 7
        %v1558 = vadd.s32 %v1557, 8
        %1559 = vset.pattern.permute.xlu0 %v1558
        %1560 = vperm.xlu0 %1559, %v1549
        %v1561 = vpop.permute.xlu0 %1560
        %v1578 = vadd.f32 %v1426, %v1464
        %v1579 = vadd.f32 %v1428, %v1470
        %v1580 = vadd.f32 %v1430, %v1477
        %v1581 = vadd.f32 %v1432, %v1483
        %v1582 = vadd.f32 %v1434, %v1490
        %v1583 = vadd.f32 %v1436, %v1496
        %v1584 = vadd.f32 %v1438, %v1503
        %v1585 = vadd.f32 %v1440, %v1509
        %v1586 = vadd.f32 %v1442, %v1516
        %v1587 = vadd.f32 %v1444, %v1522
        %v1588 = vadd.f32 %v1446, %v1529
        %v1589 = vadd.f32 %v1448, %v1535
        %v1590 = vadd.f32 %v1450, %v1542
        %v1591 = vadd.f32 %v1452, %v1548
        %v1592 = vadd.f32 %v1454, %v1555
        %v1593 = vadd.f32 %v1456, %v1561
        %1610 = vset.pattern.permute.xlu0 0
        %1611 = vperm.xlu0 %1610, %v1578
        %v1612 = vpop.permute.xlu0 %1611
        %1613 = vset.pattern.permute.xlu0 0
        %1614 = vperm.xlu0 %1613, %v1579
        %v1615 = vpop.permute.xlu0 %1614
        %1616 = vset.pattern.permute.xlu0 0
        %1617 = vperm.xlu0 %1616, %v1580
        %v1618 = vpop.permute.xlu0 %1617
        %1619 = vset.pattern.permute.xlu0 0
        %1620 = vperm.xlu0 %1619, %v1581
        %v1621 = vpop.permute.xlu0 %1620
        %1622 = vset.pattern.permute.xlu0 0
        %1623 = vperm.xlu0 %1622, %v1582
        %v1624 = vpop.permute.xlu0 %1623
        %1625 = vset.pattern.permute.xlu0 0
        %1626 = vperm.xlu0 %1625, %v1583
        %v1627 = vpop.permute.xlu0 %1626
        %1628 = vset.pattern.permute.xlu0 0
        %1629 = vperm.xlu0 %1628, %v1584
        %v1630 = vpop.permute.xlu0 %1629
        %1631 = vset.pattern.permute.xlu0 0
        %1632 = vperm.xlu0 %1631, %v1585
        %v1633 = vpop.permute.xlu0 %1632
        %1634 = vset.pattern.permute.xlu0 0
        %1635 = vperm.xlu0 %1634, %v1586
        %v1636 = vpop.permute.xlu0 %1635
        %1637 = vset.pattern.permute.xlu0 0
        %1638 = vperm.xlu0 %1637, %v1587
        %v1639 = vpop.permute.xlu0 %1638
        %1640 = vset.pattern.permute.xlu0 0
        %1641 = vperm.xlu0 %1640, %v1588
        %v1642 = vpop.permute.xlu0 %1641
        %1643 = vset.pattern.permute.xlu0 0
        %1644 = vperm.xlu0 %1643, %v1589
        %v1645 = vpop.permute.xlu0 %1644
        %1646 = vset.pattern.permute.xlu0 0
        %1647 = vperm.xlu0 %1646, %v1590
        %v1648 = vpop.permute.xlu0 %1647
        %1649 = vset.pattern.permute.xlu0 0
        %1650 = vperm.xlu0 %1649, %v1591
        %v1651 = vpop.permute.xlu0 %1650
        %1652 = vset.pattern.permute.xlu0 0
        %1653 = vperm.xlu0 %1652, %v1592
        %v1654 = vpop.permute.xlu0 %1653
        %1655 = vset.pattern.permute.xlu0 0
        %1656 = vperm.xlu0 %1655, %v1593
        %v1657 = vpop.permute.xlu0 %1656
        %v1658 = vlaneseq
        %v1659 = vand.u32 %v1658, 127
        %v1660 = vperm.slane %v1612, %v1659
        %v1661 = vadd.s32 %v1659, 4294967288
        %v1662 = vperm.slane %v1615, %v1661
        %vm1663 = vcmask 130112
        %v1664 = vsel %vm1663, %v1662, %v1660
        %v1665 = vperm.slane %v1618, %v1659
        %v1666 = vperm.slane %v1621, %v1661
        %v1667 = vsel %vm1663, %v1666, %v1665
        %v1668 = vperm.slane %v1624, %v1659
        %v1669 = vperm.slane %v1627, %v1661
        %v1670 = vsel %vm1663, %v1669, %v1668
        %v1671 = vperm.slane %v1630, %v1659
        %v1672 = vperm.slane %v1633, %v1661
        %v1673 = vsel %vm1663, %v1672, %v1671
        %v1674 = vperm.slane %v1636, %v1659
        %v1675 = vperm.slane %v1639, %v1661
        %v1676 = vsel %vm1663, %v1675, %v1674
        %v1677 = vperm.slane %v1642, %v1659
        %v1678 = vperm.slane %v1645, %v1661
        %v1679 = vsel %vm1663, %v1678, %v1677
        %v1680 = vperm.slane %v1648, %v1659
        %v1681 = vperm.slane %v1651, %v1661
        %v1682 = vsel %vm1663, %v1681, %v1680
        %v1683 = vperm.slane %v1654, %v1659
        %v1684 = vperm.slane %v1657, %v1661
        %v1685 = vsel %vm1663, %v1684, %v1683
        %vm1686 = vcmask 1041409
        %v1687 = vsel %vm1686, %v1667, %v1664
        %vm1688 = vcmask 1042434
        %v1689 = vsel %vm1688, %v1670, %v1687
        %vm1690 = vcmask 1043459
        %v1691 = vsel %vm1690, %v1673, %v1689
        %vm1692 = vcmask 1044484
        %v1693 = vsel %vm1692, %v1676, %v1691
        %vm1694 = vcmask 1045509
        %v1695 = vsel %vm1694, %v1679, %v1693
        %vm1696 = vcmask 1046534
        %v1697 = vsel %vm1696, %v1682, %v1695
        %vm1698 = vcmask 1047559
        %v1699 = vsel %vm1698, %v1685, %v1697
        %vm1701 = vcmask 130048
        %v1702 = vsel %vm1701, %v1699, -inf
        %1703 = vmax.xlane.f32.xlu0 %v1702
        %v1704 = vpop.xlane.xlu0 %1703
        %v1706 = vperm.slane %v1704, 0
        %v1707 = vperm.slane %v1704, 1
        %v1708 = vperm.slane %v1704, 2
        %v1709 = vperm.slane %v1704, 3
        %v1710 = vperm.slane %v1704, 4
        %v1711 = vperm.slane %v1704, 5
        %v1712 = vperm.slane %v1704, 6
        %v1713 = vperm.slane %v1704, 7
        %v1722 = vsub.f32 %v1578, %v1706
        %v1723 = vsub.f32 %v1579, %v1706
        %v1724 = vsub.f32 %v1580, %v1707
        %v1725 = vsub.f32 %v1581, %v1707
        %v1726 = vsub.f32 %v1582, %v1708
        %v1727 = vsub.f32 %v1583, %v1708
        %v1728 = vsub.f32 %v1584, %v1709
        %v1729 = vsub.f32 %v1585, %v1709
        %v1730 = vsub.f32 %v1586, %v1710
        %v1731 = vsub.f32 %v1587, %v1710
        %v1732 = vsub.f32 %v1588, %v1711
        %v1733 = vsub.f32 %v1589, %v1711
        %v1734 = vsub.f32 %v1590, %v1712
        %v1735 = vsub.f32 %v1591, %v1712
        %v1736 = vsub.f32 %v1592, %v1713
        %v1737 = vsub.f32 %v1593, %v1713
        %v1738 = vmul.f32 %v1722, 1.442695
        %v1739 = vpow.pop %v1738
        %v1740 = vmul.f32 %v1723, 1.442695
        %v1741 = vpow.pop %v1740
        %v1742 = vmul.f32 %v1724, 1.442695
        %v1743 = vpow.pop %v1742
        %v1744 = vmul.f32 %v1725, 1.442695
        %v1745 = vpow.pop %v1744
        %v1746 = vmul.f32 %v1726, 1.442695
        %v1747 = vpow.pop %v1746
        %v1748 = vmul.f32 %v1727, 1.442695
        %v1749 = vpow.pop %v1748
        %v1750 = vmul.f32 %v1728, 1.442695
        %v1751 = vpow.pop %v1750
        %v1752 = vmul.f32 %v1729, 1.442695
        %v1753 = vpow.pop %v1752
        %v1754 = vmul.f32 %v1730, 1.442695
        %v1755 = vpow.pop %v1754
        %v1756 = vmul.f32 %v1731, 1.442695
        %v1757 = vpow.pop %v1756
        %v1758 = vmul.f32 %v1732, 1.442695
        %v1759 = vpow.pop %v1758
        %v1760 = vmul.f32 %v1733, 1.442695
        %v1761 = vpow.pop %v1760
        %v1762 = vmul.f32 %v1734, 1.442695
        %v1763 = vpow.pop %v1762
        %v1764 = vmul.f32 %v1735, 1.442695
        %v1765 = vpow.pop %v1764
        %v1766 = vmul.f32 %v1736, 1.442695
        %v1767 = vpow.pop %v1766
        %v1768 = vmul.f32 %v1737, 1.442695
        %v1769 = vpow.pop %v1768
        %1786 = vset.pattern.permute.xlu0 0
        %1787 = vperm.xlu0 %1786, %v1739
        %v1788 = vpop.permute.xlu0 %1787
        %1789 = vset.pattern.permute.xlu0 0
        %1790 = vperm.xlu0 %1789, %v1741
        %v1791 = vpop.permute.xlu0 %1790
        %1792 = vset.pattern.permute.xlu0 0
        %1793 = vperm.xlu0 %1792, %v1743
        %v1794 = vpop.permute.xlu0 %1793
        %1795 = vset.pattern.permute.xlu0 0
        %1796 = vperm.xlu0 %1795, %v1745
        %v1797 = vpop.permute.xlu0 %1796
        %1798 = vset.pattern.permute.xlu0 0
        %1799 = vperm.xlu0 %1798, %v1747
        %v1800 = vpop.permute.xlu0 %1799
        %1801 = vset.pattern.permute.xlu0 0
        %1802 = vperm.xlu0 %1801, %v1749
        %v1803 = vpop.permute.xlu0 %1802
        %1804 = vset.pattern.permute.xlu0 0
        %1805 = vperm.xlu0 %1804, %v1751
        %v1806 = vpop.permute.xlu0 %1805
        %1807 = vset.pattern.permute.xlu0 0
        %1808 = vperm.xlu0 %1807, %v1753
        %v1809 = vpop.permute.xlu0 %1808
        %1810 = vset.pattern.permute.xlu0 0
        %1811 = vperm.xlu0 %1810, %v1755
        %v1812 = vpop.permute.xlu0 %1811
        %1813 = vset.pattern.permute.xlu0 0
        %1814 = vperm.xlu0 %1813, %v1757
        %v1815 = vpop.permute.xlu0 %1814
        %1816 = vset.pattern.permute.xlu0 0
        %1817 = vperm.xlu0 %1816, %v1759
        %v1818 = vpop.permute.xlu0 %1817
        %1819 = vset.pattern.permute.xlu0 0
        %1820 = vperm.xlu0 %1819, %v1761
        %v1821 = vpop.permute.xlu0 %1820
        %1822 = vset.pattern.permute.xlu0 0
        %1823 = vperm.xlu0 %1822, %v1763
        %v1824 = vpop.permute.xlu0 %1823
        %1825 = vset.pattern.permute.xlu0 0
        %1826 = vperm.xlu0 %1825, %v1765
        %v1827 = vpop.permute.xlu0 %1826
        %1828 = vset.pattern.permute.xlu0 0
        %1829 = vperm.xlu0 %1828, %v1767
        %v1830 = vpop.permute.xlu0 %1829
        %1831 = vset.pattern.permute.xlu0 0
        %1832 = vperm.xlu0 %1831, %v1769
        %v1833 = vpop.permute.xlu0 %1832
        %v1834 = vperm.slane %v1788, %v1659
        %v1835 = vperm.slane %v1791, %v1661
        %v1836 = vsel %vm1663, %v1835, %v1834
        %v1837 = vperm.slane %v1794, %v1659
        %v1838 = vperm.slane %v1797, %v1661
        %v1839 = vsel %vm1663, %v1838, %v1837
        %v1840 = vperm.slane %v1800, %v1659
        %v1841 = vperm.slane %v1803, %v1661
        %v1842 = vsel %vm1663, %v1841, %v1840
        %v1843 = vperm.slane %v1806, %v1659
        %v1844 = vperm.slane %v1809, %v1661
        %v1845 = vsel %vm1663, %v1844, %v1843
        %v1846 = vperm.slane %v1812, %v1659
        %v1847 = vperm.slane %v1815, %v1661
        %v1848 = vsel %vm1663, %v1847, %v1846
        %v1849 = vperm.slane %v1818, %v1659
        %v1850 = vperm.slane %v1821, %v1661
        %v1851 = vsel %vm1663, %v1850, %v1849
        %v1852 = vperm.slane %v1824, %v1659
        %v1853 = vperm.slane %v1827, %v1661
        %v1854 = vsel %vm1663, %v1853, %v1852
        %v1855 = vperm.slane %v1830, %v1659
        %v1856 = vperm.slane %v1833, %v1661
        %v1857 = vsel %vm1663, %v1856, %v1855
        %v1858 = vsel %vm1686, %v1839, %v1836
        %v1859 = vsel %vm1688, %v1842, %v1858
        %v1860 = vsel %vm1690, %v1845, %v1859
        %v1861 = vsel %vm1692, %v1848, %v1860
        %v1862 = vsel %vm1694, %v1851, %v1861
        %v1863 = vsel %vm1696, %v1854, %v1862
        %v1864 = vsel %vm1698, %v1857, %v1863
        %v1866 = vsel %vm1701, %v1864, 0.0
        %1867 = vadd.xlane.f32.xlu0 %v1866
        %v1868 = vpop.xlane.xlu0 %1867
        %v1869 = vrcp.pop %v1868
        %v1871 = vperm.slane %v1869, 0
        %v1872 = vperm.slane %v1869, 1
        %v1873 = vperm.slane %v1869, 2
        %v1874 = vperm.slane %v1869, 3
        %v1875 = vperm.slane %v1869, 4
        %v1876 = vperm.slane %v1869, 5
        %v1877 = vperm.slane %v1869, 6
        %v1878 = vperm.slane %v1869, 7
        %v1887 = vmul.f32 %v1739, %v1871
        %v1888 = vmul.f32 %v1741, %v1871
        %v1889 = vmul.f32 %v1743, %v1872
        %v1890 = vmul.f32 %v1745, %v1872
        %v1891 = vmul.f32 %v1747, %v1873
        %v1892 = vmul.f32 %v1749, %v1873
        %v1893 = vmul.f32 %v1751, %v1874
        %v1894 = vmul.f32 %v1753, %v1874
        %v1895 = vmul.f32 %v1755, %v1875
        %v1896 = vmul.f32 %v1757, %v1875
        %v1897 = vmul.f32 %v1759, %v1876
        %v1898 = vmul.f32 %v1761, %v1876
        %v1899 = vmul.f32 %v1763, %v1877
        %v1900 = vmul.f32 %v1765, %v1877
        %v1901 = vmul.f32 %v1767, %v1878
        %v1902 = vmul.f32 %v1769, %v1878
        %1904 = vset.pattern.permute.xlu0 0
        %1905 = vperm.xlu0 %1904, %v1887
        %v1906 = vpop.permute.xlu0 %1905
        %1909 = vset.pattern.permute.xlu0 0
        %1910 = vperm.xlu0 %1909, %v1888
        %v1911 = vpop.permute.xlu0 %1910
        %1914 = vset.pattern.permute.xlu0 0
        %1915 = vperm.xlu0 %1914, %v1889
        %v1916 = vpop.permute.xlu0 %1915
        %1919 = vset.pattern.permute.xlu0 0
        %1920 = vperm.xlu0 %1919, %v1890
        %v1921 = vpop.permute.xlu0 %1920
        %1924 = vset.pattern.permute.xlu0 0
        %1925 = vperm.xlu0 %1924, %v1891
        %v1926 = vpop.permute.xlu0 %1925
        %1929 = vset.pattern.permute.xlu0 0
        %1930 = vperm.xlu0 %1929, %v1892
        %v1931 = vpop.permute.xlu0 %1930
        %1934 = vset.pattern.permute.xlu0 0
        %1935 = vperm.xlu0 %1934, %v1893
        %v1936 = vpop.permute.xlu0 %1935
        %1939 = vset.pattern.permute.xlu0 0
        %1940 = vperm.xlu0 %1939, %v1894
        %v1941 = vpop.permute.xlu0 %1940
        %1944 = vset.pattern.permute.xlu0 0
        %1945 = vperm.xlu0 %1944, %v1895
        %v1946 = vpop.permute.xlu0 %1945
        %1949 = vset.pattern.permute.xlu0 0
        %1950 = vperm.xlu0 %1949, %v1896
        %v1951 = vpop.permute.xlu0 %1950
        %1954 = vset.pattern.permute.xlu0 0
        %1955 = vperm.xlu0 %1954, %v1897
        %v1956 = vpop.permute.xlu0 %1955
        %1959 = vset.pattern.permute.xlu0 0
        %1960 = vperm.xlu0 %1959, %v1898
        %v1961 = vpop.permute.xlu0 %1960
        %1964 = vset.pattern.permute.xlu0 0
        %1965 = vperm.xlu0 %1964, %v1899
        %v1966 = vpop.permute.xlu0 %1965
        %1969 = vset.pattern.permute.xlu0 0
        %1970 = vperm.xlu0 %1969, %v1900
        %v1971 = vpop.permute.xlu0 %1970
        %1974 = vset.pattern.permute.xlu0 0
        %1975 = vperm.xlu0 %1974, %v1901
        %v1976 = vpop.permute.xlu0 %1975
        %1979 = vset.pattern.permute.xlu0 0
        %1980 = vperm.xlu0 %1979, %v1902
        %v1981 = vpop.permute.xlu0 %1980
        %v1983 = vmul.f32 %v1906, %v963
        %v1984 = vmul.f32 %v1911, %v964
        %v1985 = vmul.f32 %v1916, %v965
        %v1986 = vmul.f32 %v1921, %v966
        %v1987 = vmul.f32 %v1926, %v967
        %v1988 = vmul.f32 %v1931, %v968
        %v1989 = vmul.f32 %v1936, %v969
        %v1990 = vmul.f32 %v1941, %v970
        %v1991 = vmul.f32 %v1946, %v971
        %v1992 = vmul.f32 %v1951, %v972
        %v1993 = vmul.f32 %v1956, %v973
        %v1994 = vmul.f32 %v1961, %v974
        %v1995 = vmul.f32 %v1966, %v975
        %v1996 = vmul.f32 %v1971, %v976
        %v1997 = vmul.f32 %v1976, %v977
        %v1998 = vmul.f32 %v1981, %v978
        %v1999 = vadd.f32 %v1983, %v1984
        %v2000 = vrot.slane %v1999, 4
        %v2001 = vadd.f32 %v1999, %v2000
        %v2002 = vrot.slane %v2001, 2
        %v2003 = vadd.f32 %v2001, %v2002
        %v2004 = vrot.slane %v2003, 1
        %v2005 = vadd.f32 %v2003, %v2004
        %v2006 = vadd.f32 %v1985, %v1986
        %v2007 = vrot.slane %v2006, 4
        %v2008 = vadd.f32 %v2006, %v2007
        %v2009 = vrot.slane %v2008, 2
        %v2010 = vadd.f32 %v2008, %v2009
        %v2011 = vrot.slane %v2010, 1
        %v2012 = vadd.f32 %v2010, %v2011
        %v2013 = vadd.f32 %v1987, %v1988
        %v2014 = vrot.slane %v2013, 4
        %v2015 = vadd.f32 %v2013, %v2014
        %v2016 = vrot.slane %v2015, 2
        %v2017 = vadd.f32 %v2015, %v2016
        %v2018 = vrot.slane %v2017, 1
        %v2019 = vadd.f32 %v2017, %v2018
        %v2020 = vadd.f32 %v1989, %v1990
        %v2021 = vrot.slane %v2020, 4
        %v2022 = vadd.f32 %v2020, %v2021
        %v2023 = vrot.slane %v2022, 2
        %v2024 = vadd.f32 %v2022, %v2023
        %v2025 = vrot.slane %v2024, 1
        %v2026 = vadd.f32 %v2024, %v2025
        %v2027 = vadd.f32 %v1991, %v1992
        %v2028 = vrot.slane %v2027, 4
        %v2029 = vadd.f32 %v2027, %v2028
        %v2030 = vrot.slane %v2029, 2
        %v2031 = vadd.f32 %v2029, %v2030
        %v2032 = vrot.slane %v2031, 1
        %v2033 = vadd.f32 %v2031, %v2032
        %v2034 = vadd.f32 %v1993, %v1994
        %v2035 = vrot.slane %v2034, 4
        %v2036 = vadd.f32 %v2034, %v2035
        %v2037 = vrot.slane %v2036, 2
        %v2038 = vadd.f32 %v2036, %v2037
        %v2039 = vrot.slane %v2038, 1
        %v2040 = vadd.f32 %v2038, %v2039
        %v2041 = vadd.f32 %v1995, %v1996
        %v2042 = vrot.slane %v2041, 4
        %v2043 = vadd.f32 %v2041, %v2042
        %v2044 = vrot.slane %v2043, 2
        %v2045 = vadd.f32 %v2043, %v2044
        %v2046 = vrot.slane %v2045, 1
        %v2047 = vadd.f32 %v2045, %v2046
        %v2048 = vadd.f32 %v1997, %v1998
        %v2049 = vrot.slane %v2048, 4
        %v2050 = vadd.f32 %v2048, %v2049
        %v2051 = vrot.slane %v2050, 2
        %v2052 = vadd.f32 %v2050, %v2051
        %v2053 = vrot.slane %v2052, 1
        %v2054 = vadd.f32 %v2052, %v2053
        %v2063 = vsel %vm1686, %v2012, %v2005
        %v2064 = vsel %vm1688, %v2019, %v2063
        %v2065 = vsel %vm1690, %v2026, %v2064
        %v2066 = vsel %vm1692, %v2033, %v2065
        %v2067 = vsel %vm1694, %v2040, %v2066
        %v2068 = vsel %vm1696, %v2047, %v2067
        %v2069 = vsel %vm1698, %v2054, %v2068
        %2071 = vmatpush.msra.mxu0 %v946
        %2072 = vmatpush.msra.mxu0 %v945
        %2073 = vmatpush.msra.mxu0 %v944
        %2074 = vmatpush.msra.mxu0 %v943
        %2075 = vmatpush.msra.mxu0 %v942
        %2076 = vmatpush.msra.mxu0 %v941
        %2077 = vmatpush.msra.mxu0 %v940
        %2078 = vmatpush.msra.mxu0 %v939
        %2079 = vmatpush.msra.mxu0 %v938
        %2080 = vmatpush.msra.mxu0 %v937
        %2081 = vmatpush.msra.mxu0 %v936
        %2082 = vmatpush.msra.mxu0 %v935
        %2083 = vmatpush.msra.mxu0 %v934
        %2084 = vmatpush.msra.mxu0 %v933
        %2085 = vmatpush.msra.mxu0 %v932
        %2086 = vmatpush.msra.mxu0 %v931
        %2087 = vmatmul.f32.gmra.mxu0 %v2069
        %v2088 = vpop.f32.mrf.mxu0
        %v2089 = vadd.f32 %v1383, %v2088
        %2090 = vdwg.mxu0
        %v2091 = vtanh.pop %v2089
        %2092 = vst [vmem:[%s708] sm:$0xff] %v2091
        %s2093 = scalar_lea.vmem %s702, 24
        %v2094 = vld [vmem:[%s2093] sm:$0xff]
        %v2095 = vld [vmem:[%s2093 + $0x8] sm:$0xff]
        %v2096 = vld [vmem:[%s2093 + $0x10] sm:$0xff]
        %2097 = vmatpush.msra.mxu0 %v765
        %2098 = vmatpush.msra.mxu0 %v762
        %2099 = vmatpush.msra.mxu0 %v759
        %2100 = vmatpush.msra.mxu0 %v756
        %2101 = vmatpush.msra.mxu0 %v753
        %2102 = vmatpush.msra.mxu0 %v750
        %2103 = vmatpush.msra.mxu0 %v747
        %2104 = vmatpush.msra.mxu0 %v744
        %2105 = vmatpush.msra.mxu0 %v741
        %2106 = vmatpush.msra.mxu0 %v738
        %2107 = vmatpush.msra.mxu0 %v735
        %2108 = vmatpush.msra.mxu0 %v732
        %2109 = vmatpush.msra.mxu0 %v729
        %2110 = vmatpush.msra.mxu0 %v726
        %2111 = vmatpush.msra.mxu0 %v723
        %2112 = vmatpush.msra.mxu0 %v720
        %2113 = vmatmul.f32.gmra.mxu0 %v2091
        %v2114 = vpop.f32.mrf.mxu0
        %v2115 = vadd.f32 0.0, %v2114
        %2116 = vdwg.mxu0
        %2117 = vmatpush.msra.mxu0 %v766
        %2118 = vmatpush.msra.mxu0 %v763
        %2119 = vmatpush.msra.mxu0 %v760
        %2120 = vmatpush.msra.mxu0 %v757
        %2121 = vmatpush.msra.mxu0 %v754
        %2122 = vmatpush.msra.mxu0 %v751
        %2123 = vmatpush.msra.mxu0 %v748
        %2124 = vmatpush.msra.mxu0 %v745
        %2125 = vmatpush.msra.mxu0 %v742
        %2126 = vmatpush.msra.mxu0 %v739
        %2127 = vmatpush.msra.mxu0 %v736
        %2128 = vmatpush.msra.mxu0 %v733
        %2129 = vmatpush.msra.mxu0 %v730
        %2130 = vmatpush.msra.mxu0 %v727
        %2131 = vmatpush.msra.mxu0 %v724
        %2132 = vmatpush.msra.mxu0 %v721
        %2133 = vmatmul.f32.gmra.mxu0 %v2091
        %v2134 = vpop.f32.mrf.mxu0
        %v2135 = vadd.f32 0.0, %v2134
        %2136 = vdwg.mxu0
        %2137 = vmatpush.msra.mxu0 %v767
        %2138 = vmatpush.msra.mxu0 %v764
        %2139 = vmatpush.msra.mxu0 %v761
        %2140 = vmatpush.msra.mxu0 %v758
        %2141 = vmatpush.msra.mxu0 %v755
        %2142 = vmatpush.msra.mxu0 %v752
        %2143 = vmatpush.msra.mxu0 %v749
        %2144 = vmatpush.msra.mxu0 %v746
        %2145 = vmatpush.msra.mxu0 %v743
        %2146 = vmatpush.msra.mxu0 %v740
        %2147 = vmatpush.msra.mxu0 %v737
        %2148 = vmatpush.msra.mxu0 %v734
        %2149 = vmatpush.msra.mxu0 %v731
        %2150 = vmatpush.msra.mxu0 %v728
        %2151 = vmatpush.msra.mxu0 %v725
        %2152 = vmatpush.msra.mxu0 %v722
        %2153 = vmatmul.f32.gmra.mxu0 %v2091
        %v2154 = vpop.f32.mrf.mxu0
        %v2155 = vadd.f32 0.0, %v2154
        %2156 = vdwg.mxu0
        %v2157 = vadd.f32 %v2094, %v2115
        %v2158 = vadd.f32 %v2095, %v2135
        %v2159 = vadd.f32 %v2096, %v2155
        %2160 = vmatpush.msra.mxu0 %v813
        %2161 = vmatpush.msra.mxu0 %v810
        %2162 = vmatpush.msra.mxu0 %v807
        %2163 = vmatpush.msra.mxu0 %v804
        %2164 = vmatpush.msra.mxu0 %v801
        %2165 = vmatpush.msra.mxu0 %v798
        %2166 = vmatpush.msra.mxu0 %v795
        %2167 = vmatpush.msra.mxu0 %v792
        %2168 = vmatpush.msra.mxu0 %v789
        %2169 = vmatpush.msra.mxu0 %v786
        %2170 = vmatpush.msra.mxu0 %v783
        %2171 = vmatpush.msra.mxu0 %v780
        %2172 = vmatpush.msra.mxu0 %v777
        %2173 = vmatpush.msra.mxu0 %v774
        %2174 = vmatpush.msra.mxu0 %v771
        %2175 = vmatpush.msra.mxu0 %v768
        %2176 = vmatmul.f32.gmra.mxu0 %v1163
        %v2177 = vpop.f32.mrf.mxu0
        %v2178 = vadd.f32 %v1051, %v2177
        %2179 = vdwg.mxu0
        %2180 = vmatpush.msra.mxu0 %v814
        %2181 = vmatpush.msra.mxu0 %v811
        %2182 = vmatpush.msra.mxu0 %v808
        %2183 = vmatpush.msra.mxu0 %v805
        %2184 = vmatpush.msra.mxu0 %v802
        %2185 = vmatpush.msra.mxu0 %v799
        %2186 = vmatpush.msra.mxu0 %v796
        %2187 = vmatpush.msra.mxu0 %v793
        %2188 = vmatpush.msra.mxu0 %v790
        %2189 = vmatpush.msra.mxu0 %v787
        %2190 = vmatpush.msra.mxu0 %v784
        %2191 = vmatpush.msra.mxu0 %v781
        %2192 = vmatpush.msra.mxu0 %v778
        %2193 = vmatpush.msra.mxu0 %v775
        %2194 = vmatpush.msra.mxu0 %v772
        %2195 = vmatpush.msra.mxu0 %v769
        %2196 = vmatmul.f32.gmra.mxu0 %v1163
        %v2197 = vpop.f32.mrf.mxu0
        %v2198 = vadd.f32 %v1052, %v2197
        %2199 = vdwg.mxu0
        %2200 = vmatpush.msra.mxu0 %v815
        %2201 = vmatpush.msra.mxu0 %v812
        %2202 = vmatpush.msra.mxu0 %v809
        %2203 = vmatpush.msra.mxu0 %v806
        %2204 = vmatpush.msra.mxu0 %v803
        %2205 = vmatpush.msra.mxu0 %v800
        %2206 = vmatpush.msra.mxu0 %v797
        %2207 = vmatpush.msra.mxu0 %v794
        %2208 = vmatpush.msra.mxu0 %v791
        %2209 = vmatpush.msra.mxu0 %v788
        %2210 = vmatpush.msra.mxu0 %v785
        %2211 = vmatpush.msra.mxu0 %v782
        %2212 = vmatpush.msra.mxu0 %v779
        %2213 = vmatpush.msra.mxu0 %v776
        %2214 = vmatpush.msra.mxu0 %v773
        %2215 = vmatpush.msra.mxu0 %v770
        %2216 = vmatmul.f32.gmra.mxu0 %v1163
        %v2217 = vpop.f32.mrf.mxu0
        %v2218 = vadd.f32 %v1053, %v2217
        %2219 = vdwg.mxu0
        %v2220 = vadd.f32 %v2157, %v2178
        %v2221 = vxor.u32 %v2220, 2147483648
        %v2222 = vmul.f32 %v2221, 1.442695
        %v2223 = vpow.pop %v2222
        %v2224 = vadd.f32 %v2223, 1.0
        %v2225 = vrcp.pop %v2224
        %v2226 = vmul.f32 %v2224, %v2225
        %v2227 = vsub.f32 1.0, %v2226
        %v2228 = vmul.f32 %v2225, %v2227
        %v2229 = vadd.f32 %v2225, %v2228
        %vm2230 = vweird.f32 %v2224
        %vm2231 = vweird.f32 %v2225
        %vm2232 = vmor %vm2230, %vm2231
        %v2233 = vsel %vm2232, %v2225, %v2229
        %v2234 = vand.u32 2147483647, %v2224
        %vm2235 = vcmp.eq.f32.partialorder %v2234, 8.507059e+37
        %v2236 = vand.u32 %v2224, 2147483648
        %v2237 = vor.u32 1.1754944e-38, %v2236
        %v2238 = vsel %vm2235, %v2237, %v2233
        %v2239 = vmul.f32 1.0, %v2238
        %v2240 = vadd.f32 %v2158, %v2198
        %v2241 = vxor.u32 %v2240, 2147483648
        %v2242 = vmul.f32 %v2241, 1.442695
        %v2243 = vpow.pop %v2242
        %v2244 = vadd.f32 %v2243, 1.0
        %v2245 = vrcp.pop %v2244
        %v2246 = vmul.f32 %v2244, %v2245
        %v2247 = vsub.f32 1.0, %v2246
        %v2248 = vmul.f32 %v2245, %v2247
        %v2249 = vadd.f32 %v2245, %v2248
        %vm2250 = vweird.f32 %v2244
        %vm2251 = vweird.f32 %v2245
        %vm2252 = vmor %vm2250, %vm2251
        %v2253 = vsel %vm2252, %v2245, %v2249
        %v2254 = vand.u32 2147483647, %v2244
        %vm2255 = vcmp.eq.f32.partialorder %v2254, 8.507059e+37
        %v2256 = vand.u32 %v2244, 2147483648
        %v2257 = vor.u32 1.1754944e-38, %v2256
        %v2258 = vsel %vm2255, %v2257, %v2253
        %v2259 = vmul.f32 1.0, %v2258
        %v2260 = vmul.f32 %v2239, %v2218
        %v2261 = vadd.f32 %v2159, %v2260
        %v2262 = vtanh.pop %v2261
        %v2263 = vsub.f32 1.0, %v2259
        %v2264 = vmul.f32 %v2263, %v2262
        %v2265 = vmul.f32 %v2259, %v1163
        %v2266 = vadd.f32 %v2264, %v2265
        %2267 = vmatpush.msra.mxu0 %v862
        %2268 = vmatpush.msra.mxu0 %v859
        %2269 = vmatpush.msra.mxu0 %v856
        %2270 = vmatpush.msra.mxu0 %v853
        %2271 = vmatpush.msra.mxu0 %v850
        %2272 = vmatpush.msra.mxu0 %v847
        %2273 = vmatpush.msra.mxu0 %v844
        %2274 = vmatpush.msra.mxu0 %v841
        %2275 = vmatpush.msra.mxu0 %v838
        %2276 = vmatpush.msra.mxu0 %v835
        %2277 = vmatpush.msra.mxu0 %v832
        %2278 = vmatpush.msra.mxu0 %v829
        %2279 = vmatpush.msra.mxu0 %v826
        %2280 = vmatpush.msra.mxu0 %v823
        %2281 = vmatpush.msra.mxu0 %v820
        %2282 = vmatpush.msra.mxu0 %v817
        %2283 = vmatmul.f32.gmra.mxu0 %v2266
        %v2284 = vpop.f32.mrf.mxu0
        %v2285 = vadd.f32 %v1165, %v2284
        %2286 = vdwg.mxu0
        %2287 = vmatpush.msra.mxu0 %v863
        %2288 = vmatpush.msra.mxu0 %v860
        %2289 = vmatpush.msra.mxu0 %v857
        %2290 = vmatpush.msra.mxu0 %v854
        %2291 = vmatpush.msra.mxu0 %v851
        %2292 = vmatpush.msra.mxu0 %v848
        %2293 = vmatpush.msra.mxu0 %v845
        %2294 = vmatpush.msra.mxu0 %v842
        %2295 = vmatpush.msra.mxu0 %v839
        %2296 = vmatpush.msra.mxu0 %v836
        %2297 = vmatpush.msra.mxu0 %v833
        %2298 = vmatpush.msra.mxu0 %v830
        %2299 = vmatpush.msra.mxu0 %v827
        %2300 = vmatpush.msra.mxu0 %v824
        %2301 = vmatpush.msra.mxu0 %v821
        %2302 = vmatpush.msra.mxu0 %v818
        %2303 = vmatmul.f32.gmra.mxu0 %v2266
        %v2304 = vpop.f32.mrf.mxu0
        %v2305 = vadd.f32 %v1166, %v2304
        %2306 = vdwg.mxu0
        %2307 = vmatpush.msra.mxu0 %v864
        %2308 = vmatpush.msra.mxu0 %v861
        %2309 = vmatpush.msra.mxu0 %v858
        %2310 = vmatpush.msra.mxu0 %v855
        %2311 = vmatpush.msra.mxu0 %v852
        %2312 = vmatpush.msra.mxu0 %v849
        %2313 = vmatpush.msra.mxu0 %v846
        %2314 = vmatpush.msra.mxu0 %v843
        %2315 = vmatpush.msra.mxu0 %v840
        %2316 = vmatpush.msra.mxu0 %v837
        %2317 = vmatpush.msra.mxu0 %v834
        %2318 = vmatpush.msra.mxu0 %v831
        %2319 = vmatpush.msra.mxu0 %v828
        %2320 = vmatpush.msra.mxu0 %v825
        %2321 = vmatpush.msra.mxu0 %v822
        %2322 = vmatpush.msra.mxu0 %v819
        %2323 = vmatmul.f32.gmra.mxu0 %v2266
        %v2324 = vpop.f32.mrf.mxu0
        %v2325 = vadd.f32 %v1167, %v2324
        %2326 = vdwg.mxu0
        %2327 = vmatpush.msra.mxu0 %v911
        %2328 = vmatpush.msra.mxu0 %v908
        %2329 = vmatpush.msra.mxu0 %v905
        %2330 = vmatpush.msra.mxu0 %v902
        %2331 = vmatpush.msra.mxu0 %v899
        %2332 = vmatpush.msra.mxu0 %v896
        %2333 = vmatpush.msra.mxu0 %v893
        %2334 = vmatpush.msra.mxu0 %v890
        %2335 = vmatpush.msra.mxu0 %v887
        %2336 = vmatpush.msra.mxu0 %v884
        %2337 = vmatpush.msra.mxu0 %v881
        %2338 = vmatpush.msra.mxu0 %v878
        %2339 = vmatpush.msra.mxu0 %v875
        %2340 = vmatpush.msra.mxu0 %v872
        %2341 = vmatpush.msra.mxu0 %v869
        %2342 = vmatpush.msra.mxu0 %v866
        %2343 = vmatmul.f32.gmra.mxu0 %v1344
        %v2344 = vpop.f32.mrf.mxu0
        %v2345 = vadd.f32 %v1232, %v2344
        %2346 = vdwg.mxu0
        %2347 = vmatpush.msra.mxu0 %v912
        %2348 = vmatpush.msra.mxu0 %v909
        %2349 = vmatpush.msra.mxu0 %v906
        %2350 = vmatpush.msra.mxu0 %v903
        %2351 = vmatpush.msra.mxu0 %v900
        %2352 = vmatpush.msra.mxu0 %v897
        %2353 = vmatpush.msra.mxu0 %v894
        %2354 = vmatpush.msra.mxu0 %v891
        %2355 = vmatpush.msra.mxu0 %v888
        %2356 = vmatpush.msra.mxu0 %v885
        %2357 = vmatpush.msra.mxu0 %v882
        %2358 = vmatpush.msra.mxu0 %v879
        %2359 = vmatpush.msra.mxu0 %v876
        %2360 = vmatpush.msra.mxu0 %v873
        %2361 = vmatpush.msra.mxu0 %v870
        %2362 = vmatpush.msra.mxu0 %v867
        %2363 = vmatmul.f32.gmra.mxu0 %v1344
        %v2364 = vpop.f32.mrf.mxu0
        %v2365 = vadd.f32 %v1233, %v2364
        %2366 = vdwg.mxu0
        %2367 = vmatpush.msra.mxu0 %v913
        %2368 = vmatpush.msra.mxu0 %v910
        %2369 = vmatpush.msra.mxu0 %v907
        %2370 = vmatpush.msra.mxu0 %v904
        %2371 = vmatpush.msra.mxu0 %v901
        %2372 = vmatpush.msra.mxu0 %v898
        %2373 = vmatpush.msra.mxu0 %v895
        %2374 = vmatpush.msra.mxu0 %v892
        %2375 = vmatpush.msra.mxu0 %v889
        %2376 = vmatpush.msra.mxu0 %v886
        %2377 = vmatpush.msra.mxu0 %v883
        %2378 = vmatpush.msra.mxu0 %v880
        %2379 = vmatpush.msra.mxu0 %v877
        %2380 = vmatpush.msra.mxu0 %v874
        %2381 = vmatpush.msra.mxu0 %v871
        %2382 = vmatpush.msra.mxu0 %v868
        %2383 = vmatmul.f32.gmra.mxu0 %v1344
        %v2384 = vpop.f32.mrf.mxu0
        %v2385 = vadd.f32 %v1234, %v2384
        %2386 = vdwg.mxu0
        %v2387 = vadd.f32 %v2285, %v2345
        %v2388 = vxor.u32 %v2387, 2147483648
        %v2389 = vmul.f32 %v2388, 1.442695
        %v2390 = vpow.pop %v2389
        %v2391 = vadd.f32 %v2390, 1.0
        %v2392 = vrcp.pop %v2391
        %v2393 = vmul.f32 %v2391, %v2392
        %v2394 = vsub.f32 1.0, %v2393
        %v2395 = vmul.f32 %v2392, %v2394
        %v2396 = vadd.f32 %v2392, %v2395
        %vm2397 = vweird.f32 %v2391
        %vm2398 = vweird.f32 %v2392
        %vm2399 = vmor %vm2397, %vm2398
        %v2400 = vsel %vm2399, %v2392, %v2396
        %v2401 = vand.u32 2147483647, %v2391
        %vm2402 = vcmp.eq.f32.partialorder %v2401, 8.507059e+37
        %v2403 = vand.u32 %v2391, 2147483648
        %v2404 = vor.u32 1.1754944e-38, %v2403
        %v2405 = vsel %vm2402, %v2404, %v2400
        %v2406 = vmul.f32 1.0, %v2405
        %v2407 = vadd.f32 %v2305, %v2365
        %v2408 = vxor.u32 %v2407, 2147483648
        %v2409 = vmul.f32 %v2408, 1.442695
        %v2410 = vpow.pop %v2409
        %v2411 = vadd.f32 %v2410, 1.0
        %v2412 = vrcp.pop %v2411
        %v2413 = vmul.f32 %v2411, %v2412
        %v2414 = vsub.f32 1.0, %v2413
        %v2415 = vmul.f32 %v2412, %v2414
        %v2416 = vadd.f32 %v2412, %v2415
        %vm2417 = vweird.f32 %v2411
        %vm2418 = vweird.f32 %v2412
        %vm2419 = vmor %vm2417, %vm2418
        %v2420 = vsel %vm2419, %v2412, %v2416
        %v2421 = vand.u32 2147483647, %v2411
        %vm2422 = vcmp.eq.f32.partialorder %v2421, 8.507059e+37
        %v2423 = vand.u32 %v2411, 2147483648
        %v2424 = vor.u32 1.1754944e-38, %v2423
        %v2425 = vsel %vm2422, %v2424, %v2420
        %v2426 = vmul.f32 1.0, %v2425
        %v2427 = vmul.f32 %v2406, %v2385
        %v2428 = vadd.f32 %v2325, %v2427
        %v2429 = vtanh.pop %v2428
        %v2430 = vsub.f32 1.0, %v2426
        %v2431 = vmul.f32 %v2430, %v2429
        %v2432 = vmul.f32 %v2426, %v1344
        %v2433 = vadd.f32 %v2431, %v2432
        %2434 = vmatpush.msra.mxu0 %v930
        %2435 = vmatpush.msra.mxu0 %v929
        %2436 = vmatpush.msra.mxu0 %v928
        %2437 = vmatpush.msra.mxu0 %v927
        %2438 = vmatpush.msra.mxu0 %v926
        %2439 = vmatpush.msra.mxu0 %v925
        %2440 = vmatpush.msra.mxu0 %v924
        %2441 = vmatpush.msra.mxu0 %v923
        %2442 = vmatpush.msra.mxu0 %v922
        %2443 = vmatpush.msra.mxu0 %v921
        %2444 = vmatpush.msra.mxu0 %v920
        %2445 = vmatpush.msra.mxu0 %v919
        %2446 = vmatpush.msra.mxu0 %v918
        %2447 = vmatpush.msra.mxu0 %v917
        %2448 = vmatpush.msra.mxu0 %v916
        %2449 = vmatpush.msra.mxu0 %v915
        %2450 = vmatmul.f32.gmra.mxu0 %v2433
        %v2451 = vpop.f32.mrf.mxu0
        %v2452 = vadd.f32 0.0, %v2451
        %2453 = vdwg.mxu0
        %2454 = vmatpush.msra.mxu0 %v962
        %2455 = vmatpush.msra.mxu0 %v961
        %2456 = vmatpush.msra.mxu0 %v960
        %2457 = vmatpush.msra.mxu0 %v959
        %2458 = vmatpush.msra.mxu0 %v958
        %2459 = vmatpush.msra.mxu0 %v957
        %2460 = vmatpush.msra.mxu0 %v956
        %2461 = vmatpush.msra.mxu0 %v955
        %2462 = vmatpush.msra.mxu0 %v954
        %2463 = vmatpush.msra.mxu0 %v953
        %2464 = vmatpush.msra.mxu0 %v952
        %2465 = vmatpush.msra.mxu0 %v951
        %2466 = vmatpush.msra.mxu0 %v950
        %2467 = vmatpush.msra.mxu0 %v949
        %2468 = vmatpush.msra.mxu0 %v948
        %2469 = vmatpush.msra.mxu0 %v947
        %2470 = vmatmul.f32.gmra.mxu0 %v2433
        %v2471 = vpop.f32.mrf.mxu0
        %v2472 = vadd.f32 0.0, %v2471
        %2473 = vdwg.mxu0
        %v2475 = vrot.slane %v2452, 1
        %v2476 = vrot.slane %v2452, 2
        %v2477 = vrot.slane %v2452, 3
        %v2478 = vrot.slane %v2452, 4
        %v2479 = vrot.slane %v2452, 5
        %v2480 = vrot.slane %v2452, 6
        %v2481 = vrot.slane %v2452, 7
        %v2482 = vperm.slane %v2452, 0
        %v2483 = vperm.slane %v2475, 0
        %v2484 = vperm.slane %v2476, 0
        %v2485 = vperm.slane %v2477, 0
        %v2486 = vperm.slane %v2478, 0
        %v2487 = vperm.slane %v2479, 0
        %v2488 = vperm.slane %v2480, 0
        %v2489 = vperm.slane %v2481, 0
        %v2498 = vmul.f32 %v963, %v2482
        %v2499 = vmul.f32 %v964, %v2482
        %v2500 = vmul.f32 %v965, %v2483
        %v2501 = vmul.f32 %v966, %v2483
        %v2502 = vmul.f32 %v967, %v2484
        %v2503 = vmul.f32 %v968, %v2484
        %v2504 = vmul.f32 %v969, %v2485
        %v2505 = vmul.f32 %v970, %v2485
        %v2506 = vmul.f32 %v971, %v2486
        %v2507 = vmul.f32 %v972, %v2486
        %v2508 = vmul.f32 %v973, %v2487
        %v2509 = vmul.f32 %v974, %v2487
        %v2510 = vmul.f32 %v975, %v2488
        %v2511 = vmul.f32 %v976, %v2488
        %v2512 = vmul.f32 %v977, %v2489
        %v2513 = vmul.f32 %v978, %v2489
        %2514 = vadd.xlane.f32.xlu0 %v2498
        %v2515 = vpop.xlane.xlu0 %2514
        %2516 = vadd.xlane.f32.xlu0 %v2499
        %v2517 = vpop.xlane.xlu0 %2516
        %2518 = vadd.xlane.f32.xlu0 %v2500
        %v2519 = vpop.xlane.xlu0 %2518
        %2520 = vadd.xlane.f32.xlu0 %v2501
        %v2521 = vpop.xlane.xlu0 %2520
        %2522 = vadd.xlane.f32.xlu0 %v2502
        %v2523 = vpop.xlane.xlu0 %2522
        %2524 = vadd.xlane.f32.xlu0 %v2503
        %v2525 = vpop.xlane.xlu0 %2524
        %2526 = vadd.xlane.f32.xlu0 %v2504
        %v2527 = vpop.xlane.xlu0 %2526
        %2528 = vadd.xlane.f32.xlu0 %v2505
        %v2529 = vpop.xlane.xlu0 %2528
        %2530 = vadd.xlane.f32.xlu0 %v2506
        %v2531 = vpop.xlane.xlu0 %2530
        %2532 = vadd.xlane.f32.xlu0 %v2507
        %v2533 = vpop.xlane.xlu0 %2532
        %2534 = vadd.xlane.f32.xlu0 %v2508
        %v2535 = vpop.xlane.xlu0 %2534
        %2536 = vadd.xlane.f32.xlu0 %v2509
        %v2537 = vpop.xlane.xlu0 %2536
        %2538 = vadd.xlane.f32.xlu0 %v2510
        %v2539 = vpop.xlane.xlu0 %2538
        %2540 = vadd.xlane.f32.xlu0 %v2511
        %v2541 = vpop.xlane.xlu0 %2540
        %2542 = vadd.xlane.f32.xlu0 %v2512
        %v2543 = vpop.xlane.xlu0 %2542
        %2544 = vadd.xlane.f32.xlu0 %v2513
        %v2545 = vpop.xlane.xlu0 %2544
        %v2546 = vadd.f32 %v2515, %v1464
        %v2547 = vadd.f32 %v2517, %v1470
        %v2548 = vadd.f32 %v2519, %v1477
        %v2549 = vadd.f32 %v2521, %v1483
        %v2550 = vadd.f32 %v2523, %v1490
        %v2551 = vadd.f32 %v2525, %v1496
        %v2552 = vadd.f32 %v2527, %v1503
        %v2553 = vadd.f32 %v2529, %v1509
        %v2554 = vadd.f32 %v2531, %v1516
        %v2555 = vadd.f32 %v2533, %v1522
        %v2556 = vadd.f32 %v2535, %v1529
        %v2557 = vadd.f32 %v2537, %v1535
        %v2558 = vadd.f32 %v2539, %v1542
        %v2559 = vadd.f32 %v2541, %v1548
        %v2560 = vadd.f32 %v2543, %v1555
        %v2561 = vadd.f32 %v2545, %v1561
        %2578 = vset.pattern.permute.xlu0 0
        %2579 = vperm.xlu0 %2578, %v2546
        %v2580 = vpop.permute.xlu0 %2579
        %2581 = vset.pattern.permute.xlu0 0
        %2582 = vperm.xlu0 %2581, %v2547
        %v2583 = vpop.permute.xlu0 %2582
        %2584 = vset.pattern.permute.xlu0 0
        %2585 = vperm.xlu0 %2584, %v2548
        %v2586 = vpop.permute.xlu0 %2585
        %2587 = vset.pattern.permute.xlu0 0
        %2588 = vperm.xlu0 %2587, %v2549
        %v2589 = vpop.permute.xlu0 %2588
        %2590 = vset.pattern.permute.xlu0 0
        %2591 = vperm.xlu0 %2590, %v2550
        %v2592 = vpop.permute.xlu0 %2591
        %2593 = vset.pattern.permute.xlu0 0
        %2594 = vperm.xlu0 %2593, %v2551
        %v2595 = vpop.permute.xlu0 %2594
        %2596 = vset.pattern.permute.xlu0 0
        %2597 = vperm.xlu0 %2596, %v2552
        %v2598 = vpop.permute.xlu0 %2597
        %2599 = vset.pattern.permute.xlu0 0
        %2600 = vperm.xlu0 %2599, %v2553
        %v2601 = vpop.permute.xlu0 %2600
        %2602 = vset.pattern.permute.xlu0 0
        %2603 = vperm.xlu0 %2602, %v2554
        %v2604 = vpop.permute.xlu0 %2603
        %2605 = vset.pattern.permute.xlu0 0
        %2606 = vperm.xlu0 %2605, %v2555
        %v2607 = vpop.permute.xlu0 %2606
        %2608 = vset.pattern.permute.xlu0 0
        %2609 = vperm.xlu0 %2608, %v2556
        %v2610 = vpop.permute.xlu0 %2609
        %2611 = vset.pattern.permute.xlu0 0
        %2612 = vperm.xlu0 %2611, %v2557
        %v2613 = vpop.permute.xlu0 %2612
        %2614 = vset.pattern.permute.xlu0 0
        %2615 = vperm.xlu0 %2614, %v2558
        %v2616 = vpop.permute.xlu0 %2615
        %2617 = vset.pattern.permute.xlu0 0
        %2618 = vperm.xlu0 %2617, %v2559
        %v2619 = vpop.permute.xlu0 %2618
        %2620 = vset.pattern.permute.xlu0 0
        %2621 = vperm.xlu0 %2620, %v2560
        %v2622 = vpop.permute.xlu0 %2621
        %2623 = vset.pattern.permute.xlu0 0
        %2624 = vperm.xlu0 %2623, %v2561
        %v2625 = vpop.permute.xlu0 %2624
        %v2626 = vperm.slane %v2580, %v1659
        %v2627 = vperm.slane %v2583, %v1661
        %v2628 = vsel %vm1663, %v2627, %v2626
        %v2629 = vperm.slane %v2586, %v1659
        %v2630 = vperm.slane %v2589, %v1661
        %v2631 = vsel %vm1663, %v2630, %v2629
        %v2632 = vperm.slane %v2592, %v1659
        %v2633 = vperm.slane %v2595, %v1661
        %v2634 = vsel %vm1663, %v2633, %v2632
        %v2635 = vperm.slane %v2598, %v1659
        %v2636 = vperm.slane %v2601, %v1661
        %v2637 = vsel %vm1663, %v2636, %v2635
        %v2638 = vperm.slane %v2604, %v1659
        %v2639 = vperm.slane %v2607, %v1661
        %v2640 = vsel %vm1663, %v2639, %v2638
        %v2641 = vperm.slane %v2610, %v1659
        %v2642 = vperm.slane %v2613, %v1661
        %v2643 = vsel %vm1663, %v2642, %v2641
        %v2644 = vperm.slane %v2616, %v1659
        %v2645 = vperm.slane %v2619, %v1661
        %v2646 = vsel %vm1663, %v2645, %v2644
        %v2647 = vperm.slane %v2622, %v1659
        %v2648 = vperm.slane %v2625, %v1661
        %v2649 = vsel %vm1663, %v2648, %v2647
        %v2650 = vsel %vm1686, %v2631, %v2628
        %v2651 = vsel %vm1688, %v2634, %v2650
        %v2652 = vsel %vm1690, %v2637, %v2651
        %v2653 = vsel %vm1692, %v2640, %v2652
        %v2654 = vsel %vm1694, %v2643, %v2653
        %v2655 = vsel %vm1696, %v2646, %v2654
        %v2656 = vsel %vm1698, %v2649, %v2655
        %v2658 = vsel %vm1701, %v2656, -inf
        %2659 = vmax.xlane.f32.xlu0 %v2658
        %v2660 = vpop.xlane.xlu0 %2659
        %v2662 = vperm.slane %v2660, 0
        %v2663 = vperm.slane %v2660, 1
        %v2664 = vperm.slane %v2660, 2
        %v2665 = vperm.slane %v2660, 3
        %v2666 = vperm.slane %v2660, 4
        %v2667 = vperm.slane %v2660, 5
        %v2668 = vperm.slane %v2660, 6
        %v2669 = vperm.slane %v2660, 7
        %v2678 = vsub.f32 %v2546, %v2662
        %v2679 = vsub.f32 %v2547, %v2662
        %v2680 = vsub.f32 %v2548, %v2663
        %v2681 = vsub.f32 %v2549, %v2663
        %v2682 = vsub.f32 %v2550, %v2664
        %v2683 = vsub.f32 %v2551, %v2664
        %v2684 = vsub.f32 %v2552, %v2665
        %v2685 = vsub.f32 %v2553, %v2665
        %v2686 = vsub.f32 %v2554, %v2666
        %v2687 = vsub.f32 %v2555, %v2666
        %v2688 = vsub.f32 %v2556, %v2667
        %v2689 = vsub.f32 %v2557, %v2667
        %v2690 = vsub.f32 %v2558, %v2668
        %v2691 = vsub.f32 %v2559, %v2668
        %v2692 = vsub.f32 %v2560, %v2669
        %v2693 = vsub.f32 %v2561, %v2669
        %v2694 = vmul.f32 %v2678, 1.442695
        %v2695 = vpow.pop %v2694
        %v2696 = vmul.f32 %v2679, 1.442695
        %v2697 = vpow.pop %v2696
        %v2698 = vmul.f32 %v2680, 1.442695
        %v2699 = vpow.pop %v2698
        %v2700 = vmul.f32 %v2681, 1.442695
        %v2701 = vpow.pop %v2700
        %v2702 = vmul.f32 %v2682, 1.442695
        %v2703 = vpow.pop %v2702
        %v2704 = vmul.f32 %v2683, 1.442695
        %v2705 = vpow.pop %v2704
        %v2706 = vmul.f32 %v2684, 1.442695
        %v2707 = vpow.pop %v2706
        %v2708 = vmul.f32 %v2685, 1.442695
        %v2709 = vpow.pop %v2708
        %v2710 = vmul.f32 %v2686, 1.442695
        %v2711 = vpow.pop %v2710
        %v2712 = vmul.f32 %v2687, 1.442695
        %v2713 = vpow.pop %v2712
        %v2714 = vmul.f32 %v2688, 1.442695
        %v2715 = vpow.pop %v2714
        %v2716 = vmul.f32 %v2689, 1.442695
        %v2717 = vpow.pop %v2716
        %v2718 = vmul.f32 %v2690, 1.442695
        %v2719 = vpow.pop %v2718
        %v2720 = vmul.f32 %v2691, 1.442695
        %v2721 = vpow.pop %v2720
        %v2722 = vmul.f32 %v2692, 1.442695
        %v2723 = vpow.pop %v2722
        %v2724 = vmul.f32 %v2693, 1.442695
        %v2725 = vpow.pop %v2724
        %2742 = vset.pattern.permute.xlu0 0
        %2743 = vperm.xlu0 %2742, %v2695
        %v2744 = vpop.permute.xlu0 %2743
        %2745 = vset.pattern.permute.xlu0 0
        %2746 = vperm.xlu0 %2745, %v2697
        %v2747 = vpop.permute.xlu0 %2746
        %2748 = vset.pattern.permute.xlu0 0
        %2749 = vperm.xlu0 %2748, %v2699
        %v2750 = vpop.permute.xlu0 %2749
        %2751 = vset.pattern.permute.xlu0 0
        %2752 = vperm.xlu0 %2751, %v2701
        %v2753 = vpop.permute.xlu0 %2752
        %2754 = vset.pattern.permute.xlu0 0
        %2755 = vperm.xlu0 %2754, %v2703
        %v2756 = vpop.permute.xlu0 %2755
        %2757 = vset.pattern.permute.xlu0 0
        %2758 = vperm.xlu0 %2757, %v2705
        %v2759 = vpop.permute.xlu0 %2758
        %2760 = vset.pattern.permute.xlu0 0
        %2761 = vperm.xlu0 %2760, %v2707
        %v2762 = vpop.permute.xlu0 %2761
        %2763 = vset.pattern.permute.xlu0 0
        %2764 = vperm.xlu0 %2763, %v2709
        %v2765 = vpop.permute.xlu0 %2764
        %2766 = vset.pattern.permute.xlu0 0
        %2767 = vperm.xlu0 %2766, %v2711
        %v2768 = vpop.permute.xlu0 %2767
        %2769 = vset.pattern.permute.xlu0 0
        %2770 = vperm.xlu0 %2769, %v2713
        %v2771 = vpop.permute.xlu0 %2770
        %2772 = vset.pattern.permute.xlu0 0
        %2773 = vperm.xlu0 %2772, %v2715
        %v2774 = vpop.permute.xlu0 %2773
        %2775 = vset.pattern.permute.xlu0 0
        %2776 = vperm.xlu0 %2775, %v2717
        %v2777 = vpop.permute.xlu0 %2776
        %2778 = vset.pattern.permute.xlu0 0
        %2779 = vperm.xlu0 %2778, %v2719
        %v2780 = vpop.permute.xlu0 %2779
        %2781 = vset.pattern.permute.xlu0 0
        %2782 = vperm.xlu0 %2781, %v2721
        %v2783 = vpop.permute.xlu0 %2782
        %2784 = vset.pattern.permute.xlu0 0
        %2785 = vperm.xlu0 %2784, %v2723
        %v2786 = vpop.permute.xlu0 %2785
        %2787 = vset.pattern.permute.xlu0 0
        %2788 = vperm.xlu0 %2787, %v2725
        %v2789 = vpop.permute.xlu0 %2788
        %v2790 = vperm.slane %v2744, %v1659
        %v2791 = vperm.slane %v2747, %v1661
        %v2792 = vsel %vm1663, %v2791, %v2790
        %v2793 = vperm.slane %v2750, %v1659
        %v2794 = vperm.slane %v2753, %v1661
        %v2795 = vsel %vm1663, %v2794, %v2793
        %v2796 = vperm.slane %v2756, %v1659
        %v2797 = vperm.slane %v2759, %v1661
        %v2798 = vsel %vm1663, %v2797, %v2796
        %v2799 = vperm.slane %v2762, %v1659
        %v2800 = vperm.slane %v2765, %v1661
        %v2801 = vsel %vm1663, %v2800, %v2799
        %v2802 = vperm.slane %v2768, %v1659
        %v2803 = vperm.slane %v2771, %v1661
        %v2804 = vsel %vm1663, %v2803, %v2802
        %v2805 = vperm.slane %v2774, %v1659
        %v2806 = vperm.slane %v2777, %v1661
        %v2807 = vsel %vm1663, %v2806, %v2805
        %v2808 = vperm.slane %v2780, %v1659
        %v2809 = vperm.slane %v2783, %v1661
        %v2810 = vsel %vm1663, %v2809, %v2808
        %v2811 = vperm.slane %v2786, %v1659
        %v2812 = vperm.slane %v2789, %v1661
        %v2813 = vsel %vm1663, %v2812, %v2811
        %v2814 = vsel %vm1686, %v2795, %v2792
        %v2815 = vsel %vm1688, %v2798, %v2814
        %v2816 = vsel %vm1690, %v2801, %v2815
        %v2817 = vsel %vm1692, %v2804, %v2816
        %v2818 = vsel %vm1694, %v2807, %v2817
        %v2819 = vsel %vm1696, %v2810, %v2818
        %v2820 = vsel %vm1698, %v2813, %v2819
        %v2822 = vsel %vm1701, %v2820, 0.0
        %2823 = vadd.xlane.f32.xlu0 %v2822
        %v2824 = vpop.xlane.xlu0 %2823
        %v2825 = vrcp.pop %v2824
        %v2827 = vperm.slane %v2825, 0
        %v2828 = vperm.slane %v2825, 1
        %v2829 = vperm.slane %v2825, 2
        %v2830 = vperm.slane %v2825, 3
        %v2831 = vperm.slane %v2825, 4
        %v2832 = vperm.slane %v2825, 5
        %v2833 = vperm.slane %v2825, 6
        %v2834 = vperm.slane %v2825, 7
        %v2843 = vmul.f32 %v2695, %v2827
        %v2844 = vmul.f32 %v2697, %v2827
        %v2845 = vmul.f32 %v2699, %v2828
        %v2846 = vmul.f32 %v2701, %v2828
        %v2847 = vmul.f32 %v2703, %v2829
        %v2848 = vmul.f32 %v2705, %v2829
        %v2849 = vmul.f32 %v2707, %v2830
        %v2850 = vmul.f32 %v2709, %v2830
        %v2851 = vmul.f32 %v2711, %v2831
        %v2852 = vmul.f32 %v2713, %v2831
        %v2853 = vmul.f32 %v2715, %v2832
        %v2854 = vmul.f32 %v2717, %v2832
        %v2855 = vmul.f32 %v2719, %v2833
        %v2856 = vmul.f32 %v2721, %v2833
        %v2857 = vmul.f32 %v2723, %v2834
        %v2858 = vmul.f32 %v2725, %v2834
        %2860 = vset.pattern.permute.xlu0 0
        %2861 = vperm.xlu0 %2860, %v2843
        %v2862 = vpop.permute.xlu0 %2861
        %2865 = vset.pattern.permute.xlu0 0
        %2866 = vperm.xlu0 %2865, %v2844
        %v2867 = vpop.permute.xlu0 %2866
        %2870 = vset.pattern.permute.xlu0 0
        %2871 = vperm.xlu0 %2870, %v2845
        %v2872 = vpop.permute.xlu0 %2871
        %2875 = vset.pattern.permute.xlu0 0
        %2876 = vperm.xlu0 %2875, %v2846
        %v2877 = vpop.permute.xlu0 %2876
        %2880 = vset.pattern.permute.xlu0 0
        %2881 = vperm.xlu0 %2880, %v2847
        %v2882 = vpop.permute.xlu0 %2881
        %2885 = vset.pattern.permute.xlu0 0
        %2886 = vperm.xlu0 %2885, %v2848
        %v2887 = vpop.permute.xlu0 %2886
        %2890 = vset.pattern.permute.xlu0 0
        %2891 = vperm.xlu0 %2890, %v2849
        %v2892 = vpop.permute.xlu0 %2891
        %2895 = vset.pattern.permute.xlu0 0
        %2896 = vperm.xlu0 %2895, %v2850
        %v2897 = vpop.permute.xlu0 %2896
        %2900 = vset.pattern.permute.xlu0 0
        %2901 = vperm.xlu0 %2900, %v2851
        %v2902 = vpop.permute.xlu0 %2901
        %2905 = vset.pattern.permute.xlu0 0
        %2906 = vperm.xlu0 %2905, %v2852
        %v2907 = vpop.permute.xlu0 %2906
        %2910 = vset.pattern.permute.xlu0 0
        %2911 = vperm.xlu0 %2910, %v2853
        %v2912 = vpop.permute.xlu0 %2911
        %2915 = vset.pattern.permute.xlu0 0
        %2916 = vperm.xlu0 %2915, %v2854
        %v2917 = vpop.permute.xlu0 %2916
        %2920 = vset.pattern.permute.xlu0 0
        %2921 = vperm.xlu0 %2920, %v2855
        %v2922 = vpop.permute.xlu0 %2921
        %2925 = vset.pattern.permute.xlu0 0
        %2926 = vperm.xlu0 %2925, %v2856
        %v2927 = vpop.permute.xlu0 %2926
        %2930 = vset.pattern.permute.xlu0 0
        %2931 = vperm.xlu0 %2930, %v2857
        %v2932 = vpop.permute.xlu0 %2931
        %2935 = vset.pattern.permute.xlu0 0
        %2936 = vperm.xlu0 %2935, %v2858
        %v2937 = vpop.permute.xlu0 %2936
        %v2939 = vmul.f32 %v2862, %v963
        %v2940 = vmul.f32 %v2867, %v964
        %v2941 = vmul.f32 %v2872, %v965
        %v2942 = vmul.f32 %v2877, %v966
        %v2943 = vmul.f32 %v2882, %v967
        %v2944 = vmul.f32 %v2887, %v968
        %v2945 = vmul.f32 %v2892, %v969
        %v2946 = vmul.f32 %v2897, %v970
        %v2947 = vmul.f32 %v2902, %v971
        %v2948 = vmul.f32 %v2907, %v972
        %v2949 = vmul.f32 %v2912, %v973
        %v2950 = vmul.f32 %v2917, %v974
        %v2951 = vmul.f32 %v2922, %v975
        %v2952 = vmul.f32 %v2927, %v976
        %v2953 = vmul.f32 %v2932, %v977
        %v2954 = vmul.f32 %v2937, %v978
        %v2955 = vadd.f32 %v2939, %v2940
        %v2956 = vrot.slane %v2955, 4
        %v2957 = vadd.f32 %v2955, %v2956
        %v2958 = vrot.slane %v2957, 2
        %v2959 = vadd.f32 %v2957, %v2958
        %v2960 = vrot.slane %v2959, 1
        %v2961 = vadd.f32 %v2959, %v2960
        %v2962 = vadd.f32 %v2941, %v2942
        %v2963 = vrot.slane %v2962, 4
        %v2964 = vadd.f32 %v2962, %v2963
        %v2965 = vrot.slane %v2964, 2
        %v2966 = vadd.f32 %v2964, %v2965
        %v2967 = vrot.slane %v2966, 1
        %v2968 = vadd.f32 %v2966, %v2967
        %v2969 = vadd.f32 %v2943, %v2944
        %v2970 = vrot.slane %v2969, 4
        %v2971 = vadd.f32 %v2969, %v2970
        %v2972 = vrot.slane %v2971, 2
        %v2973 = vadd.f32 %v2971, %v2972
        %v2974 = vrot.slane %v2973, 1
        %v2975 = vadd.f32 %v2973, %v2974
        %v2976 = vadd.f32 %v2945, %v2946
        %v2977 = vrot.slane %v2976, 4
        %v2978 = vadd.f32 %v2976, %v2977
        %v2979 = vrot.slane %v2978, 2
        %v2980 = vadd.f32 %v2978, %v2979
        %v2981 = vrot.slane %v2980, 1
        %v2982 = vadd.f32 %v2980, %v2981
        %v2983 = vadd.f32 %v2947, %v2948
        %v2984 = vrot.slane %v2983, 4
        %v2985 = vadd.f32 %v2983, %v2984
        %v2986 = vrot.slane %v2985, 2
        %v2987 = vadd.f32 %v2985, %v2986
        %v2988 = vrot.slane %v2987, 1
        %v2989 = vadd.f32 %v2987, %v2988
        %v2990 = vadd.f32 %v2949, %v2950
        %v2991 = vrot.slane %v2990, 4
        %v2992 = vadd.f32 %v2990, %v2991
        %v2993 = vrot.slane %v2992, 2
        %v2994 = vadd.f32 %v2992, %v2993
        %v2995 = vrot.slane %v2994, 1
        %v2996 = vadd.f32 %v2994, %v2995
        %v2997 = vadd.f32 %v2951, %v2952
        %v2998 = vrot.slane %v2997, 4
        %v2999 = vadd.f32 %v2997, %v2998
        %v3000 = vrot.slane %v2999, 2
        %v3001 = vadd.f32 %v2999, %v3000
        %v3002 = vrot.slane %v3001, 1
        %v3003 = vadd.f32 %v3001, %v3002
        %v3004 = vadd.f32 %v2953, %v2954
        %v3005 = vrot.slane %v3004, 4
        %v3006 = vadd.f32 %v3004, %v3005
        %v3007 = vrot.slane %v3006, 2
        %v3008 = vadd.f32 %v3006, %v3007
        %v3009 = vrot.slane %v3008, 1
        %v3010 = vadd.f32 %v3008, %v3009
        %v3019 = vsel %vm1686, %v2968, %v2961
        %v3020 = vsel %vm1688, %v2975, %v3019
        %v3021 = vsel %vm1690, %v2982, %v3020
        %v3022 = vsel %vm1692, %v2989, %v3021
        %v3023 = vsel %vm1694, %v2996, %v3022
        %v3024 = vsel %vm1696, %v3003, %v3023
        %v3025 = vsel %vm1698, %v3010, %v3024
        %3027 = vmatpush.msra.mxu0 %v946
        %3028 = vmatpush.msra.mxu0 %v945
        %3029 = vmatpush.msra.mxu0 %v944
        %3030 = vmatpush.msra.mxu0 %v943
        %3031 = vmatpush.msra.mxu0 %v942
        %3032 = vmatpush.msra.mxu0 %v941
        %3033 = vmatpush.msra.mxu0 %v940
        %3034 = vmatpush.msra.mxu0 %v939
        %3035 = vmatpush.msra.mxu0 %v938
        %3036 = vmatpush.msra.mxu0 %v937
        %3037 = vmatpush.msra.mxu0 %v936
        %3038 = vmatpush.msra.mxu0 %v935
        %3039 = vmatpush.msra.mxu0 %v934
        %3040 = vmatpush.msra.mxu0 %v933
        %3041 = vmatpush.msra.mxu0 %v932
        %3042 = vmatpush.msra.mxu0 %v931
        %3043 = vmatmul.f32.gmra.mxu0 %v3025
        %v3044 = vpop.f32.mrf.mxu0
        %v3045 = vadd.f32 %v2472, %v3044
        %3046 = vdwg.mxu0
        %v3047 = vtanh.pop %v3045
        %s3048 = scalar_lea.vmem %s708, 8
        %3049 = vst [vmem:[%s3048] sm:$0xff] %v3047
        %s3050 = scalar_lea.vmem %s702, 48
        %v3051 = vld [vmem:[%s3050] sm:$0xff]
        %v3052 = vld [vmem:[%s3050 + $0x8] sm:$0xff]
        %v3053 = vld [vmem:[%s3050 + $0x10] sm:$0xff]
        %3054 = vmatpush.msra.mxu0 %v765
        %3055 = vmatpush.msra.mxu0 %v762
        %3056 = vmatpush.msra.mxu0 %v759
        %3057 = vmatpush.msra.mxu0 %v756
        %3058 = vmatpush.msra.mxu0 %v753
        %3059 = vmatpush.msra.mxu0 %v750
        %3060 = vmatpush.msra.mxu0 %v747
        %3061 = vmatpush.msra.mxu0 %v744
        %3062 = vmatpush.msra.mxu0 %v741
        %3063 = vmatpush.msra.mxu0 %v738
        %3064 = vmatpush.msra.mxu0 %v735
        %3065 = vmatpush.msra.mxu0 %v732
        %3066 = vmatpush.msra.mxu0 %v729
        %3067 = vmatpush.msra.mxu0 %v726
        %3068 = vmatpush.msra.mxu0 %v723
        %3069 = vmatpush.msra.mxu0 %v720
        %3070 = vmatmul.f32.gmra.mxu0 %v3047
        %v3071 = vpop.f32.mrf.mxu0
        %v3072 = vadd.f32 0.0, %v3071
        %3073 = vdwg.mxu0
        %3074 = vmatpush.msra.mxu0 %v766
        %3075 = vmatpush.msra.mxu0 %v763
        %3076 = vmatpush.msra.mxu0 %v760
        %3077 = vmatpush.msra.mxu0 %v757
        %3078 = vmatpush.msra.mxu0 %v754
        %3079 = vmatpush.msra.mxu0 %v751
        %3080 = vmatpush.msra.mxu0 %v748
        %3081 = vmatpush.msra.mxu0 %v745
        %3082 = vmatpush.msra.mxu0 %v742
        %3083 = vmatpush.msra.mxu0 %v739
        %3084 = vmatpush.msra.mxu0 %v736
        %3085 = vmatpush.msra.mxu0 %v733
        %3086 = vmatpush.msra.mxu0 %v730
        %3087 = vmatpush.msra.mxu0 %v727
        %3088 = vmatpush.msra.mxu0 %v724
        %3089 = vmatpush.msra.mxu0 %v721
        %3090 = vmatmul.f32.gmra.mxu0 %v3047
        %v3091 = vpop.f32.mrf.mxu0
        %v3092 = vadd.f32 0.0, %v3091
        %3093 = vdwg.mxu0
        %3094 = vmatpush.msra.mxu0 %v767
        %3095 = vmatpush.msra.mxu0 %v764
        %3096 = vmatpush.msra.mxu0 %v761
        %3097 = vmatpush.msra.mxu0 %v758
        %3098 = vmatpush.msra.mxu0 %v755
        %3099 = vmatpush.msra.mxu0 %v752
        %3100 = vmatpush.msra.mxu0 %v749
        %3101 = vmatpush.msra.mxu0 %v746
        %3102 = vmatpush.msra.mxu0 %v743
        %3103 = vmatpush.msra.mxu0 %v740
        %3104 = vmatpush.msra.mxu0 %v737
        %3105 = vmatpush.msra.mxu0 %v734
        %3106 = vmatpush.msra.mxu0 %v731
        %3107 = vmatpush.msra.mxu0 %v728
        %3108 = vmatpush.msra.mxu0 %v725
        %3109 = vmatpush.msra.mxu0 %v722
        %3110 = vmatmul.f32.gmra.mxu0 %v3047
        %v3111 = vpop.f32.mrf.mxu0
        %v3112 = vadd.f32 0.0, %v3111
        %3113 = vdwg.mxu0
        %v3114 = vadd.f32 %v3051, %v3072
        %v3115 = vadd.f32 %v3052, %v3092
        %v3116 = vadd.f32 %v3053, %v3112
        %3117 = vmatpush.msra.mxu0 %v813
        %3118 = vmatpush.msra.mxu0 %v810
        %3119 = vmatpush.msra.mxu0 %v807
        %3120 = vmatpush.msra.mxu0 %v804
        %3121 = vmatpush.msra.mxu0 %v801
        %3122 = vmatpush.msra.mxu0 %v798
        %3123 = vmatpush.msra.mxu0 %v795
        %3124 = vmatpush.msra.mxu0 %v792
        %3125 = vmatpush.msra.mxu0 %v789
        %3126 = vmatpush.msra.mxu0 %v786
        %3127 = vmatpush.msra.mxu0 %v783
        %3128 = vmatpush.msra.mxu0 %v780
        %3129 = vmatpush.msra.mxu0 %v777
        %3130 = vmatpush.msra.mxu0 %v774
        %3131 = vmatpush.msra.mxu0 %v771
        %3132 = vmatpush.msra.mxu0 %v768
        %3133 = vmatmul.f32.gmra.mxu0 %v2266
        %v3134 = vpop.f32.mrf.mxu0
        %v3135 = vadd.f32 %v1051, %v3134
        %3136 = vdwg.mxu0
        %3137 = vmatpush.msra.mxu0 %v814
        %3138 = vmatpush.msra.mxu0 %v811
        %3139 = vmatpush.msra.mxu0 %v808
        %3140 = vmatpush.msra.mxu0 %v805
        %3141 = vmatpush.msra.mxu0 %v802
        %3142 = vmatpush.msra.mxu0 %v799
        %3143 = vmatpush.msra.mxu0 %v796
        %3144 = vmatpush.msra.mxu0 %v793
        %3145 = vmatpush.msra.mxu0 %v790
        %3146 = vmatpush.msra.mxu0 %v787
        %3147 = vmatpush.msra.mxu0 %v784
        %3148 = vmatpush.msra.mxu0 %v781
        %3149 = vmatpush.msra.mxu0 %v778
        %3150 = vmatpush.msra.mxu0 %v775
        %3151 = vmatpush.msra.mxu0 %v772
        %3152 = vmatpush.msra.mxu0 %v769
        %3153 = vmatmul.f32.gmra.mxu0 %v2266
        %v3154 = vpop.f32.mrf.mxu0
        %v3155 = vadd.f32 %v1052, %v3154
        %3156 = vdwg.mxu0
        %3157 = vmatpush.msra.mxu0 %v815
        %3158 = vmatpush.msra.mxu0 %v812
        %3159 = vmatpush.msra.mxu0 %v809
        %3160 = vmatpush.msra.mxu0 %v806
        %3161 = vmatpush.msra.mxu0 %v803
        %3162 = vmatpush.msra.mxu0 %v800
        %3163 = vmatpush.msra.mxu0 %v797
        %3164 = vmatpush.msra.mxu0 %v794
        %3165 = vmatpush.msra.mxu0 %v791
        %3166 = vmatpush.msra.mxu0 %v788
        %3167 = vmatpush.msra.mxu0 %v785
        %3168 = vmatpush.msra.mxu0 %v782
        %3169 = vmatpush.msra.mxu0 %v779
        %3170 = vmatpush.msra.mxu0 %v776
        %3171 = vmatpush.msra.mxu0 %v773
        %3172 = vmatpush.msra.mxu0 %v770
        %3173 = vmatmul.f32.gmra.mxu0 %v2266
        %v3174 = vpop.f32.mrf.mxu0
        %v3175 = vadd.f32 %v1053, %v3174
        %3176 = vdwg.mxu0
        %v3177 = vadd.f32 %v3114, %v3135
        %v3178 = vxor.u32 %v3177, 2147483648
        %v3179 = vmul.f32 %v3178, 1.442695
        %v3180 = vpow.pop %v3179
        %v3181 = vadd.f32 %v3180, 1.0
        %v3182 = vrcp.pop %v3181
        %v3183 = vmul.f32 %v3181, %v3182
        %v3184 = vsub.f32 1.0, %v3183
        %v3185 = vmul.f32 %v3182, %v3184
        %v3186 = vadd.f32 %v3182, %v3185
        %vm3187 = vweird.f32 %v3181
        %vm3188 = vweird.f32 %v3182
        %vm3189 = vmor %vm3187, %vm3188
        %v3190 = vsel %vm3189, %v3182, %v3186
        %v3191 = vand.u32 2147483647, %v3181
        %vm3192 = vcmp.eq.f32.partialorder %v3191, 8.507059e+37
        %v3193 = vand.u32 %v3181, 2147483648
        %v3194 = vor.u32 1.1754944e-38, %v3193
        %v3195 = vsel %vm3192, %v3194, %v3190
        %v3196 = vmul.f32 1.0, %v3195
        %v3197 = vadd.f32 %v3115, %v3155
        %v3198 = vxor.u32 %v3197, 2147483648
        %v3199 = vmul.f32 %v3198, 1.442695
        %v3200 = vpow.pop %v3199
        %v3201 = vadd.f32 %v3200, 1.0
        %v3202 = vrcp.pop %v3201
        %v3203 = vmul.f32 %v3201, %v3202
        %v3204 = vsub.f32 1.0, %v3203
        %v3205 = vmul.f32 %v3202, %v3204
        %v3206 = vadd.f32 %v3202, %v3205
        %vm3207 = vweird.f32 %v3201
        %vm3208 = vweird.f32 %v3202
        %vm3209 = vmor %vm3207, %vm3208
        %v3210 = vsel %vm3209, %v3202, %v3206
        %v3211 = vand.u32 2147483647, %v3201
        %vm3212 = vcmp.eq.f32.partialorder %v3211, 8.507059e+37
        %v3213 = vand.u32 %v3201, 2147483648
        %v3214 = vor.u32 1.1754944e-38, %v3213
        %v3215 = vsel %vm3212, %v3214, %v3210
        %v3216 = vmul.f32 1.0, %v3215
        %v3217 = vmul.f32 %v3196, %v3175
        %v3218 = vadd.f32 %v3116, %v3217
        %v3219 = vtanh.pop %v3218
        %v3220 = vsub.f32 1.0, %v3216
        %v3221 = vmul.f32 %v3220, %v3219
        %v3222 = vmul.f32 %v3216, %v2266
        %v3223 = vadd.f32 %v3221, %v3222
        %3224 = vmatpush.msra.mxu0 %v862
        %3225 = vmatpush.msra.mxu0 %v859
        %3226 = vmatpush.msra.mxu0 %v856
        %3227 = vmatpush.msra.mxu0 %v853
        %3228 = vmatpush.msra.mxu0 %v850
        %3229 = vmatpush.msra.mxu0 %v847
        %3230 = vmatpush.msra.mxu0 %v844
        %3231 = vmatpush.msra.mxu0 %v841
        %3232 = vmatpush.msra.mxu0 %v838
        %3233 = vmatpush.msra.mxu0 %v835
        %3234 = vmatpush.msra.mxu0 %v832
        %3235 = vmatpush.msra.mxu0 %v829
        %3236 = vmatpush.msra.mxu0 %v826
        %3237 = vmatpush.msra.mxu0 %v823
        %3238 = vmatpush.msra.mxu0 %v820
        %3239 = vmatpush.msra.mxu0 %v817
        %3240 = vmatmul.f32.gmra.mxu0 %v3223
        %v3241 = vpop.f32.mrf.mxu0
        %v3242 = vadd.f32 %v1165, %v3241
        %3243 = vdwg.mxu0
        %3244 = vmatpush.msra.mxu0 %v863
        %3245 = vmatpush.msra.mxu0 %v860
        %3246 = vmatpush.msra.mxu0 %v857
        %3247 = vmatpush.msra.mxu0 %v854
        %3248 = vmatpush.msra.mxu0 %v851
        %3249 = vmatpush.msra.mxu0 %v848
        %3250 = vmatpush.msra.mxu0 %v845
        %3251 = vmatpush.msra.mxu0 %v842
        %3252 = vmatpush.msra.mxu0 %v839
        %3253 = vmatpush.msra.mxu0 %v836
        %3254 = vmatpush.msra.mxu0 %v833
        %3255 = vmatpush.msra.mxu0 %v830
        %3256 = vmatpush.msra.mxu0 %v827
        %3257 = vmatpush.msra.mxu0 %v824
        %3258 = vmatpush.msra.mxu0 %v821
        %3259 = vmatpush.msra.mxu0 %v818
        %3260 = vmatmul.f32.gmra.mxu0 %v3223
        %v3261 = vpop.f32.mrf.mxu0
        %v3262 = vadd.f32 %v1166, %v3261
        %3263 = vdwg.mxu0
        %3264 = vmatpush.msra.mxu0 %v864
        %3265 = vmatpush.msra.mxu0 %v861
        %3266 = vmatpush.msra.mxu0 %v858
        %3267 = vmatpush.msra.mxu0 %v855
        %3268 = vmatpush.msra.mxu0 %v852
        %3269 = vmatpush.msra.mxu0 %v849
        %3270 = vmatpush.msra.mxu0 %v846
        %3271 = vmatpush.msra.mxu0 %v843
        %3272 = vmatpush.msra.mxu0 %v840
        %3273 = vmatpush.msra.mxu0 %v837
        %3274 = vmatpush.msra.mxu0 %v834
        %3275 = vmatpush.msra.mxu0 %v831
        %3276 = vmatpush.msra.mxu0 %v828
        %3277 = vmatpush.msra.mxu0 %v825
        %3278 = vmatpush.msra.mxu0 %v822
        %3279 = vmatpush.msra.mxu0 %v819
        %3280 = vmatmul.f32.gmra.mxu0 %v3223
        %v3281 = vpop.f32.mrf.mxu0
        %v3282 = vadd.f32 %v1167, %v3281
        %3283 = vdwg.mxu0
        %3284 = vmatpush.msra.mxu0 %v911
        %3285 = vmatpush.msra.mxu0 %v908
        %3286 = vmatpush.msra.mxu0 %v905
        %3287 = vmatpush.msra.mxu0 %v902
        %3288 = vmatpush.msra.mxu0 %v899
        %3289 = vmatpush.msra.mxu0 %v896
        %3290 = vmatpush.msra.mxu0 %v893
        %3291 = vmatpush.msra.mxu0 %v890
        %3292 = vmatpush.msra.mxu0 %v887
        %3293 = vmatpush.msra.mxu0 %v884
        %3294 = vmatpush.msra.mxu0 %v881
        %3295 = vmatpush.msra.mxu0 %v878
        %3296 = vmatpush.msra.mxu0 %v875
        %3297 = vmatpush.msra.mxu0 %v872
        %3298 = vmatpush.msra.mxu0 %v869
        %3299 = vmatpush.msra.mxu0 %v866
        %3300 = vmatmul.f32.gmra.mxu0 %v2433
        %v3301 = vpop.f32.mrf.mxu0
        %v3302 = vadd.f32 %v1232, %v3301
        %3303 = vdwg.mxu0
        %3304 = vmatpush.msra.mxu0 %v912
        %3305 = vmatpush.msra.mxu0 %v909
        %3306 = vmatpush.msra.mxu0 %v906
        %3307 = vmatpush.msra.mxu0 %v903
        %3308 = vmatpush.msra.mxu0 %v900
        %3309 = vmatpush.msra.mxu0 %v897
        %3310 = vmatpush.msra.mxu0 %v894
        %3311 = vmatpush.msra.mxu0 %v891
        %3312 = vmatpush.msra.mxu0 %v888
        %3313 = vmatpush.msra.mxu0 %v885
        %3314 = vmatpush.msra.mxu0 %v882
        %3315 = vmatpush.msra.mxu0 %v879
        %3316 = vmatpush.msra.mxu0 %v876
        %3317 = vmatpush.msra.mxu0 %v873
        %3318 = vmatpush.msra.mxu0 %v870
        %3319 = vmatpush.msra.mxu0 %v867
        %3320 = vmatmul.f32.gmra.mxu0 %v2433
        %v3321 = vpop.f32.mrf.mxu0
        %v3322 = vadd.f32 %v1233, %v3321
        %3323 = vdwg.mxu0
        %3324 = vmatpush.msra.mxu0 %v913
        %3325 = vmatpush.msra.mxu0 %v910
        %3326 = vmatpush.msra.mxu0 %v907
        %3327 = vmatpush.msra.mxu0 %v904
        %3328 = vmatpush.msra.mxu0 %v901
        %3329 = vmatpush.msra.mxu0 %v898
        %3330 = vmatpush.msra.mxu0 %v895
        %3331 = vmatpush.msra.mxu0 %v892
        %3332 = vmatpush.msra.mxu0 %v889
        %3333 = vmatpush.msra.mxu0 %v886
        %3334 = vmatpush.msra.mxu0 %v883
        %3335 = vmatpush.msra.mxu0 %v880
        %3336 = vmatpush.msra.mxu0 %v877
        %3337 = vmatpush.msra.mxu0 %v874
        %3338 = vmatpush.msra.mxu0 %v871
        %3339 = vmatpush.msra.mxu0 %v868
        %3340 = vmatmul.f32.gmra.mxu0 %v2433
        %v3341 = vpop.f32.mrf.mxu0
        %v3342 = vadd.f32 %v1234, %v3341
        %3343 = vdwg.mxu0
        %v3344 = vadd.f32 %v3242, %v3302
        %v3345 = vxor.u32 %v3344, 2147483648
        %v3346 = vmul.f32 %v3345, 1.442695
        %v3347 = vpow.pop %v3346
        %v3348 = vadd.f32 %v3347, 1.0
        %v3349 = vrcp.pop %v3348
        %v3350 = vmul.f32 %v3348, %v3349
        %v3351 = vsub.f32 1.0, %v3350
        %v3352 = vmul.f32 %v3349, %v3351
        %v3353 = vadd.f32 %v3349, %v3352
        %vm3354 = vweird.f32 %v3348
        %vm3355 = vweird.f32 %v3349
        %vm3356 = vmor %vm3354, %vm3355
        %v3357 = vsel %vm3356, %v3349, %v3353
        %v3358 = vand.u32 2147483647, %v3348
        %vm3359 = vcmp.eq.f32.partialorder %v3358, 8.507059e+37
        %v3360 = vand.u32 %v3348, 2147483648
        %v3361 = vor.u32 1.1754944e-38, %v3360
        %v3362 = vsel %vm3359, %v3361, %v3357
        %v3363 = vmul.f32 1.0, %v3362
        %v3364 = vadd.f32 %v3262, %v3322
        %v3365 = vxor.u32 %v3364, 2147483648
        %v3366 = vmul.f32 %v3365, 1.442695
        %v3367 = vpow.pop %v3366
        %v3368 = vadd.f32 %v3367, 1.0
        %v3369 = vrcp.pop %v3368
        %v3370 = vmul.f32 %v3368, %v3369
        %v3371 = vsub.f32 1.0, %v3370
        %v3372 = vmul.f32 %v3369, %v3371
        %v3373 = vadd.f32 %v3369, %v3372
        %vm3374 = vweird.f32 %v3368
        %vm3375 = vweird.f32 %v3369
        %vm3376 = vmor %vm3374, %vm3375
        %v3377 = vsel %vm3376, %v3369, %v3373
        %v3378 = vand.u32 2147483647, %v3368
        %vm3379 = vcmp.eq.f32.partialorder %v3378, 8.507059e+37
        %v3380 = vand.u32 %v3368, 2147483648
        %v3381 = vor.u32 1.1754944e-38, %v3380
        %v3382 = vsel %vm3379, %v3381, %v3377
        %v3383 = vmul.f32 1.0, %v3382
        %v3384 = vmul.f32 %v3363, %v3342
        %v3385 = vadd.f32 %v3282, %v3384
        %v3386 = vtanh.pop %v3385
        %v3387 = vsub.f32 1.0, %v3383
        %v3388 = vmul.f32 %v3387, %v3386
        %v3389 = vmul.f32 %v3383, %v2433
        %v3390 = vadd.f32 %v3388, %v3389
        %3391 = vmatpush.msra.mxu0 %v930
        %3392 = vmatpush.msra.mxu0 %v929
        %3393 = vmatpush.msra.mxu0 %v928
        %3394 = vmatpush.msra.mxu0 %v927
        %3395 = vmatpush.msra.mxu0 %v926
        %3396 = vmatpush.msra.mxu0 %v925
        %3397 = vmatpush.msra.mxu0 %v924
        %3398 = vmatpush.msra.mxu0 %v923
        %3399 = vmatpush.msra.mxu0 %v922
        %3400 = vmatpush.msra.mxu0 %v921
        %3401 = vmatpush.msra.mxu0 %v920
        %3402 = vmatpush.msra.mxu0 %v919
        %3403 = vmatpush.msra.mxu0 %v918
        %3404 = vmatpush.msra.mxu0 %v917
        %3405 = vmatpush.msra.mxu0 %v916
        %3406 = vmatpush.msra.mxu0 %v915
        %3407 = vmatmul.f32.gmra.mxu0 %v3390
        %v3408 = vpop.f32.mrf.mxu0
        %v3409 = vadd.f32 0.0, %v3408
        %3410 = vdwg.mxu0
        %3411 = vmatpush.msra.mxu0 %v962
        %3412 = vmatpush.msra.mxu0 %v961
        %3413 = vmatpush.msra.mxu0 %v960
        %3414 = vmatpush.msra.mxu0 %v959
        %3415 = vmatpush.msra.mxu0 %v958
        %3416 = vmatpush.msra.mxu0 %v957
        %3417 = vmatpush.msra.mxu0 %v956
        %3418 = vmatpush.msra.mxu0 %v955
        %3419 = vmatpush.msra.mxu0 %v954
        %3420 = vmatpush.msra.mxu0 %v953
        %3421 = vmatpush.msra.mxu0 %v952
        %3422 = vmatpush.msra.mxu0 %v951
        %3423 = vmatpush.msra.mxu0 %v950
        %3424 = vmatpush.msra.mxu0 %v949
        %3425 = vmatpush.msra.mxu0 %v948
        %3426 = vmatpush.msra.mxu0 %v947
        %3427 = vmatmul.f32.gmra.mxu0 %v3390
        %v3428 = vpop.f32.mrf.mxu0
        %v3429 = vadd.f32 0.0, %v3428
        %3430 = vdwg.mxu0
        %v3432 = vrot.slane %v3409, 1
        %v3433 = vrot.slane %v3409, 2
        %v3434 = vrot.slane %v3409, 3
        %v3435 = vrot.slane %v3409, 4
        %v3436 = vrot.slane %v3409, 5
        %v3437 = vrot.slane %v3409, 6
        %v3438 = vrot.slane %v3409, 7
        %v3439 = vperm.slane %v3409, 0
        %v3440 = vperm.slane %v3432, 0
        %v3441 = vperm.slane %v3433, 0
        %v3442 = vperm.slane %v3434, 0
        %v3443 = vperm.slane %v3435, 0
        %v3444 = vperm.slane %v3436, 0
        %v3445 = vperm.slane %v3437, 0
        %v3446 = vperm.slane %v3438, 0
        %v3455 = vmul.f32 %v963, %v3439
        %v3456 = vmul.f32 %v964, %v3439
        %v3457 = vmul.f32 %v965, %v3440
        %v3458 = vmul.f32 %v966, %v3440
        %v3459 = vmul.f32 %v967, %v3441
        %v3460 = vmul.f32 %v968, %v3441
        %v3461 = vmul.f32 %v969, %v3442
        %v3462 = vmul.f32 %v970, %v3442
        %v3463 = vmul.f32 %v971, %v3443
        %v3464 = vmul.f32 %v972, %v3443
        %v3465 = vmul.f32 %v973, %v3444
        %v3466 = vmul.f32 %v974, %v3444
        %v3467 = vmul.f32 %v975, %v3445
        %v3468 = vmul.f32 %v976, %v3445
        %v3469 = vmul.f32 %v977, %v3446
        %v3470 = vmul.f32 %v978, %v3446
        %3471 = vadd.xlane.f32.xlu0 %v3455
        %v3472 = vpop.xlane.xlu0 %3471
        %3473 = vadd.xlane.f32.xlu0 %v3456
        %v3474 = vpop.xlane.xlu0 %3473
        %3475 = vadd.xlane.f32.xlu0 %v3457
        %v3476 = vpop.xlane.xlu0 %3475
        %3477 = vadd.xlane.f32.xlu0 %v3458
        %v3478 = vpop.xlane.xlu0 %3477
        %3479 = vadd.xlane.f32.xlu0 %v3459
        %v3480 = vpop.xlane.xlu0 %3479
        %3481 = vadd.xlane.f32.xlu0 %v3460
        %v3482 = vpop.xlane.xlu0 %3481
        %3483 = vadd.xlane.f32.xlu0 %v3461
        %v3484 = vpop.xlane.xlu0 %3483
        %3485 = vadd.xlane.f32.xlu0 %v3462
        %v3486 = vpop.xlane.xlu0 %3485
        %3487 = vadd.xlane.f32.xlu0 %v3463
        %v3488 = vpop.xlane.xlu0 %3487
        %3489 = vadd.xlane.f32.xlu0 %v3464
        %v3490 = vpop.xlane.xlu0 %3489
        %3491 = vadd.xlane.f32.xlu0 %v3465
        %v3492 = vpop.xlane.xlu0 %3491
        %3493 = vadd.xlane.f32.xlu0 %v3466
        %v3494 = vpop.xlane.xlu0 %3493
        %3495 = vadd.xlane.f32.xlu0 %v3467
        %v3496 = vpop.xlane.xlu0 %3495
        %3497 = vadd.xlane.f32.xlu0 %v3468
        %v3498 = vpop.xlane.xlu0 %3497
        %3499 = vadd.xlane.f32.xlu0 %v3469
        %v3500 = vpop.xlane.xlu0 %3499
        %3501 = vadd.xlane.f32.xlu0 %v3470
        %v3502 = vpop.xlane.xlu0 %3501
        %v3503 = vadd.f32 %v3472, %v1464
        %v3504 = vadd.f32 %v3474, %v1470
        %v3505 = vadd.f32 %v3476, %v1477
        %v3506 = vadd.f32 %v3478, %v1483
        %v3507 = vadd.f32 %v3480, %v1490
        %v3508 = vadd.f32 %v3482, %v1496
        %v3509 = vadd.f32 %v3484, %v1503
        %v3510 = vadd.f32 %v3486, %v1509
        %v3511 = vadd.f32 %v3488, %v1516
        %v3512 = vadd.f32 %v3490, %v1522
        %v3513 = vadd.f32 %v3492, %v1529
        %v3514 = vadd.f32 %v3494, %v1535
        %v3515 = vadd.f32 %v3496, %v1542
        %v3516 = vadd.f32 %v3498, %v1548
        %v3517 = vadd.f32 %v3500, %v1555
        %v3518 = vadd.f32 %v3502, %v1561
        %3535 = vset.pattern.permute.xlu0 0
        %3536 = vperm.xlu0 %3535, %v3503
        %v3537 = vpop.permute.xlu0 %3536
        %3538 = vset.pattern.permute.xlu0 0
        %3539 = vperm.xlu0 %3538, %v3504
        %v3540 = vpop.permute.xlu0 %3539
        %3541 = vset.pattern.permute.xlu0 0
        %3542 = vperm.xlu0 %3541, %v3505
        %v3543 = vpop.permute.xlu0 %3542
        %3544 = vset.pattern.permute.xlu0 0
        %3545 = vperm.xlu0 %3544, %v3506
        %v3546 = vpop.permute.xlu0 %3545
        %3547 = vset.pattern.permute.xlu0 0
        %3548 = vperm.xlu0 %3547, %v3507
        %v3549 = vpop.permute.xlu0 %3548
        %3550 = vset.pattern.permute.xlu0 0
        %3551 = vperm.xlu0 %3550, %v3508
        %v3552 = vpop.permute.xlu0 %3551
        %3553 = vset.pattern.permute.xlu0 0
        %3554 = vperm.xlu0 %3553, %v3509
        %v3555 = vpop.permute.xlu0 %3554
        %3556 = vset.pattern.permute.xlu0 0
        %3557 = vperm.xlu0 %3556, %v3510
        %v3558 = vpop.permute.xlu0 %3557
        %3559 = vset.pattern.permute.xlu0 0
        %3560 = vperm.xlu0 %3559, %v3511
        %v3561 = vpop.permute.xlu0 %3560
        %3562 = vset.pattern.permute.xlu0 0
        %3563 = vperm.xlu0 %3562, %v3512
        %v3564 = vpop.permute.xlu0 %3563
        %3565 = vset.pattern.permute.xlu0 0
        %3566 = vperm.xlu0 %3565, %v3513
        %v3567 = vpop.permute.xlu0 %3566
        %3568 = vset.pattern.permute.xlu0 0
        %3569 = vperm.xlu0 %3568, %v3514
        %v3570 = vpop.permute.xlu0 %3569
        %3571 = vset.pattern.permute.xlu0 0
        %3572 = vperm.xlu0 %3571, %v3515
        %v3573 = vpop.permute.xlu0 %3572
        %3574 = vset.pattern.permute.xlu0 0
        %3575 = vperm.xlu0 %3574, %v3516
        %v3576 = vpop.permute.xlu0 %3575
        %3577 = vset.pattern.permute.xlu0 0
        %3578 = vperm.xlu0 %3577, %v3517
        %v3579 = vpop.permute.xlu0 %3578
        %3580 = vset.pattern.permute.xlu0 0
        %3581 = vperm.xlu0 %3580, %v3518
        %v3582 = vpop.permute.xlu0 %3581
        %v3583 = vperm.slane %v3537, %v1659
        %v3584 = vperm.slane %v3540, %v1661
        %v3585 = vsel %vm1663, %v3584, %v3583
        %v3586 = vperm.slane %v3543, %v1659
        %v3587 = vperm.slane %v3546, %v1661
        %v3588 = vsel %vm1663, %v3587, %v3586
        %v3589 = vperm.slane %v3549, %v1659
        %v3590 = vperm.slane %v3552, %v1661
        %v3591 = vsel %vm1663, %v3590, %v3589
        %v3592 = vperm.slane %v3555, %v1659
        %v3593 = vperm.slane %v3558, %v1661
        %v3594 = vsel %vm1663, %v3593, %v3592
        %v3595 = vperm.slane %v3561, %v1659
        %v3596 = vperm.slane %v3564, %v1661
        %v3597 = vsel %vm1663, %v3596, %v3595
        %v3598 = vperm.slane %v3567, %v1659
        %v3599 = vperm.slane %v3570, %v1661
        %v3600 = vsel %vm1663, %v3599, %v3598
        %v3601 = vperm.slane %v3573, %v1659
        %v3602 = vperm.slane %v3576, %v1661
        %v3603 = vsel %vm1663, %v3602, %v3601
        %v3604 = vperm.slane %v3579, %v1659
        %v3605 = vperm.slane %v3582, %v1661
        %v3606 = vsel %vm1663, %v3605, %v3604
        %v3607 = vsel %vm1686, %v3588, %v3585
        %v3608 = vsel %vm1688, %v3591, %v3607
        %v3609 = vsel %vm1690, %v3594, %v3608
        %v3610 = vsel %vm1692, %v3597, %v3609
        %v3611 = vsel %vm1694, %v3600, %v3610
        %v3612 = vsel %vm1696, %v3603, %v3611
        %v3613 = vsel %vm1698, %v3606, %v3612
        %v3615 = vsel %vm1701, %v3613, -inf
        %3616 = vmax.xlane.f32.xlu0 %v3615
        %v3617 = vpop.xlane.xlu0 %3616
        %v3619 = vperm.slane %v3617, 0
        %v3620 = vperm.slane %v3617, 1
        %v3621 = vperm.slane %v3617, 2
        %v3622 = vperm.slane %v3617, 3
        %v3623 = vperm.slane %v3617, 4
        %v3624 = vperm.slane %v3617, 5
        %v3625 = vperm.slane %v3617, 6
        %v3626 = vperm.slane %v3617, 7
        %v3635 = vsub.f32 %v3503, %v3619
        %v3636 = vsub.f32 %v3504, %v3619
        %v3637 = vsub.f32 %v3505, %v3620
        %v3638 = vsub.f32 %v3506, %v3620
        %v3639 = vsub.f32 %v3507, %v3621
        %v3640 = vsub.f32 %v3508, %v3621
        %v3641 = vsub.f32 %v3509, %v3622
        %v3642 = vsub.f32 %v3510, %v3622
        %v3643 = vsub.f32 %v3511, %v3623
        %v3644 = vsub.f32 %v3512, %v3623
        %v3645 = vsub.f32 %v3513, %v3624
        %v3646 = vsub.f32 %v3514, %v3624
        %v3647 = vsub.f32 %v3515, %v3625
        %v3648 = vsub.f32 %v3516, %v3625
        %v3649 = vsub.f32 %v3517, %v3626
        %v3650 = vsub.f32 %v3518, %v3626
        %v3651 = vmul.f32 %v3635, 1.442695
        %v3652 = vpow.pop %v3651
        %v3653 = vmul.f32 %v3636, 1.442695
        %v3654 = vpow.pop %v3653
        %v3655 = vmul.f32 %v3637, 1.442695
        %v3656 = vpow.pop %v3655
        %v3657 = vmul.f32 %v3638, 1.442695
        %v3658 = vpow.pop %v3657
        %v3659 = vmul.f32 %v3639, 1.442695
        %v3660 = vpow.pop %v3659
        %v3661 = vmul.f32 %v3640, 1.442695
        %v3662 = vpow.pop %v3661
        %v3663 = vmul.f32 %v3641, 1.442695
        %v3664 = vpow.pop %v3663
        %v3665 = vmul.f32 %v3642, 1.442695
        %v3666 = vpow.pop %v3665
        %v3667 = vmul.f32 %v3643, 1.442695
        %v3668 = vpow.pop %v3667
        %v3669 = vmul.f32 %v3644, 1.442695
        %v3670 = vpow.pop %v3669
        %v3671 = vmul.f32 %v3645, 1.442695
        %v3672 = vpow.pop %v3671
        %v3673 = vmul.f32 %v3646, 1.442695
        %v3674 = vpow.pop %v3673
        %v3675 = vmul.f32 %v3647, 1.442695
        %v3676 = vpow.pop %v3675
        %v3677 = vmul.f32 %v3648, 1.442695
        %v3678 = vpow.pop %v3677
        %v3679 = vmul.f32 %v3649, 1.442695
        %v3680 = vpow.pop %v3679
        %v3681 = vmul.f32 %v3650, 1.442695
        %v3682 = vpow.pop %v3681
        %3699 = vset.pattern.permute.xlu0 0
        %3700 = vperm.xlu0 %3699, %v3652
        %v3701 = vpop.permute.xlu0 %3700
        %3702 = vset.pattern.permute.xlu0 0
        %3703 = vperm.xlu0 %3702, %v3654
        %v3704 = vpop.permute.xlu0 %3703
        %3705 = vset.pattern.permute.xlu0 0
        %3706 = vperm.xlu0 %3705, %v3656
        %v3707 = vpop.permute.xlu0 %3706
        %3708 = vset.pattern.permute.xlu0 0
        %3709 = vperm.xlu0 %3708, %v3658
        %v3710 = vpop.permute.xlu0 %3709
        %3711 = vset.pattern.permute.xlu0 0
        %3712 = vperm.xlu0 %3711, %v3660
        %v3713 = vpop.permute.xlu0 %3712
        %3714 = vset.pattern.permute.xlu0 0
        %3715 = vperm.xlu0 %3714, %v3662
        %v3716 = vpop.permute.xlu0 %3715
        %3717 = vset.pattern.permute.xlu0 0
        %3718 = vperm.xlu0 %3717, %v3664
        %v3719 = vpop.permute.xlu0 %3718
        %3720 = vset.pattern.permute.xlu0 0
        %3721 = vperm.xlu0 %3720, %v3666
        %v3722 = vpop.permute.xlu0 %3721
        %3723 = vset.pattern.permute.xlu0 0
        %3724 = vperm.xlu0 %3723, %v3668
        %v3725 = vpop.permute.xlu0 %3724
        %3726 = vset.pattern.permute.xlu0 0
        %3727 = vperm.xlu0 %3726, %v3670
        %v3728 = vpop.permute.xlu0 %3727
        %3729 = vset.pattern.permute.xlu0 0
        %3730 = vperm.xlu0 %3729, %v3672
        %v3731 = vpop.permute.xlu0 %3730
        %3732 = vset.pattern.permute.xlu0 0
        %3733 = vperm.xlu0 %3732, %v3674
        %v3734 = vpop.permute.xlu0 %3733
        %3735 = vset.pattern.permute.xlu0 0
        %3736 = vperm.xlu0 %3735, %v3676
        %v3737 = vpop.permute.xlu0 %3736
        %3738 = vset.pattern.permute.xlu0 0
        %3739 = vperm.xlu0 %3738, %v3678
        %v3740 = vpop.permute.xlu0 %3739
        %3741 = vset.pattern.permute.xlu0 0
        %3742 = vperm.xlu0 %3741, %v3680
        %v3743 = vpop.permute.xlu0 %3742
        %3744 = vset.pattern.permute.xlu0 0
        %3745 = vperm.xlu0 %3744, %v3682
        %v3746 = vpop.permute.xlu0 %3745
        %v3747 = vperm.slane %v3701, %v1659
        %v3748 = vperm.slane %v3704, %v1661
        %v3749 = vsel %vm1663, %v3748, %v3747
        %v3750 = vperm.slane %v3707, %v1659
        %v3751 = vperm.slane %v3710, %v1661
        %v3752 = vsel %vm1663, %v3751, %v3750
        %v3753 = vperm.slane %v3713, %v1659
        %v3754 = vperm.slane %v3716, %v1661
        %v3755 = vsel %vm1663, %v3754, %v3753
        %v3756 = vperm.slane %v3719, %v1659
        %v3757 = vperm.slane %v3722, %v1661
        %v3758 = vsel %vm1663, %v3757, %v3756
        %v3759 = vperm.slane %v3725, %v1659
        %v3760 = vperm.slane %v3728, %v1661
        %v3761 = vsel %vm1663, %v3760, %v3759
        %v3762 = vperm.slane %v3731, %v1659
        %v3763 = vperm.slane %v3734, %v1661
        %v3764 = vsel %vm1663, %v3763, %v3762
        %v3765 = vperm.slane %v3737, %v1659
        %v3766 = vperm.slane %v3740, %v1661
        %v3767 = vsel %vm1663, %v3766, %v3765
        %v3768 = vperm.slane %v3743, %v1659
        %v3769 = vperm.slane %v3746, %v1661
        %v3770 = vsel %vm1663, %v3769, %v3768
        %v3771 = vsel %vm1686, %v3752, %v3749
        %v3772 = vsel %vm1688, %v3755, %v3771
        %v3773 = vsel %vm1690, %v3758, %v3772
        %v3774 = vsel %vm1692, %v3761, %v3773
        %v3775 = vsel %vm1694, %v3764, %v3774
        %v3776 = vsel %vm1696, %v3767, %v3775
        %v3777 = vsel %vm1698, %v3770, %v3776
        %v3779 = vsel %vm1701, %v3777, 0.0
        %3780 = vadd.xlane.f32.xlu0 %v3779
        %v3781 = vpop.xlane.xlu0 %3780
        %v3782 = vrcp.pop %v3781
        %v3784 = vperm.slane %v3782, 0
        %v3785 = vperm.slane %v3782, 1
        %v3786 = vperm.slane %v3782, 2
        %v3787 = vperm.slane %v3782, 3
        %v3788 = vperm.slane %v3782, 4
        %v3789 = vperm.slane %v3782, 5
        %v3790 = vperm.slane %v3782, 6
        %v3791 = vperm.slane %v3782, 7
        %v3800 = vmul.f32 %v3652, %v3784
        %v3801 = vmul.f32 %v3654, %v3784
        %v3802 = vmul.f32 %v3656, %v3785
        %v3803 = vmul.f32 %v3658, %v3785
        %v3804 = vmul.f32 %v3660, %v3786
        %v3805 = vmul.f32 %v3662, %v3786
        %v3806 = vmul.f32 %v3664, %v3787
        %v3807 = vmul.f32 %v3666, %v3787
        %v3808 = vmul.f32 %v3668, %v3788
        %v3809 = vmul.f32 %v3670, %v3788
        %v3810 = vmul.f32 %v3672, %v3789
        %v3811 = vmul.f32 %v3674, %v3789
        %v3812 = vmul.f32 %v3676, %v3790
        %v3813 = vmul.f32 %v3678, %v3790
        %v3814 = vmul.f32 %v3680, %v3791
        %v3815 = vmul.f32 %v3682, %v3791
        %3817 = vset.pattern.permute.xlu0 0
        %3818 = vperm.xlu0 %3817, %v3800
        %v3819 = vpop.permute.xlu0 %3818
        %3822 = vset.pattern.permute.xlu0 0
        %3823 = vperm.xlu0 %3822, %v3801
        %v3824 = vpop.permute.xlu0 %3823
        %3827 = vset.pattern.permute.xlu0 0
        %3828 = vperm.xlu0 %3827, %v3802
        %v3829 = vpop.permute.xlu0 %3828
        %3832 = vset.pattern.permute.xlu0 0
        %3833 = vperm.xlu0 %3832, %v3803
        %v3834 = vpop.permute.xlu0 %3833
        %3837 = vset.pattern.permute.xlu0 0
        %3838 = vperm.xlu0 %3837, %v3804
        %v3839 = vpop.permute.xlu0 %3838
        %3842 = vset.pattern.permute.xlu0 0
        %3843 = vperm.xlu0 %3842, %v3805
        %v3844 = vpop.permute.xlu0 %3843
        %3847 = vset.pattern.permute.xlu0 0
        %3848 = vperm.xlu0 %3847, %v3806
        %v3849 = vpop.permute.xlu0 %3848
        %3852 = vset.pattern.permute.xlu0 0
        %3853 = vperm.xlu0 %3852, %v3807
        %v3854 = vpop.permute.xlu0 %3853
        %3857 = vset.pattern.permute.xlu0 0
        %3858 = vperm.xlu0 %3857, %v3808
        %v3859 = vpop.permute.xlu0 %3858
        %3862 = vset.pattern.permute.xlu0 0
        %3863 = vperm.xlu0 %3862, %v3809
        %v3864 = vpop.permute.xlu0 %3863
        %3867 = vset.pattern.permute.xlu0 0
        %3868 = vperm.xlu0 %3867, %v3810
        %v3869 = vpop.permute.xlu0 %3868
        %3872 = vset.pattern.permute.xlu0 0
        %3873 = vperm.xlu0 %3872, %v3811
        %v3874 = vpop.permute.xlu0 %3873
        %3877 = vset.pattern.permute.xlu0 0
        %3878 = vperm.xlu0 %3877, %v3812
        %v3879 = vpop.permute.xlu0 %3878
        %3882 = vset.pattern.permute.xlu0 0
        %3883 = vperm.xlu0 %3882, %v3813
        %v3884 = vpop.permute.xlu0 %3883
        %3887 = vset.pattern.permute.xlu0 0
        %3888 = vperm.xlu0 %3887, %v3814
        %v3889 = vpop.permute.xlu0 %3888
        %3892 = vset.pattern.permute.xlu0 0
        %3893 = vperm.xlu0 %3892, %v3815
        %v3894 = vpop.permute.xlu0 %3893
        %v3896 = vmul.f32 %v3819, %v963
        %v3897 = vmul.f32 %v3824, %v964
        %v3898 = vmul.f32 %v3829, %v965
        %v3899 = vmul.f32 %v3834, %v966
        %v3900 = vmul.f32 %v3839, %v967
        %v3901 = vmul.f32 %v3844, %v968
        %v3902 = vmul.f32 %v3849, %v969
        %v3903 = vmul.f32 %v3854, %v970
        %v3904 = vmul.f32 %v3859, %v971
        %v3905 = vmul.f32 %v3864, %v972
        %v3906 = vmul.f32 %v3869, %v973
        %v3907 = vmul.f32 %v3874, %v974
        %v3908 = vmul.f32 %v3879, %v975
        %v3909 = vmul.f32 %v3884, %v976
        %v3910 = vmul.f32 %v3889, %v977
        %v3911 = vmul.f32 %v3894, %v978
        %v3912 = vadd.f32 %v3896, %v3897
        %v3913 = vrot.slane %v3912, 4
        %v3914 = vadd.f32 %v3912, %v3913
        %v3915 = vrot.slane %v3914, 2
        %v3916 = vadd.f32 %v3914, %v3915
        %v3917 = vrot.slane %v3916, 1
        %v3918 = vadd.f32 %v3916, %v3917
        %v3919 = vadd.f32 %v3898, %v3899
        %v3920 = vrot.slane %v3919, 4
        %v3921 = vadd.f32 %v3919, %v3920
        %v3922 = vrot.slane %v3921, 2
        %v3923 = vadd.f32 %v3921, %v3922
        %v3924 = vrot.slane %v3923, 1
        %v3925 = vadd.f32 %v3923, %v3924
        %v3926 = vadd.f32 %v3900, %v3901
        %v3927 = vrot.slane %v3926, 4
        %v3928 = vadd.f32 %v3926, %v3927
        %v3929 = vrot.slane %v3928, 2
        %v3930 = vadd.f32 %v3928, %v3929
        %v3931 = vrot.slane %v3930, 1
        %v3932 = vadd.f32 %v3930, %v3931
        %v3933 = vadd.f32 %v3902, %v3903
        %v3934 = vrot.slane %v3933, 4
        %v3935 = vadd.f32 %v3933, %v3934
        %v3936 = vrot.slane %v3935, 2
        %v3937 = vadd.f32 %v3935, %v3936
        %v3938 = vrot.slane %v3937, 1
        %v3939 = vadd.f32 %v3937, %v3938
        %v3940 = vadd.f32 %v3904, %v3905
        %v3941 = vrot.slane %v3940, 4
        %v3942 = vadd.f32 %v3940, %v3941
        %v3943 = vrot.slane %v3942, 2
        %v3944 = vadd.f32 %v3942, %v3943
        %v3945 = vrot.slane %v3944, 1
        %v3946 = vadd.f32 %v3944, %v3945
        %v3947 = vadd.f32 %v3906, %v3907
        %v3948 = vrot.slane %v3947, 4
        %v3949 = vadd.f32 %v3947, %v3948
        %v3950 = vrot.slane %v3949, 2
        %v3951 = vadd.f32 %v3949, %v3950
        %v3952 = vrot.slane %v3951, 1
        %v3953 = vadd.f32 %v3951, %v3952
        %v3954 = vadd.f32 %v3908, %v3909
        %v3955 = vrot.slane %v3954, 4
        %v3956 = vadd.f32 %v3954, %v3955
        %v3957 = vrot.slane %v3956, 2
        %v3958 = vadd.f32 %v3956, %v3957
        %v3959 = vrot.slane %v3958, 1
        %v3960 = vadd.f32 %v3958, %v3959
        %v3961 = vadd.f32 %v3910, %v3911
        %v3962 = vrot.slane %v3961, 4
        %v3963 = vadd.f32 %v3961, %v3962
        %v3964 = vrot.slane %v3963, 2
        %v3965 = vadd.f32 %v3963, %v3964
        %v3966 = vrot.slane %v3965, 1
        %v3967 = vadd.f32 %v3965, %v3966
        %v3976 = vsel %vm1686, %v3925, %v3918
        %v3977 = vsel %vm1688, %v3932, %v3976
        %v3978 = vsel %vm1690, %v3939, %v3977
        %v3979 = vsel %vm1692, %v3946, %v3978
        %v3980 = vsel %vm1694, %v3953, %v3979
        %v3981 = vsel %vm1696, %v3960, %v3980
        %v3982 = vsel %vm1698, %v3967, %v3981
        %3984 = vmatpush.msra.mxu0 %v946
        %3985 = vmatpush.msra.mxu0 %v945
        %3986 = vmatpush.msra.mxu0 %v944
        %3987 = vmatpush.msra.mxu0 %v943
        %3988 = vmatpush.msra.mxu0 %v942
        %3989 = vmatpush.msra.mxu0 %v941
        %3990 = vmatpush.msra.mxu0 %v940
        %3991 = vmatpush.msra.mxu0 %v939
        %3992 = vmatpush.msra.mxu0 %v938
        %3993 = vmatpush.msra.mxu0 %v937
        %3994 = vmatpush.msra.mxu0 %v936
        %3995 = vmatpush.msra.mxu0 %v935
        %3996 = vmatpush.msra.mxu0 %v934
        %3997 = vmatpush.msra.mxu0 %v933
        %3998 = vmatpush.msra.mxu0 %v932
        %3999 = vmatpush.msra.mxu0 %v931
        %4000 = vmatmul.f32.gmra.mxu0 %v3982
        %v4001 = vpop.f32.mrf.mxu0
        %v4002 = vadd.f32 %v3429, %v4001
        %4003 = vdwg.mxu0
        %v4004 = vtanh.pop %v4002
        %s4005 = scalar_lea.vmem %s708, 16
        %4006 = vst [vmem:[%s4005] sm:$0xff] %v4004
        %4007 = vst [vmem:[#allocation2] sm:$0xff] %v3223
        %4008 = vst [vmem:[%s981] sm:$0xff] %v3390
        %4009 = vst [vmem:[#allocation3] sm:$0xff] %v4004
        %p4010 = scmp.eq.s32.totalorder %s37, 1
        // Predicated region
        $region125: #{rnn_attention_decoder.2} parent=79 // pred_check
          %p4011 = pneg %p4010
        $region126: #{rnn_attention_decoder.2} parent=79 // pred_check_branch
          %4013 = sbr.rel (%p4011) target = $region128
        $region127: #{rnn_attention_decoder.2} parent=79 // pred_region
          %v4014 = vld [vmem:[#allocation2] sm:$0xff]
          %v4015 = vld [vmem:[#allocation2 + $0x8] sm:$0xff]
          %4016 = vst [vmem:[#allocation21] sm:$0xff] %v4014
          %4017 = vst [vmem:[#allocation21 + $0x8] sm:$0xff] %v4015
          %v4018 = vld [vmem:[#allocation3] sm:$0xff]
          %4019 = vst [vmem:[#allocation22] sm:$0xff] %v4018
        $region128: #{rnn_attention_decoder.2} parent=79 // pred_fallthru
          _
        %s4020 = smul.u32 3, %s37
        %p4021 = scmp.lt.s32.totalorder %s4020, 5
        %s4022 = scalar_select %p4021, %s4020, 5
        %s4023 = smul.addr %s4022, 8
        %s4024 = scalar_lea.vmem %s15, %s4023
        // Predicated region
        $region129: #{rnn_attention_decoder.2} parent=79 // pred_check
          %p4025 = pneg %p375
        $region130: #{rnn_attention_decoder.2} parent=79 // pred_check_branch
          %4027 = sbr.rel (%p4025) target = $region132
        $region131: #{rnn_attention_decoder.2} parent=79 // pred_region
          %s4028 = smul.u32 3, %s37
        $region132: #{rnn_attention_decoder.2} parent=79 // pred_fallthru
          _
        // Predicated region
        $region133: #{rnn_attention_decoder.2} parent=79 // pred_check
          %p4029 = pneg %p396
        $region134: #{rnn_attention_decoder.2} parent=79 // pred_check_branch
          %4031 = sbr.rel (%p4029) target = $region136
        $region135: #{rnn_attention_decoder.2} parent=79 // pred_region
          %4033 = vsyncadd [#allocation6], 0
          %s4034 = sshll.u32 [#allocation21], 4
          %s4035 = int_to_ptr.vmem [resolvable:$true] %s4034
          %s4036 = sshll.u32 %s16, 4
          %s4037 = int_to_ptr.hbm [resolvable:$true] %s4036
          %4042 = dma.vmem_to_hbm [thread:$0]  %s4035, 256, %s4037, [#allocation6], 128, 128, 8
        $region136: #{rnn_attention_decoder.2} parent=79 // pred_fallthru
          _
        // Predicated region
        $region137: #{rnn_attention_decoder.2} parent=79 // pred_check
          %p4043 = pneg %p417
        $region138: #{rnn_attention_decoder.2} parent=79 // pred_check_branch
          %4045 = sbr.rel (%p4043) target = $region140
        $region139: #{rnn_attention_decoder.2} parent=79 // pred_region
          %4047 = vsyncadd [#allocation23], 0
          %s4049 = sshll.u32 [#allocation22], 4
          %s4050 = int_to_ptr.vmem [resolvable:$true] %s4049
          %s4051 = sshll.u32 %s17, 4
          %s4052 = int_to_ptr.hbm [resolvable:$true] %s4051
          %4054 = dma.vmem_to_hbm [thread:$0]  %s4050, 128, %s4052, [#allocation23]
        $region140: #{rnn_attention_decoder.2} parent=79 // pred_fallthru
          _
        // Predicated region
        $region141: #{rnn_attention_decoder.2} parent=79 // pred_check
          %p4055 = pneg %p396
        $region142: #{rnn_attention_decoder.2} parent=79 // pred_check_branch
          %4057 = sbr.rel (%p4055) target = $region144
        $region143: #{rnn_attention_decoder.2} parent=79 // pred_region
          %4059 = dma.done [#allocation6], 256
        $region144: #{rnn_attention_decoder.2} parent=79 // pred_fallthru
          _
        // Predicated region
        $region145: #{rnn_attention_decoder.2} parent=79 // pred_check
          %p4060 = pneg %p417
        $region146: #{rnn_attention_decoder.2} parent=79 // pred_check_branch
          %4062 = sbr.rel (%p4060) target = $region148
        $region147: #{rnn_attention_decoder.2} parent=79 // pred_region
          %4064 = dma.done [#allocation23], 128
        $region148: #{rnn_attention_decoder.2} parent=79 // pred_fallthru
          _
      $region80: #{rnn_attention_decoder.2} parent=5 // pred_fallthru
        _
      %p4065 = scmp.le.s32.totalorder 2, %s32
      // Predicated region
      $region149: #{rnn_attention_decoder.2} parent=5 // pred_check
        %p4066 = pneg %p4065
      $region150: #{rnn_attention_decoder.2} parent=5 // pred_check_branch
        %4068 = sbr.rel (%p4066) target = $region152
      $region151: #{rnn_attention_decoder.2} parent=5 // pred_region
        %s4069 = ssub.s32 %s32, 2
        // Predicated region
        $region153: #{rnn_attention_decoder.2} parent=151 // pred_check
          %p4070 = pneg %p381
        $region154: #{rnn_attention_decoder.2} parent=151 // pred_check_branch
          %4072 = sbr.rel (%p4070) target = $region156
        $region155: #{rnn_attention_decoder.2} parent=151 // pred_region
          %s4073 = smul.u32 3, %s38
          %p4074 = scmp.lt.s32.totalorder %s4073, 5
          %s4075 = scalar_select %p4074, %s4073, 5
          %s4076 = smul.addr %s4075, 8
          %s4077 = scalar_lea.vmem %s15, %s4076
        $region156: #{rnn_attention_decoder.2} parent=151 // pred_fallthru
          _
      $region152: #{rnn_attention_decoder.2} parent=5 // pred_fallthru
        _
    $region6: #{rnn_attention_decoder.2} parent=1 // loop_footer
      %s36 = sadd.s32 1, %s32
    $region7: #{rnn_attention_decoder.2} parent=1 // loop_footer_branch
      %31 = sbr.rel target = $region3
    $region8: #{rnn_attention_decoder.2} parent=1 // loop_exit
      _
    %4078 = vsyncpa [#allocation5], 1
    %s4079 = scalar_lea.sflag [#allocation5], 1
    %4080 = vsyncpa %s4079, 1
    %4081 = vsyncpa [#allocation8], 1
    %4082 = vsyncpa [#allocation11], 1
    %4083 = vsyncpa [#allocation14], 1
    %4084 = vsyncpa [#allocation17], 1
    %4085 = vsyncpa [#allocation20], 1
    %4086 = vsyncpa [#allocation6], 1
    %s4087 = scalar_lea.sflag [#allocation6], 1
    %4088 = vsyncpa %s4087, 1
    %4089 = vsyncpa [#allocation23], 1

</llo_original>
